<compile_context>
chip_gen: v5e
topology: v5e:2x2
jax: 0.10.0
libtpu: 0.0.40
codegen_flags: <defaults>
</compile_context>

<pallas_src>
import numpy as np
import jax
import jax.numpy as jnp
from jax.experimental import pallas as pl
from jax.experimental.pallas import tpu as pltpu


def _round_up(x, m):
    return ((x + m - 1) // m) * m


# ----------------------------------------------------------------------------
# Kernel
# ----------------------------------------------------------------------------
def _resblock_kernel(x_ref, w1_ref, s1_ref, b1_ref, w2_ref, s2_ref, b2_ref,
                     out_ref):
    """Whole residual block for a tile of TN batch samples.

    x_ref  : (TN, H, W, Cp)  NHWC activations, bf16, channels zero-padded to Cp
    w1_ref : (9*Cp, Cp)      conv1 weights, tap-major / channel-minor, bf16
    s1_ref : (1, Cp)         folded BN1 scale, f32
    b1_ref : (1, Cp)         folded BN1 shift (incl. conv1 bias), f32
    w2_ref : (9*Cp, Cp)      conv2 weights, bf16
    s2_ref : (1, Cp)         folded BN2 scale, f32
    b2_ref : (1, Cp)         folded BN2 shift (incl. conv2 bias), f32
    out_ref: (TN, H, W, Cp)  f32
    """
    TN, H, W, Cp = x_ref.shape
    M = TN * H * W

    x = x_ref[...]                                          # (TN, H, W, Cp) bf16

    def conv3x3(a, w_ref_):
        """3x3 'same' conv as ONE lane-dense MXU matmul (im2col over 9 taps)."""
        tn, h, w, ci = a.shape
        # 1-pixel zero halo built in registers (per-sample spatial axes only).
        zrow = jnp.zeros((tn, 1, w, ci), a.dtype)
        ap = jnp.concatenate([zrow, a, zrow], axis=1)       # (tn, h+2, w,   ci)
        zcol = jnp.zeros((tn, h + 2, 1, ci), a.dtype)
        ap = jnp.concatenate([zcol, ap, zcol], axis=2)      # (tn, h+2, w+2, ci)
        # Pack the 9 taps along the lane-aligned (ci % 128 == 0) channel axis.
        taps = [ap[:, dh:dh + h, dw:dw + w, :]
                for dh in range(3) for dw in range(3)]
        patches = jnp.concatenate(taps, axis=-1).reshape(tn * h * w, 9 * ci)
        return jnp.dot(patches, w_ref_[...],
                       preferred_element_type=jnp.float32)  # (M, Cp) f32

    # conv1 -> folded BN1 -> ReLU   (epilogue kept in f32)
    acc1 = conv3x3(x, w1_ref)
    out1 = jnp.maximum(acc1 * s1_ref[...] + b1_ref[...], 0.0)

    # conv2 -> folded BN2 -> +identity -> ReLU
    acc2 = conv3x3(out1.astype(jnp.bfloat16).reshape(TN, H, W, Cp), w2_ref)
    out2 = acc2 * s2_ref[...] + b2_ref[...]
    res = jnp.maximum(out2 + x.reshape(M, Cp).astype(jnp.float32), 0.0)

    out_ref[...] = res.reshape(TN, H, W, Cp).astype(out_ref.dtype)


# ----------------------------------------------------------------------------
# Plain-JAX glue: BN folding, weight packing, tiling heuristics
# ----------------------------------------------------------------------------
def _fold_bn(conv_bias, gamma, beta, running_mean, running_var, eps=1e-5):
    """Fold conv bias + eval-mode BatchNorm into per-channel scale/shift."""
    inv = gamma / jnp.sqrt(running_var + eps)
    return inv, (conv_bias - running_mean) * inv + beta


def _pack_weight(w_hwio, c_pad):
    """(3, 3, Ci, Co) -> (9*Cp, Cp) bf16, tap-major / channel-minor, zero-padded."""
    ci, co = w_hwio.shape[2], w_hwio.shape[3]
    wp = jnp.zeros((3, 3, c_pad, c_pad), jnp.float32)
    wp = wp.at[:, :, :ci, :co].set(w_hwio.astype(jnp.float32))
    return wp.reshape(9 * c_pad, c_pad).astype(jnp.bfloat16)


def _pad_channels(v, c_pad):
    c = v.shape[-1]
    if c == c_pad:
        return v
    return jnp.pad(v, [(0, 0)] * (v.ndim - 1) + [(0, c_pad - c)])


def _pick_batch_tile(n, h, w, c_pad, vmem_budget_bytes=40 << 20):
    """Samples per grid step: amortize the ~0.35us/step overhead and grow the
    matmul M-dim, while keeping >= 2 grid steps (both v7x TCs busy) and staying
    inside a v7x-safe VMEM budget."""
    # rough per-sample VMEM: bf16 x + f32 out blocks (double-buffered) + im2col
    per_sample = h * w * c_pad * (2 * 2 + 4 * 2) + h * w * (9 * c_pad) * 2 * 2
    weights = 2 * 2 * (9 * c_pad) * c_pad * 2      # two convs, bf16, double-buffered
    cap = max(1, (vmem_budget_bytes - weights) // max(per_sample, 1))
    target = max(1, -(-2048 // (h * w)))           # aim for M = TN*H*W >= ~2048
    limit = min(cap, target)
    best = 1
    for d in range(1, n + 1):
        if n % d == 0 and d <= limit and (n // d >= 2 or n == 1):
            best = d
    return best


# ----------------------------------------------------------------------------
# Public entry points
# ----------------------------------------------------------------------------
def residual_block_nhwc(x_nhwc, params):
    """x_nhwc: (N, H, W, C). Returns (N, H, W, C) float32.
    Preferred entry point for a tower of blocks (stays NHWC end-to-end)."""
    N, H, W, C = x_nhwc.shape
    Cout = params["w1"].shape[-1]
    assert C == params["w1"].shape[2] and C == Cout, \
        "residual add requires in_channels == out_channels"

    Cp = _round_up(max(C, 128), 128)
    TN = _pick_batch_tile(N, H, W, Cp)

    s1, b1 = _fold_bn(params["conv1_b"], params["bn1_gamma"], params["bn1_beta"],
                      params["bn1_mean"], params["bn1_var"])
    s2, b2 = _fold_bn(params["conv2_b"], params["bn2_gamma"], params["bn2_beta"],
                      params["bn2_mean"], params["bn2_var"])

    x_pad = _pad_channels(x_nhwc.astype(jnp.bfloat16), Cp)   # lane-dense bf16 DMA
    w1 = _pack_weight(params["w1"], Cp)
    w2 = _pack_weight(params["w2"], Cp)
    s1 = _pad_channels(s1.astype(jnp.float32), Cp).reshape(1, Cp)
    b1 = _pad_channels(b1.astype(jnp.float32), Cp).reshape(1, Cp)
    s2 = _pad_channels(s2.astype(jnp.float32), Cp).reshape(1, Cp)
    b2 = _pad_channels(b2.astype(jnp.float32), Cp).reshape(1, Cp)

    resident = pl.BlockSpec((1, Cp), lambda n: (0, 0))
    out_pad = pl.pallas_call(
        _resblock_kernel,
        out_shape=jax.ShapeDtypeStruct((N, H, W, Cp), jnp.float32),
        grid=(N // TN,),
        in_specs=[
            pl.BlockSpec((TN, H, W, Cp), lambda n: (n, 0, 0, 0)),  # x tile
            pl.BlockSpec((9 * Cp, Cp), lambda n: (0, 0)),          # w1 (resident)
            resident, resident,                                    # s1, b1
            pl.BlockSpec((9 * Cp, Cp), lambda n: (0, 0)),          # w2 (resident)
            resident, resident,                                    # s2, b2
        ],
        out_specs=pl.BlockSpec((TN, H, W, Cp), lambda n: (n, 0, 0, 0)),
        compiler_params=pltpu.CompilerParams(
            dimension_semantics=("parallel",),        # megacore sharding on v7x
            vmem_limit_bytes=48 * 1024 * 1024),       # fits v7x 64 MiB physical VMEM
    )(x_pad, w1, s1, b1, w2, s2, b2)

    return out_pad[..., :C]                           # drop channel padding


def residual_block(x_nchw, params):
    """NCHW wrapper matching the PyTorch module interface.
    For a stack of residual blocks prefer residual_block_nhwc and transpose
    once at model entry/exit (saves one HBM read+write per block)."""
    out = residual_block_nhwc(jnp.transpose(x_nchw, (0, 2, 3, 1)), params)
    return jnp.transpose(out, (0, 3, 1, 2))


# ----------------------------------------------------------------------------
# Reference + params
# ----------------------------------------------------------------------------
def _reference(x_nchw, params):
    """Plain-JAX f32 reference (NCHW convs) for validation."""
    def conv(x, w_hwio, b):
        w_oihw = jnp.transpose(w_hwio, (3, 2, 0, 1))
        y = jax.lax.conv_general_dilated(
            x, w_oihw, window_strides=(1, 1), padding=((1, 1), (1, 1)),
            dimension_numbers=("NCHW", "OIHW", "NCHW"))
        return y + b.reshape(1, -1, 1, 1)

    def bn(x, g, bt, m, v, eps=1e-5):
        inv = g / jnp.sqrt(v + eps)
        return x * inv.reshape(1, -1, 1, 1) + (bt - m * inv).reshape(1, -1, 1, 1)

    out = conv(x_nchw, params["w1"], params["conv1_b"])
    out = bn(out, params["bn1_gamma"], params["bn1_beta"],
             params["bn1_mean"], params["bn1_var"])
    out = jnp.maximum(out, 0.0)
    out = conv(out, params["w2"], params["conv2_b"])
    out = bn(out, params["bn2_gamma"], params["bn2_beta"],
             params["bn2_mean"], params["bn2_var"])
    out = out + x_nchw
    return jnp.maximum(out, 0.0)


def init_params(key, in_channels, out_channels):
    k1, k2, k3, k4 = jax.random.split(key, 4)
    return {
        # conv weights stored HWIO: (3, 3, Cin, Cout)
        "w1": 0.1 * jax.random.normal(k1, (3, 3, in_channels, out_channels), jnp.float32),
        "conv1_b": 0.05 * jax.random.normal(k2, (out_channels,), jnp.float32),
        "bn1_gamma": jnp.ones((out_channels,), jnp.float32),
        "bn1_beta": jnp.zeros((out_channels,), jnp.float32),
        "bn1_mean": jnp.zeros((out_channels,), jnp.float32),
        "bn1_var": jnp.ones((out_channels,), jnp.float32),
        "w2": 0.1 * jax.random.normal(k3, (3, 3, out_channels, out_channels), jnp.float32),
        "conv2_b": 0.05 * jax.random.normal(k4, (out_channels,), jnp.float32),
        "bn2_gamma": jnp.ones((out_channels,), jnp.float32),
        "bn2_beta": jnp.zeros((out_channels,), jnp.float32),
        "bn2_mean": jnp.zeros((out_channels,), jnp.float32),
        "bn2_var": jnp.ones((out_channels,), jnp.float32),
    }


if __name__ == "__main__":
    key = jax.random.PRNGKey(0)
    kx, kp = jax.random.split(key)

    N, C, H, W = 2, 4, 16, 16          # small shapes, in_channels == out_channels
    x = jax.random.normal(kx, (N, C, H, W), jnp.float32)
    params = init_params(kp, C, C)

    out = jax.block_until_ready(jax.jit(residual_block)(x, params))

    ref = jax.block_until_ready(_reference(x, params))
    assert out.shape == (N, C, H, W)
    # bf16 MXU operands + bf16 identity DMA (f32 accumulation / f32 epilogue):
    # compare against the f32 reference with bf16-level tolerance.
    np.testing.assert_allclose(np.asarray(out), np.asarray(ref),
                               rtol=2e-2, atol=5e-2)

    print("KERNEL_OK")
</pallas_src>

<mosaic_0001>
module attributes {stable_mosaic.version = 11 : i64} {
  func.func @_resblock_kernel(%arg0: i32, %arg1: memref<1x16x16x128xbf16, #tpu.memory_space<vmem>>, %arg2: memref<1152x128xbf16, #tpu.memory_space<vmem>>, %arg3: memref<1x128xf32, #tpu.memory_space<vmem>>, %arg4: memref<1x128xf32, #tpu.memory_space<vmem>>, %arg5: memref<1152x128xbf16, #tpu.memory_space<vmem>>, %arg6: memref<1x128xf32, #tpu.memory_space<vmem>>, %arg7: memref<1x128xf32, #tpu.memory_space<vmem>>, %arg8: memref<1x16x16x128xf32, #tpu.memory_space<vmem>>) attributes {dimension_semantics = [#tpu.dimension_semantics<parallel>], iteration_bounds = array<i64: 2>, scalar_prefetch = 0 : i64, scratch_operands = 0 : i64, tpu.core_type = #tpu.core_type<tc>, window_params = [{transform_indices = @transform_0, window_bounds = array<i64: 1, 16, 16, 128>}, {pipeline_mode = #tpu.pipeline_mode<synchronous>, transform_indices = @transform_1, window_bounds = array<i64: 1152, 128>}, {pipeline_mode = #tpu.pipeline_mode<synchronous>, transform_indices = @transform_2, window_bounds = array<i64: 1, 128>}, {pipeline_mode = #tpu.pipeline_mode<synchronous>, transform_indices = @transform_3, window_bounds = array<i64: 1, 128>}, {pipeline_mode = #tpu.pipeline_mode<synchronous>, transform_indices = @transform_4, window_bounds = array<i64: 1152, 128>}, {pipeline_mode = #tpu.pipeline_mode<synchronous>, transform_indices = @transform_5, window_bounds = array<i64: 1, 128>}, {pipeline_mode = #tpu.pipeline_mode<synchronous>, transform_indices = @transform_6, window_bounds = array<i64: 1, 128>}, {transform_indices = @transform_7, window_bounds = array<i64: 1, 16, 16, 128>}]} {
    %c0 = arith.constant 0 : index
    %c0_0 = arith.constant 0 : index
    %c0_1 = arith.constant 0 : index
    %c0_2 = arith.constant 0 : index
    %0 = vector.load %arg1[%c0, %c0_0, %c0_1, %c0_2] : memref<1x16x16x128xbf16, #tpu.memory_space<vmem>>, vector<1x16x16x128xbf16>
    %cst = arith.constant 0.000000e+00 : bf16
    %1 = vector.broadcast %cst : bf16 to vector<1x1x16x128xbf16>
    %2 = tpu.concatenate %1, %0, %1 in 1 : vector<1x1x16x128xbf16>, vector<1x16x16x128xbf16>, vector<1x1x16x128xbf16> -> vector<1x18x16x128xbf16>
    %cst_3 = arith.constant 0.000000e+00 : bf16
    %3 = vector.broadcast %cst_3 : bf16 to vector<1x18x1x128xbf16>
    %4 = tpu.concatenate %3, %2, %3 in 2 : vector<1x18x1x128xbf16>, vector<1x18x16x128xbf16>, vector<1x18x1x128xbf16> -> vector<1x18x18x128xbf16>
    %5 = vector.extract_strided_slice %4 {offsets = [0, 0, 0, 0], sizes = [1, 16, 16, 128], strides = [1, 1, 1, 1]} : vector<1x18x18x128xbf16> to vector<1x16x16x128xbf16>
    %6 = vector.extract_strided_slice %4 {offsets = [0, 0, 1, 0], sizes = [1, 16, 16, 128], strides = [1, 1, 1, 1]} : vector<1x18x18x128xbf16> to vector<1x16x16x128xbf16>
    %7 = vector.extract_strided_slice %4 {offsets = [0, 0, 2, 0], sizes = [1, 16, 16, 128], strides = [1, 1, 1, 1]} : vector<1x18x18x128xbf16> to vector<1x16x16x128xbf16>
    %8 = vector.extract_strided_slice %4 {offsets = [0, 1, 0, 0], sizes = [1, 16, 16, 128], strides = [1, 1, 1, 1]} : vector<1x18x18x128xbf16> to vector<1x16x16x128xbf16>
    %9 = vector.extract_strided_slice %4 {offsets = [0, 1, 1, 0], sizes = [1, 16, 16, 128], strides = [1, 1, 1, 1]} : vector<1x18x18x128xbf16> to vector<1x16x16x128xbf16>
    %10 = vector.extract_strided_slice %4 {offsets = [0, 1, 2, 0], sizes = [1, 16, 16, 128], strides = [1, 1, 1, 1]} : vector<1x18x18x128xbf16> to vector<1x16x16x128xbf16>
    %11 = vector.extract_strided_slice %4 {offsets = [0, 2, 0, 0], sizes = [1, 16, 16, 128], strides = [1, 1, 1, 1]} : vector<1x18x18x128xbf16> to vector<1x16x16x128xbf16>
    %12 = vector.extract_strided_slice %4 {offsets = [0, 2, 1, 0], sizes = [1, 16, 16, 128], strides = [1, 1, 1, 1]} : vector<1x18x18x128xbf16> to vector<1x16x16x128xbf16>
    %13 = vector.extract_strided_slice %4 {offsets = [0, 2, 2, 0], sizes = [1, 16, 16, 128], strides = [1, 1, 1, 1]} : vector<1x18x18x128xbf16> to vector<1x16x16x128xbf16>
    %14 = tpu.concatenate %5, %6, %7, %8, %9, %10, %11, %12, %13 in 3 : vector<1x16x16x128xbf16>, vector<1x16x16x128xbf16>, vector<1x16x16x128xbf16>, vector<1x16x16x128xbf16>, vector<1x16x16x128xbf16>, vector<1x16x16x128xbf16>, vector<1x16x16x128xbf16>, vector<1x16x16x128xbf16>, vector<1x16x16x128xbf16> -> vector<1x16x16x1152xbf16>
    %15 = vector.shape_cast %14 : vector<1x16x16x1152xbf16> to vector<256x1152xbf16>
    %c0_4 = arith.constant 0 : index
    %c0_5 = arith.constant 0 : index
    %16 = vector.load %arg2[%c0_4, %c0_5] : memref<1152x128xbf16, #tpu.memory_space<vmem>>, vector<1152x128xbf16>
    %cst_6 = arith.constant dense<0.000000e+00> : vector<256x128xf32>
    %17 = tpu.matmul %15, %16, %cst_6 {dimension_numbers = #tpu.dot_dimension_numbers<[1], [0], [0], [1], [0, 0, 1, 1], [], []>} : vector<256x1152xbf16>, vector<1152x128xbf16>, vector<256x128xf32> -> vector<256x128xf32>
    %c0_7 = arith.constant 0 : index
    %c0_8 = arith.constant 0 : index
    %18 = vector.load %arg3[%c0_7, %c0_8] : memref<1x128xf32, #tpu.memory_space<vmem>>, vector<1x128xf32>
    %19 = vector.broadcast %18 : vector<1x128xf32> to vector<256x128xf32>
    %20 = arith.mulf %17, %19 : vector<256x128xf32>
    %c0_9 = arith.constant 0 : index
    %c0_10 = arith.constant 0 : index
    %21 = vector.load %arg4[%c0_9, %c0_10] : memref<1x128xf32, #tpu.memory_space<vmem>>, vector<1x128xf32>
    %22 = vector.broadcast %21 : vector<1x128xf32> to vector<256x128xf32>
    %23 = arith.addf %20, %22 : vector<256x128xf32>
    %cst_11 = arith.constant 0.000000e+00 : f32
    %24 = vector.broadcast %cst_11 : f32 to vector<256x128xf32>
    %25 = arith.maximumf %23, %24 : vector<256x128xf32>
    %26 = arith.truncf %25 : vector<256x128xf32> to vector<256x128xbf16>
    %27 = vector.shape_cast %26 : vector<256x128xbf16> to vector<1x16x16x128xbf16>
    %cst_12 = arith.constant 0.000000e+00 : bf16
    %28 = vector.broadcast %cst_12 : bf16 to vector<1x1x16x128xbf16>
    %29 = tpu.concatenate %28, %27, %28 in 1 : vector<1x1x16x128xbf16>, vector<1x16x16x128xbf16>, vector<1x1x16x128xbf16> -> vector<1x18x16x128xbf16>
    %cst_13 = arith.constant 0.000000e+00 : bf16
    %30 = vector.broadcast %cst_13 : bf16 to vector<1x18x1x128xbf16>
    %31 = tpu.concatenate %30, %29, %30 in 2 : vector<1x18x1x128xbf16>, vector<1x18x16x128xbf16>, vector<1x18x1x128xbf16> -> vector<1x18x18x128xbf16>
    %32 = vector.extract_strided_slice %31 {offsets = [0, 0, 0, 0], sizes = [1, 16, 16, 128], strides = [1, 1, 1, 1]} : vector<1x18x18x128xbf16> to vector<1x16x16x128xbf16>
    %33 = vector.extract_strided_slice %31 {offsets = [0, 0, 1, 0], sizes = [1, 16, 16, 128], strides = [1, 1, 1, 1]} : vector<1x18x18x128xbf16> to vector<1x16x16x128xbf16>
    %34 = vector.extract_strided_slice %31 {offsets = [0, 0, 2, 0], sizes = [1, 16, 16, 128], strides = [1, 1, 1, 1]} : vector<1x18x18x128xbf16> to vector<1x16x16x128xbf16>
    %35 = vector.extract_strided_slice %31 {offsets = [0, 1, 0, 0], sizes = [1, 16, 16, 128], strides = [1, 1, 1, 1]} : vector<1x18x18x128xbf16> to vector<1x16x16x128xbf16>
    %36 = vector.extract_strided_slice %31 {offsets = [0, 1, 1, 0], sizes = [1, 16, 16, 128], strides = [1, 1, 1, 1]} : vector<1x18x18x128xbf16> to vector<1x16x16x128xbf16>
    %37 = vector.extract_strided_slice %31 {offsets = [0, 1, 2, 0], sizes = [1, 16, 16, 128], strides = [1, 1, 1, 1]} : vector<1x18x18x128xbf16> to vector<1x16x16x128xbf16>
    %38 = vector.extract_strided_slice %31 {offsets = [0, 2, 0, 0], sizes = [1, 16, 16, 128], strides = [1, 1, 1, 1]} : vector<1x18x18x128xbf16> to vector<1x16x16x128xbf16>
    %39 = vector.extract_strided_slice %31 {offsets = [0, 2, 1, 0], sizes = [1, 16, 16, 128], strides = [1, 1, 1, 1]} : vector<1x18x18x128xbf16> to vector<1x16x16x128xbf16>
    %40 = vector.extract_strided_slice %31 {offsets = [0, 2, 2, 0], sizes = [1, 16, 16, 128], strides = [1, 1, 1, 1]} : vector<1x18x18x128xbf16> to vector<1x16x16x128xbf16>
    %41 = tpu.concatenate %32, %33, %34, %35, %36, %37, %38, %39, %40 in 3 : vector<1x16x16x128xbf16>, vector<1x16x16x128xbf16>, vector<1x16x16x128xbf16>, vector<1x16x16x128xbf16>, vector<1x16x16x128xbf16>, vector<1x16x16x128xbf16>, vector<1x16x16x128xbf16>, vector<1x16x16x128xbf16>, vector<1x16x16x128xbf16> -> vector<1x16x16x1152xbf16>
    %42 = vector.shape_cast %41 : vector<1x16x16x1152xbf16> to vector<256x1152xbf16>
    %c0_14 = arith.constant 0 : index
    %c0_15 = arith.constant 0 : index
    %43 = vector.load %arg5[%c0_14, %c0_15] : memref<1152x128xbf16, #tpu.memory_space<vmem>>, vector<1152x128xbf16>
    %cst_16 = arith.constant dense<0.000000e+00> : vector<256x128xf32>
    %44 = tpu.matmul %42, %43, %cst_16 {dimension_numbers = #tpu.dot_dimension_numbers<[1], [0], [0], [1], [0, 0, 1, 1], [], []>} : vector<256x1152xbf16>, vector<1152x128xbf16>, vector<256x128xf32> -> vector<256x128xf32>
    %c0_17 = arith.constant 0 : index
    %c0_18 = arith.constant 0 : index
    %45 = vector.load %arg6[%c0_17, %c0_18] : memref<1x128xf32, #tpu.memory_space<vmem>>, vector<1x128xf32>
    %46 = vector.broadcast %45 : vector<1x128xf32> to vector<256x128xf32>
    %47 = arith.mulf %44, %46 : vector<256x128xf32>
    %c0_19 = arith.constant 0 : index
    %c0_20 = arith.constant 0 : index
    %48 = vector.load %arg7[%c0_19, %c0_20] : memref<1x128xf32, #tpu.memory_space<vmem>>, vector<1x128xf32>
    %49 = vector.broadcast %48 : vector<1x128xf32> to vector<256x128xf32>
    %50 = arith.addf %47, %49 : vector<256x128xf32>
    %51 = vector.shape_cast %0 : vector<1x16x16x128xbf16> to vector<256x128xbf16>
    %52 = arith.extf %51 : vector<256x128xbf16> to vector<256x128xf32>
    %53 = arith.addf %50, %52 : vector<256x128xf32>
    %cst_21 = arith.constant 0.000000e+00 : f32
    %54 = vector.broadcast %cst_21 : f32 to vector<256x128xf32>
    %55 = arith.maximumf %53, %54 : vector<256x128xf32>
    %56 = vector.shape_cast %55 : vector<256x128xf32> to vector<1x16x16x128xf32>
    %c0_22 = arith.constant 0 : index
    %c0_23 = arith.constant 0 : index
    %c0_24 = arith.constant 0 : index
    %c0_25 = arith.constant 0 : index
    %57 = vector.load %arg8[%c0_22, %c0_23, %c0_24, %c0_25] : memref<1x16x16x128xf32, #tpu.memory_space<vmem>>, vector<1x16x16x128xf32>
    tpu.vector_store %arg8[%c0_22, %c0_23, %c0_24, %c0_25], %56 {strides = array<i32>} : memref<1x16x16x128xf32, #tpu.memory_space<vmem>>, vector<1x16x16x128xf32>,
    return
  }
  func.func @transform_0(%arg0: i32) -> (i32, i32, i32, i32) {
    %c0_i32 = arith.constant 0 : i32
    %c0_i32_0 = arith.constant 0 : i32
    %c0_i32_1 = arith.constant 0 : i32
    %c0_i32_2 = arith.constant 0 : i32
    return %arg0, %c0_i32, %c0_i32_0, %c0_i32_1 : i32, i32, i32, i32
  }
  func.func @transform_1(%arg0: i32) -> (i32, i32) {
    %c0_i32 = arith.constant 0 : i32
    %c0_i32_0 = arith.constant 0 : i32
    %c0_i32_1 = arith.constant 0 : i32
    return %c0_i32, %c0_i32_0 : i32, i32
  }
  func.func @transform_2(%arg0: i32) -> (i32, i32) {
    %c0_i32 = arith.constant 0 : i32
    %c0_i32_0 = arith.constant 0 : i32
    %c0_i32_1 = arith.constant 0 : i32
    return %c0_i32, %c0_i32_0 : i32, i32
  }
  func.func @transform_3(%arg0: i32) -> (i32, i32) {
    %c0_i32 = arith.constant 0 : i32
    %c0_i32_0 = arith.constant 0 : i32
    %c0_i32_1 = arith.constant 0 : i32
    return %c0_i32, %c0_i32_0 : i32, i32
  }
  func.func @transform_4(%arg0: i32) -> (i32, i32) {
    %c0_i32 = arith.constant 0 : i32
    %c0_i32_0 = arith.constant 0 : i32
    %c0_i32_1 = arith.constant 0 : i32
    return %c0_i32, %c0_i32_0 : i32, i32
  }
  func.func @transform_5(%arg0: i32) -> (i32, i32) {
    %c0_i32 = arith.constant 0 : i32
    %c0_i32_0 = arith.constant 0 : i32
    %c0_i32_1 = arith.constant 0 : i32
    return %c0_i32, %c0_i32_0 : i32, i32
  }
  func.func @transform_6(%arg0: i32) -> (i32, i32) {
    %c0_i32 = arith.constant 0 : i32
    %c0_i32_0 = arith.constant 0 : i32
    %c0_i32_1 = arith.constant 0 : i32
    return %c0_i32, %c0_i32_0 : i32, i32
  }
  func.func @transform_7(%arg0: i32) -> (i32, i32, i32, i32) {
    %c0_i32 = arith.constant 0 : i32
    %c0_i32_0 = arith.constant 0 : i32
    %c0_i32_1 = arith.constant 0 : i32
    %c0_i32_2 = arith.constant 0 : i32
    return %arg0, %c0_i32, %c0_i32_0, %c0_i32_1 : i32, i32, i32, i32
  }
}

</mosaic_0001>

<llo_original>
// kernel: residual_block.1
$region0: #{residual_block.1}
  #allocation0 [shape = 'u32[]', space=smem, size = 0x4, offset = 0x4, fixed_abs, tag = 'smem constant byte address 0x4 - core index']
  #allocation1 [shape = 'u32[72,128]{1,0:T(1,128)}', space=vmem, size = 0x9000, scoped, tag = 'internal scratch']
  %s0 = inlined_call_operand.vmem [shape: bf16[2,16,16,128], index: 0, kind: input, shape index: {}]
  %s1 = inlined_call_operand.vmem [shape: bf16[1152,128], index: 1, kind: input, shape index: {}]
  %s2 = inlined_call_operand.vmem [shape: f32[1,128], index: 2, kind: input, shape index: {}]
  %s3 = inlined_call_operand.vmem [shape: f32[1,128], index: 3, kind: input, shape index: {}]
  %s4 = inlined_call_operand.vmem [shape: bf16[1152,128], index: 4, kind: input, shape index: {}]
  %s5 = inlined_call_operand.vmem [shape: f32[1,128], index: 5, kind: input, shape index: {}]
  %s6 = inlined_call_operand.vmem [shape: f32[1,128], index: 6, kind: input, shape index: {}]
  %s7 = inlined_call_operand.vmem [shape: f32[2,16,16,128], index: 7, kind: output, shape index: {}]
  %s8 = sld [smem:[#allocation0]]
  $region61: #{residual_block.1} parent=0
    _
  %s10 = ssub.s32 1, %s8
  %s11 = scalar_select 0, %s10, %s8
  loop: start=0, step=1, limit=4
  $region2: #{residual_block.1} parent=0 // loop_pre_header
    _
  $region3: #{residual_block.1} parent=0 // loop_header
    %s13 = sphi 0, %s17
    %p14 = scmp.ge.s32.totalorder %s13, 4
    %s23 = sphi 0, %s25
    %s26 = sphi 0, %s23
    %s27 = sphi 0, %s26
    %s43 = sphi 0, %s27
    %s47 = sphi 0, %s47
    %s49 = sphi 0, %s47
    %s50 = sphi 0, %s49
    %s64 = sphi 0, %s50
    %s68 = sphi 0, %s68
    %s70 = sphi 0, %s68
    %s71 = sphi 0, %s70
    %s85 = sphi 0, %s71
    %s89 = sphi 0, %s89
    %s91 = sphi 0, %s89
    %s92 = sphi 0, %s91
    %s106 = sphi 0, %s92
    %s110 = sphi 0, %s110
    %s112 = sphi 0, %s110
    %s113 = sphi 0, %s112
    %s127 = sphi 0, %s113
    %s131 = sphi 0, %s131
    %s133 = sphi 0, %s131
    %s134 = sphi 0, %s133
    %s148 = sphi 0, %s134
    %s152 = sphi 0, %s152
    %s154 = sphi 0, %s152
    %s155 = sphi 0, %s154
    %s169 = sphi 0, %s155
    %s175 = sphi 0, %s177
    %s178 = sphi 0, %s175
    %s179 = sphi 0, %s178
    %s195 = sphi 0, %s179
  $region4: #{residual_block.1} parent=0 // loop_header_branch
    %16 = sbr.rel (%p14) target = $region8
  $region5: #{residual_block.1} parent=0 // loop_body
    %s18 = ssub.s32 %s13, 1
    %s19 = ssub.s32 %s13, 2
    %s20 = sadd.s32 %s13, 1
    %s21 = ssub.s32 %s13, %s20
    %p22 = scmp.eq.s32.totalorder %s21, 0
    %s24 = sadd.s32 %s23, 1
    %s25 = scalar_select %p22, %s23, %s24
    %p28 = pneg %p22
    %p29 = scmp.eq.s32.totalorder %s13, 1
    %p30 = por %p28, %p29
    %p31 = scmp.ne.s32.totalorder %s23, %s26
    %p32 = scmp.eq.s32.totalorder %s13, 0
    %p33 = por %p31, %p32
    %p34 = scmp.ne.s32.totalorder %s23, %s26
    %p35 = scmp.eq.s32.totalorder %s18, 1
    %p36 = por %p34, %p35
    %p37 = scmp.ne.s32.totalorder %s26, %s27
    %p38 = scmp.eq.s32.totalorder %s18, 0
    %p39 = por %p37, %p38
    %p40 = scmp.ne.s32.totalorder %s26, %s27
    %p41 = scmp.eq.s32.totalorder %s19, 1
    %p42 = por %p40, %p41
    %p44 = scmp.ne.s32.totalorder %s27, %s43
    %p45 = scmp.eq.s32.totalorder %s19, 0
    %p46 = por %p44, %p45
    %s48 = sadd.s32 %s47, 1
    %p51 = scmp.eq.s32.totalorder %s13, 1
    %p52 = scmp.ne.s32.totalorder %s47, %s49
    %p53 = scmp.eq.s32.totalorder %s13, 0
    %p54 = por %p52, %p53
    %p55 = scmp.ne.s32.totalorder %s47, %s49
    %p56 = scmp.eq.s32.totalorder %s18, 1
    %p57 = por %p55, %p56
    %p58 = scmp.ne.s32.totalorder %s49, %s50
    %p59 = scmp.eq.s32.totalorder %s18, 0
    %p60 = por %p58, %p59
    %p61 = scmp.ne.s32.totalorder %s49, %s50
    %p62 = scmp.eq.s32.totalorder %s19, 1
    %p63 = por %p61, %p62
    %p65 = scmp.ne.s32.totalorder %s50, %s64
    %p66 = scmp.eq.s32.totalorder %s19, 0
    %p67 = por %p65, %p66
    %s69 = sadd.s32 %s68, 1
    %p72 = scmp.eq.s32.totalorder %s13, 1
    %p73 = scmp.ne.s32.totalorder %s68, %s70
    %p74 = scmp.eq.s32.totalorder %s13, 0
    %p75 = por %p73, %p74
    %p76 = scmp.ne.s32.totalorder %s68, %s70
    %p77 = scmp.eq.s32.totalorder %s18, 1
    %p78 = por %p76, %p77
    %p79 = scmp.ne.s32.totalorder %s70, %s71
    %p80 = scmp.eq.s32.totalorder %s18, 0
    %p81 = por %p79, %p80
    %p82 = scmp.ne.s32.totalorder %s70, %s71
    %p83 = scmp.eq.s32.totalorder %s19, 1
    %p84 = por %p82, %p83
    %p86 = scmp.ne.s32.totalorder %s71, %s85
    %p87 = scmp.eq.s32.totalorder %s19, 0
    %p88 = por %p86, %p87
    %s90 = sadd.s32 %s89, 1
    %p93 = scmp.eq.s32.totalorder %s13, 1
    %p94 = scmp.ne.s32.totalorder %s89, %s91
    %p95 = scmp.eq.s32.totalorder %s13, 0
    %p96 = por %p94, %p95
    %p97 = scmp.ne.s32.totalorder %s89, %s91
    %p98 = scmp.eq.s32.totalorder %s18, 1
    %p99 = por %p97, %p98
    %p100 = scmp.ne.s32.totalorder %s91, %s92
    %p101 = scmp.eq.s32.totalorder %s18, 0
    %p102 = por %p100, %p101
    %p103 = scmp.ne.s32.totalorder %s91, %s92
    %p104 = scmp.eq.s32.totalorder %s19, 1
    %p105 = por %p103, %p104
    %p107 = scmp.ne.s32.totalorder %s92, %s106
    %p108 = scmp.eq.s32.totalorder %s19, 0
    %p109 = por %p107, %p108
    %s111 = sadd.s32 %s110, 1
    %p114 = scmp.eq.s32.totalorder %s13, 1
    %p115 = scmp.ne.s32.totalorder %s110, %s112
    %p116 = scmp.eq.s32.totalorder %s13, 0
    %p117 = por %p115, %p116
    %p118 = scmp.ne.s32.totalorder %s110, %s112
    %p119 = scmp.eq.s32.totalorder %s18, 1
    %p120 = por %p118, %p119
    %p121 = scmp.ne.s32.totalorder %s112, %s113
    %p122 = scmp.eq.s32.totalorder %s18, 0
    %p123 = por %p121, %p122
    %p124 = scmp.ne.s32.totalorder %s112, %s113
    %p125 = scmp.eq.s32.totalorder %s19, 1
    %p126 = por %p124, %p125
    %p128 = scmp.ne.s32.totalorder %s113, %s127
    %p129 = scmp.eq.s32.totalorder %s19, 0
    %p130 = por %p128, %p129
    %s132 = sadd.s32 %s131, 1
    %p135 = scmp.eq.s32.totalorder %s13, 1
    %p136 = scmp.ne.s32.totalorder %s131, %s133
    %p137 = scmp.eq.s32.totalorder %s13, 0
    %p138 = por %p136, %p137
    %p139 = scmp.ne.s32.totalorder %s131, %s133
    %p140 = scmp.eq.s32.totalorder %s18, 1
    %p141 = por %p139, %p140
    %p142 = scmp.ne.s32.totalorder %s133, %s134
    %p143 = scmp.eq.s32.totalorder %s18, 0
    %p144 = por %p142, %p143
    %p145 = scmp.ne.s32.totalorder %s133, %s134
    %p146 = scmp.eq.s32.totalorder %s19, 1
    %p147 = por %p145, %p146
    %p149 = scmp.ne.s32.totalorder %s134, %s148
    %p150 = scmp.eq.s32.totalorder %s19, 0
    %p151 = por %p149, %p150
    %s153 = sadd.s32 %s152, 1
    %p156 = scmp.eq.s32.totalorder %s13, 1
    %p157 = scmp.ne.s32.totalorder %s152, %s154
    %p158 = scmp.eq.s32.totalorder %s13, 0
    %p159 = por %p157, %p158
    %p160 = scmp.ne.s32.totalorder %s152, %s154
    %p161 = scmp.eq.s32.totalorder %s18, 1
    %p162 = por %p160, %p161
    %p163 = scmp.ne.s32.totalorder %s154, %s155
    %p164 = scmp.eq.s32.totalorder %s18, 0
    %p165 = por %p163, %p164
    %p166 = scmp.ne.s32.totalorder %s154, %s155
    %p167 = scmp.eq.s32.totalorder %s19, 1
    %p168 = por %p166, %p167
    %p170 = scmp.ne.s32.totalorder %s155, %s169
    %p171 = scmp.eq.s32.totalorder %s19, 0
    %p172 = por %p170, %p171
    %s173 = ssub.s32 %s13, %s20
    %p174 = scmp.eq.s32.totalorder %s173, 0
    %s176 = sadd.s32 %s175, 1
    %s177 = scalar_select %p174, %s175, %s176
    %p180 = pneg %p174
    %p181 = scmp.eq.s32.totalorder %s13, 1
    %p182 = por %p180, %p181
    %p183 = scmp.ne.s32.totalorder %s175, %s178
    %p184 = scmp.eq.s32.totalorder %s13, 0
    %p185 = por %p183, %p184
    %p186 = scmp.ne.s32.totalorder %s175, %s178
    %p187 = scmp.eq.s32.totalorder %s18, 1
    %p188 = por %p186, %p187
    %p189 = scmp.ne.s32.totalorder %s178, %s179
    %p190 = scmp.eq.s32.totalorder %s18, 0
    %p191 = por %p189, %p190
    %p192 = scmp.ne.s32.totalorder %s178, %s179
    %p193 = scmp.eq.s32.totalorder %s19, 1
    %p194 = por %p192, %p193
    %p196 = scmp.ne.s32.totalorder %s179, %s195
    %p197 = scmp.eq.s32.totalorder %s19, 0
    %p198 = por %p196, %p197
    %p199 = scmp.le.s32.totalorder 1, %s13
    %p200 = scmp.lt.s32.totalorder %s13, 3
    %p201 = pnand %p199, %p200
    %p202 = pneg %p201
    // Predicated region
    $region9: #{residual_block.1} parent=5 // pred_check
      _
    $region10: #{residual_block.1} parent=5 // pred_check_branch
      %204 = sbr.rel (%p201) target = $region12
    $region11: #{residual_block.1} parent=5 // pred_region
      %s205 = ssub.s32 %s13, 1
      // Predicated region
      $region13: #{residual_block.1} parent=11 // pred_check
        %p206 = pneg %p60
      $region14: #{residual_block.1} parent=11 // pred_check_branch
        %208 = sbr.rel (%p206) target = $region16
      $region15: #{residual_block.1} parent=11 // pred_region
        _
      $region16: #{residual_block.1} parent=11 // pred_fallthru
        _
      // Predicated region
      $region17: #{residual_block.1} parent=11 // pred_check
        %p209 = pneg %p81
      $region18: #{residual_block.1} parent=11 // pred_check_branch
        %211 = sbr.rel (%p209) target = $region20
      $region19: #{residual_block.1} parent=11 // pred_region
        _
      $region20: #{residual_block.1} parent=11 // pred_fallthru
        _
      // Predicated region
      $region21: #{residual_block.1} parent=11 // pred_check
        %p212 = pneg %p102
      $region22: #{residual_block.1} parent=11 // pred_check_branch
        %214 = sbr.rel (%p212) target = $region24
      $region23: #{residual_block.1} parent=11 // pred_region
        _
      $region24: #{residual_block.1} parent=11 // pred_fallthru
        _
      // Predicated region
      $region25: #{residual_block.1} parent=11 // pred_check
        %p215 = pneg %p123
      $region26: #{residual_block.1} parent=11 // pred_check_branch
        %217 = sbr.rel (%p215) target = $region28
      $region27: #{residual_block.1} parent=11 // pred_region
        _
      $region28: #{residual_block.1} parent=11 // pred_fallthru
        _
      // Predicated region
      $region29: #{residual_block.1} parent=11 // pred_check
        %p218 = pneg %p144
      $region30: #{residual_block.1} parent=11 // pred_check_branch
        %220 = sbr.rel (%p218) target = $region32
      $region31: #{residual_block.1} parent=11 // pred_region
        _
      $region32: #{residual_block.1} parent=11 // pred_fallthru
        _
      // Predicated region
      $region33: #{residual_block.1} parent=11 // pred_check
        %p221 = pneg %p165
      $region34: #{residual_block.1} parent=11 // pred_check_branch
        %223 = sbr.rel (%p221) target = $region36
      $region35: #{residual_block.1} parent=11 // pred_region
        _
      $region36: #{residual_block.1} parent=11 // pred_fallthru
        _
    $region12: #{residual_block.1} parent=5 // pred_fallthru
      _
    %p224 = scmp.lt.s32.totalorder %s13, 2
    // Predicated region
    $region37: #{residual_block.1} parent=5 // pred_check
      %p225 = pneg %p224
    $region38: #{residual_block.1} parent=5 // pred_check_branch
      %227 = sbr.rel (%p225) target = $region40
    $region39: #{residual_block.1} parent=5 // pred_region
      // Predicated region
      $region41: #{residual_block.1} parent=39 // pred_check
        %p228 = pneg %p33
      $region42: #{residual_block.1} parent=39 // pred_check_branch
        %230 = sbr.rel (%p228) target = $region44
      $region43: #{residual_block.1} parent=39 // pred_region
        %p231 = scmp.lt.s32.totalorder %s13, 1
        %s232 = scalar_select %p231, %s13, 1
        %s233 = smul.addr %s232, 32
        %s234 = smul.addr %s233, 4
        %s235 = scalar_lea.vmem %s0, %s234
      $region44: #{residual_block.1} parent=39 // pred_fallthru
        _
    $region40: #{residual_block.1} parent=5 // pred_fallthru
      _
    %p236 = scmp.le.s32.totalorder 1, %s13
    %p237 = scmp.lt.s32.totalorder %s13, 3
    %p238 = pnand %p236, %p237
    %p239 = pneg %p238
    // Predicated region
    $region45: #{residual_block.1} parent=5 // pred_check
      _
    $region46: #{residual_block.1} parent=5 // pred_check_branch
      %241 = sbr.rel (%p238) target = $region48
    $region47: #{residual_block.1} parent=5 // pred_region
      %s242 = ssub.s32 %s13, 1
      %p243 = scmp.lt.s32.totalorder %s18, 1
      %s244 = scalar_select %p243, %s18, 1
      %s245 = smul.addr %s244, 32
      %s246 = smul.addr %s245, 4
      %s247 = scalar_lea.vmem %s0, %s246
      %p248 = pneg %p39
      %p249 = pneg %p36
      %p250 = pneg %p60
      %p251 = pneg %p57
      %p252 = pneg %p81
      %p253 = pneg %p78
      %p254 = pneg %p102
      %p255 = pneg %p99
      %p256 = pneg %p123
      %p257 = pneg %p120
      %p258 = pneg %p144
      %p259 = pneg %p141
      %p260 = pneg %p165
      %p261 = pneg %p162
      %p262 = pneg %p191
      %p263 = pneg %p188
      %p264 = scmp.lt.s32.totalorder %s18, 1
      %s265 = scalar_select %p264, %s18, 1
      %s266 = smul.addr %s265, 32
      %s267 = smul.addr %s266, 8
      %s268 = scalar_lea.vmem %s7, %s267
      %p269 = scmp.lt.s32.totalorder %s18, 1
      %s270 = scalar_select %p269, %s18, 1
      %s271 = smul.addr %s270, 32
      %s272 = smul.addr %s271, 4
      %s273 = scalar_lea.vmem %s0, %s272
      %p274 = scmp.lt.s32.totalorder %s18, 1
      %s275 = scalar_select %p274, %s18, 1
      %s276 = smul.addr %s275, 32
      %s277 = smul.addr %s276, 8
      %s278 = scalar_lea.vmem %s7, %s277
      %v280 = vld [vmem:[%s273] sm:$0xf]
      %v281 = vld [vmem:[%s273 + $0x4] sm:$0xf]
      %v282 = vld [vmem:[%s273 + $0x8] sm:$0xf]
      %v283 = vld [vmem:[%s273 + $0xc] sm:$0xf]
      %v284 = vld [vmem:[%s273 + $0x10] sm:$0xf]
      %v285 = vld [vmem:[%s273 + $0x14] sm:$0xf]
      %v286 = vld [vmem:[%s273 + $0x18] sm:$0xf]
      %v287 = vld [vmem:[%s273 + $0x1c] sm:$0xf]
      %v288 = vld [vmem:[%s273 + $0x20] sm:$0xf]
      %v289 = vld [vmem:[%s273 + $0x24] sm:$0xf]
      %v290 = vld [vmem:[%s273 + $0x28] sm:$0xf]
      %v291 = vld [vmem:[%s273 + $0x2c] sm:$0xf]
      %v292 = vld [vmem:[%s273 + $0x30] sm:$0xf]
      %v293 = vld [vmem:[%s273 + $0x34] sm:$0xf]
      %v294 = vld [vmem:[%s273 + $0x38] sm:$0xf]
      %v295 = vld [vmem:[%s273 + $0x3c] sm:$0xf]
      %v296 = vld [vmem:[%s273 + $0x40] sm:$0xf]
      %v297 = vld [vmem:[%s273 + $0x44] sm:$0xf]
      %v298 = vld [vmem:[%s273 + $0x48] sm:$0xf]
      %v299 = vld [vmem:[%s273 + $0x4c] sm:$0xf]
      %v300 = vld [vmem:[%s273 + $0x50] sm:$0xf]
      %v301 = vld [vmem:[%s273 + $0x54] sm:$0xf]
      %v302 = vld [vmem:[%s273 + $0x58] sm:$0xf]
      %v303 = vld [vmem:[%s273 + $0x5c] sm:$0xf]
      %v304 = vld [vmem:[%s273 + $0x60] sm:$0xf]
      %v305 = vld [vmem:[%s273 + $0x64] sm:$0xf]
      %v306 = vld [vmem:[%s273 + $0x68] sm:$0xf]
      %v307 = vld [vmem:[%s273 + $0x6c] sm:$0xf]
      %v308 = vld [vmem:[%s273 + $0x70] sm:$0xf]
      %v309 = vld [vmem:[%s273 + $0x74] sm:$0xf]
      %v310 = vld [vmem:[%s273 + $0x78] sm:$0xf]
      %v311 = vld [vmem:[%s273 + $0x7c] sm:$0xf]
      %v344 = vunpack.c.l.b16 %v280
      %v345 = vunpack.c.l.b16 %v281
      %v346 = vunpack.c.l.b16 %v282
      %v347 = vunpack.c.l.b16 %v283
      %v348 = vunpack.c.l.b16 %v284
      %v349 = vunpack.c.l.b16 %v285
      %v350 = vunpack.c.l.b16 %v286
      %v351 = vunpack.c.l.b16 %v287
      %v352 = vunpack.c.l.b16 %v288
      %v353 = vunpack.c.l.b16 %v289
      %v354 = vunpack.c.l.b16 %v290
      %v355 = vunpack.c.l.b16 %v291
      %v356 = vunpack.c.l.b16 %v292
      %v357 = vunpack.c.l.b16 %v293
      %v358 = vunpack.c.l.b16 %v294
      %v359 = vunpack.c.l.b16 %v295
      %v360 = vunpack.c.l.b16 %v296
      %v361 = vunpack.c.l.b16 %v297
      %v362 = vunpack.c.l.b16 %v298
      %v363 = vunpack.c.l.b16 %v299
      %v364 = vunpack.c.l.b16 %v300
      %v365 = vunpack.c.l.b16 %v301
      %v366 = vunpack.c.l.b16 %v302
      %v367 = vunpack.c.l.b16 %v303
      %v368 = vunpack.c.l.b16 %v304
      %v369 = vunpack.c.l.b16 %v305
      %v370 = vunpack.c.l.b16 %v306
      %v371 = vunpack.c.l.b16 %v307
      %v372 = vunpack.c.l.b16 %v308
      %v373 = vunpack.c.l.b16 %v309
      %v374 = vunpack.c.l.b16 %v310
      %v375 = vunpack.c.l.b16 %v311
      %v376 = vpack.c.b16 %v345, %v344
      %v377 = vpack.c.b16 %v347, %v346
      %v378 = vpack.c.b16 %v349, %v348
      %v379 = vpack.c.b16 %v351, %v350
      %v380 = vpack.c.b16 %v353, %v352
      %v381 = vpack.c.b16 %v355, %v354
      %v382 = vpack.c.b16 %v357, %v356
      %v383 = vpack.c.b16 %v359, %v358
      %v384 = vpack.c.b16 %v361, %v360
      %v385 = vpack.c.b16 %v363, %v362
      %v386 = vpack.c.b16 %v365, %v364
      %v387 = vpack.c.b16 %v367, %v366
      %v388 = vpack.c.b16 %v369, %v368
      %v389 = vpack.c.b16 %v371, %v370
      %v390 = vpack.c.b16 %v373, %v372
      %v391 = vpack.c.b16 %v375, %v374
      %v393 = vshrl.u32 0, 16
      %v395 = vrot.slane %v393, 7
      %v396 = vshll.u32 0, 16
      %v398 = vor.u32 %v395, %v396
      %v400 = vshrl.u32 %v376, 16
      %v402 = vrot.slane %v400, 7
      %v403 = vshll.u32 %v376, 16
      %v405 = vor.u32 %v402, %v403
      %v407 = vshrl.u32 %v377, 16
      %v409 = vrot.slane %v407, 7
      %v410 = vshll.u32 %v377, 16
      %v412 = vor.u32 %v409, %v410
      %v414 = vshrl.u32 %v378, 16
      %v416 = vrot.slane %v414, 7
      %v417 = vshll.u32 %v378, 16
      %v419 = vor.u32 %v416, %v417
      %v421 = vshrl.u32 %v379, 16
      %v423 = vrot.slane %v421, 7
      %v424 = vshll.u32 %v379, 16
      %v426 = vor.u32 %v423, %v424
      %v428 = vshrl.u32 %v380, 16
      %v430 = vrot.slane %v428, 7
      %v431 = vshll.u32 %v380, 16
      %v433 = vor.u32 %v430, %v431
      %v435 = vshrl.u32 %v381, 16
      %v437 = vrot.slane %v435, 7
      %v438 = vshll.u32 %v381, 16
      %v440 = vor.u32 %v437, %v438
      %v442 = vshrl.u32 %v382, 16
      %v444 = vrot.slane %v442, 7
      %v445 = vshll.u32 %v382, 16
      %v447 = vor.u32 %v444, %v445
      %v449 = vshrl.u32 %v383, 16
      %v451 = vrot.slane %v449, 7
      %v452 = vshll.u32 %v383, 16
      %v454 = vor.u32 %v451, %v452
      %v456 = vshrl.u32 %v384, 16
      %v458 = vrot.slane %v456, 7
      %v459 = vshll.u32 %v384, 16
      %v461 = vor.u32 %v458, %v459
      %v463 = vshrl.u32 %v385, 16
      %v465 = vrot.slane %v463, 7
      %v466 = vshll.u32 %v385, 16
      %v468 = vor.u32 %v465, %v466
      %v470 = vshrl.u32 %v386, 16
      %v472 = vrot.slane %v470, 7
      %v473 = vshll.u32 %v386, 16
      %v475 = vor.u32 %v472, %v473
      %v477 = vshrl.u32 %v387, 16
      %v479 = vrot.slane %v477, 7
      %v480 = vshll.u32 %v387, 16
      %v482 = vor.u32 %v479, %v480
      %v484 = vshrl.u32 %v388, 16
      %v486 = vrot.slane %v484, 7
      %v487 = vshll.u32 %v388, 16
      %v489 = vor.u32 %v486, %v487
      %v491 = vshrl.u32 %v389, 16
      %v493 = vrot.slane %v491, 7
      %v494 = vshll.u32 %v389, 16
      %v496 = vor.u32 %v493, %v494
      %v498 = vshrl.u32 %v390, 16
      %v500 = vrot.slane %v498, 7
      %v501 = vshll.u32 %v390, 16
      %v503 = vor.u32 %v500, %v501
      %v505 = vshrl.u32 %v391, 16
      %v507 = vrot.slane %v505, 7
      %v508 = vshll.u32 %v391, 16
      %v510 = vor.u32 %v507, %v508
      %vm545 = vcmask 1040384
      %vm546 = vsmask.f32 256
      %vm547 = vmand %vm545, %vm546
      %v548 = vsel %vm547, 0, %v398
      %v549 = vsel %vm547, 0, %v405
      %v550 = vsel %vm547, 0, %v412
      %v551 = vsel %vm547, 0, %v419
      %v552 = vsel %vm547, 0, %v426
      %v553 = vsel %vm547, 0, %v433
      %v554 = vsel %vm547, 0, %v440
      %v555 = vsel %vm547, 0, %v447
      %v556 = vsel %vm547, 0, %v454
      %v557 = vsel %vm547, 0, %v461
      %v558 = vsel %vm547, 0, %v468
      %v559 = vsel %vm547, 0, %v475
      %v560 = vsel %vm547, 0, %v482
      %v561 = vsel %vm547, 0, %v489
      %v562 = vsel %vm547, 0, %v496
      %v563 = vsel %vm547, 0, %v503
      %v564 = vsel %vm547, 0, %v510
      %v565 = vsel %vm547, %v395, 0
      %v566 = vsel %vm547, %v402, 0
      %v567 = vsel %vm547, %v409, 0
      %v568 = vsel %vm547, %v416, 0
      %v569 = vsel %vm547, %v423, 0
      %v570 = vsel %vm547, %v430, 0
      %v571 = vsel %vm547, %v437, 0
      %v572 = vsel %vm547, %v444, 0
      %v573 = vsel %vm547, %v451, 0
      %v574 = vsel %vm547, %v458, 0
      %v575 = vsel %vm547, %v465, 0
      %v576 = vsel %vm547, %v472, 0
      %v577 = vsel %vm547, %v479, 0
      %v578 = vsel %vm547, %v486, 0
      %v579 = vsel %vm547, %v493, 0
      %v580 = vsel %vm547, %v500, 0
      %v581 = vsel %vm547, %v507, 0
      %vm582 = vsmask.f32 7424
      %v584 = vshrl.u32 %v548, 16
      %v586 = vshll.u32 %v548, 16
      %v588 = vrot.slane %v586, 1
      %v589 = vor.u32 %v584, %v588
      %v591 = vshll.u32 %v565, 16
      %v593 = vrot.slane %v591, 1
      %v594 = vsel %vm582, %v589, %v593
      %v596 = vshrl.u32 %v549, 16
      %v598 = vshll.u32 %v549, 16
      %v600 = vrot.slane %v598, 1
      %v601 = vor.u32 %v596, %v600
      %v603 = vshll.u32 %v566, 16
      %v605 = vrot.slane %v603, 1
      %v606 = vsel %vm582, %v601, %v605
      %v608 = vshrl.u32 %v550, 16
      %v610 = vshll.u32 %v550, 16
      %v612 = vrot.slane %v610, 1
      %v613 = vor.u32 %v608, %v612
      %v615 = vshll.u32 %v567, 16
      %v617 = vrot.slane %v615, 1
      %v618 = vsel %vm582, %v613, %v617
      %v620 = vshrl.u32 %v551, 16
      %v622 = vshll.u32 %v551, 16
      %v624 = vrot.slane %v622, 1
      %v625 = vor.u32 %v620, %v624
      %v627 = vshll.u32 %v568, 16
      %v629 = vrot.slane %v627, 1
      %v630 = vsel %vm582, %v625, %v629
      %v632 = vshrl.u32 %v552, 16
      %v634 = vshll.u32 %v552, 16
      %v636 = vrot.slane %v634, 1
      %v637 = vor.u32 %v632, %v636
      %v639 = vshll.u32 %v569, 16
      %v641 = vrot.slane %v639, 1
      %v642 = vsel %vm582, %v637, %v641
      %v644 = vshrl.u32 %v553, 16
      %v646 = vshll.u32 %v553, 16
      %v648 = vrot.slane %v646, 1
      %v649 = vor.u32 %v644, %v648
      %v651 = vshll.u32 %v570, 16
      %v653 = vrot.slane %v651, 1
      %v654 = vsel %vm582, %v649, %v653
      %v656 = vshrl.u32 %v554, 16
      %v658 = vshll.u32 %v554, 16
      %v660 = vrot.slane %v658, 1
      %v661 = vor.u32 %v656, %v660
      %v663 = vshll.u32 %v571, 16
      %v665 = vrot.slane %v663, 1
      %v666 = vsel %vm582, %v661, %v665
      %v668 = vshrl.u32 %v555, 16
      %v670 = vshll.u32 %v555, 16
      %v672 = vrot.slane %v670, 1
      %v673 = vor.u32 %v668, %v672
      %v675 = vshll.u32 %v572, 16
      %v677 = vrot.slane %v675, 1
      %v678 = vsel %vm582, %v673, %v677
      %v680 = vshrl.u32 %v556, 16
      %v682 = vshll.u32 %v556, 16
      %v684 = vrot.slane %v682, 1
      %v685 = vor.u32 %v680, %v684
      %v687 = vshll.u32 %v573, 16
      %v689 = vrot.slane %v687, 1
      %v690 = vsel %vm582, %v685, %v689
      %v692 = vshrl.u32 %v557, 16
      %v694 = vshll.u32 %v557, 16
      %v696 = vrot.slane %v694, 1
      %v697 = vor.u32 %v692, %v696
      %v699 = vshll.u32 %v574, 16
      %v701 = vrot.slane %v699, 1
      %v702 = vsel %vm582, %v697, %v701
      %v704 = vshrl.u32 %v558, 16
      %v706 = vshll.u32 %v558, 16
      %v708 = vrot.slane %v706, 1
      %v709 = vor.u32 %v704, %v708
      %v711 = vshll.u32 %v575, 16
      %v713 = vrot.slane %v711, 1
      %v714 = vsel %vm582, %v709, %v713
      %v716 = vshrl.u32 %v559, 16
      %v718 = vshll.u32 %v559, 16
      %v720 = vrot.slane %v718, 1
      %v721 = vor.u32 %v716, %v720
      %v723 = vshll.u32 %v576, 16
      %v725 = vrot.slane %v723, 1
      %v726 = vsel %vm582, %v721, %v725
      %v728 = vshrl.u32 %v560, 16
      %v730 = vshll.u32 %v560, 16
      %v732 = vrot.slane %v730, 1
      %v733 = vor.u32 %v728, %v732
      %v735 = vshll.u32 %v577, 16
      %v737 = vrot.slane %v735, 1
      %v738 = vsel %vm582, %v733, %v737
      %v740 = vshrl.u32 %v561, 16
      %v742 = vshll.u32 %v561, 16
      %v744 = vrot.slane %v742, 1
      %v745 = vor.u32 %v740, %v744
      %v747 = vshll.u32 %v578, 16
      %v749 = vrot.slane %v747, 1
      %v750 = vsel %vm582, %v745, %v749
      %v752 = vshrl.u32 %v562, 16
      %v754 = vshll.u32 %v562, 16
      %v756 = vrot.slane %v754, 1
      %v757 = vor.u32 %v752, %v756
      %v759 = vshll.u32 %v579, 16
      %v761 = vrot.slane %v759, 1
      %v762 = vsel %vm582, %v757, %v761
      %v764 = vshrl.u32 %v563, 16
      %v766 = vshll.u32 %v563, 16
      %v768 = vrot.slane %v766, 1
      %v769 = vor.u32 %v764, %v768
      %v771 = vshll.u32 %v580, 16
      %v773 = vrot.slane %v771, 1
      %v774 = vsel %vm582, %v769, %v773
      %vm823 = vcmask 1046528
      %v824 = vrot.slane %v548, 1
      %v825 = vrot.slane %v565, 1
      %v826 = vsel %vm823, %v824, %v825
      %v827 = vrot.slane %v549, 1
      %v828 = vrot.slane %v566, 1
      %v829 = vsel %vm823, %v827, %v828
      %v830 = vrot.slane %v550, 1
      %v831 = vrot.slane %v567, 1
      %v832 = vsel %vm823, %v830, %v831
      %v833 = vrot.slane %v551, 1
      %v834 = vrot.slane %v568, 1
      %v835 = vsel %vm823, %v833, %v834
      %v836 = vrot.slane %v552, 1
      %v837 = vrot.slane %v569, 1
      %v838 = vsel %vm823, %v836, %v837
      %v839 = vrot.slane %v553, 1
      %v840 = vrot.slane %v570, 1
      %v841 = vsel %vm823, %v839, %v840
      %v842 = vrot.slane %v554, 1
      %v843 = vrot.slane %v571, 1
      %v844 = vsel %vm823, %v842, %v843
      %v845 = vrot.slane %v555, 1
      %v846 = vrot.slane %v572, 1
      %v847 = vsel %vm823, %v845, %v846
      %v848 = vrot.slane %v556, 1
      %v849 = vrot.slane %v573, 1
      %v850 = vsel %vm823, %v848, %v849
      %v851 = vrot.slane %v557, 1
      %v852 = vrot.slane %v574, 1
      %v853 = vsel %vm823, %v851, %v852
      %v854 = vrot.slane %v558, 1
      %v855 = vrot.slane %v575, 1
      %v856 = vsel %vm823, %v854, %v855
      %v857 = vrot.slane %v559, 1
      %v858 = vrot.slane %v576, 1
      %v859 = vsel %vm823, %v857, %v858
      %v860 = vrot.slane %v560, 1
      %v861 = vrot.slane %v577, 1
      %v862 = vsel %vm823, %v860, %v861
      %v863 = vrot.slane %v561, 1
      %v864 = vrot.slane %v578, 1
      %v865 = vsel %vm823, %v863, %v864
      %v866 = vrot.slane %v562, 1
      %v867 = vrot.slane %v579, 1
      %v868 = vsel %vm823, %v866, %v867
      %v869 = vrot.slane %v563, 1
      %v870 = vrot.slane %v580, 1
      %v871 = vsel %vm823, %v869, %v870
      %v889 = vshrl.u32 %v564, 16
      %v891 = vshll.u32 %v564, 16
      %v893 = vrot.slane %v891, 1
      %v894 = vor.u32 %v889, %v893
      %v896 = vshll.u32 %v581, 16
      %v898 = vrot.slane %v896, 1
      %v899 = vsel %vm582, %v894, %v898
      %v903 = vrot.slane %v564, 1
      %v904 = vrot.slane %v581, 1
      %v905 = vsel %vm823, %v903, %v904
      %v907 = vld [vmem:[%s1] sm:$0xf]
      %v908 = vld [vmem:[%s1 + $0x4] sm:$0xf]
      %v909 = vld [vmem:[%s1 + $0x8] sm:$0xf]
      %v910 = vld [vmem:[%s1 + $0xc] sm:$0xf]
      %v911 = vld [vmem:[%s1 + $0x10] sm:$0xf]
      %v912 = vld [vmem:[%s1 + $0x14] sm:$0xf]
      %v913 = vld [vmem:[%s1 + $0x18] sm:$0xf]
      %v914 = vld [vmem:[%s1 + $0x1c] sm:$0xf]
      %v915 = vld [vmem:[%s1 + $0x20] sm:$0xf]
      %v916 = vld [vmem:[%s1 + $0x24] sm:$0xf]
      %v917 = vld [vmem:[%s1 + $0x28] sm:$0xf]
      %v918 = vld [vmem:[%s1 + $0x2c] sm:$0xf]
      %v919 = vld [vmem:[%s1 + $0x30] sm:$0xf]
      %v920 = vld [vmem:[%s1 + $0x34] sm:$0xf]
      %v921 = vld [vmem:[%s1 + $0x38] sm:$0xf]
      %v922 = vld [vmem:[%s1 + $0x3c] sm:$0xf]
      %v923 = vld [vmem:[%s1 + $0x40] sm:$0xf]
      %v924 = vld [vmem:[%s1 + $0x44] sm:$0xf]
      %v925 = vld [vmem:[%s1 + $0x48] sm:$0xf]
      %v926 = vld [vmem:[%s1 + $0x4c] sm:$0xf]
      %v927 = vld [vmem:[%s1 + $0x50] sm:$0xf]
      %v928 = vld [vmem:[%s1 + $0x54] sm:$0xf]
      %v929 = vld [vmem:[%s1 + $0x58] sm:$0xf]
      %v930 = vld [vmem:[%s1 + $0x5c] sm:$0xf]
      %v931 = vld [vmem:[%s1 + $0x60] sm:$0xf]
      %v932 = vld [vmem:[%s1 + $0x64] sm:$0xf]
      %v933 = vld [vmem:[%s1 + $0x68] sm:$0xf]
      %v934 = vld [vmem:[%s1 + $0x6c] sm:$0xf]
      %v935 = vld [vmem:[%s1 + $0x70] sm:$0xf]
      %v936 = vld [vmem:[%s1 + $0x74] sm:$0xf]
      %v937 = vld [vmem:[%s1 + $0x78] sm:$0xf]
      %v938 = vld [vmem:[%s1 + $0x7c] sm:$0xf]
      %v939 = vld [vmem:[%s1 + $0x80] sm:$0xf]
      %v940 = vld [vmem:[%s1 + $0x84] sm:$0xf]
      %v941 = vld [vmem:[%s1 + $0x88] sm:$0xf]
      %v942 = vld [vmem:[%s1 + $0x8c] sm:$0xf]
      %v943 = vld [vmem:[%s1 + $0x90] sm:$0xf]
      %v944 = vld [vmem:[%s1 + $0x94] sm:$0xf]
      %v945 = vld [vmem:[%s1 + $0x98] sm:$0xf]
      %v946 = vld [vmem:[%s1 + $0x9c] sm:$0xf]
      %v947 = vld [vmem:[%s1 + $0xa0] sm:$0xf]
      %v948 = vld [vmem:[%s1 + $0xa4] sm:$0xf]
      %v949 = vld [vmem:[%s1 + $0xa8] sm:$0xf]
      %v950 = vld [vmem:[%s1 + $0xac] sm:$0xf]
      %v951 = vld [vmem:[%s1 + $0xb0] sm:$0xf]
      %v952 = vld [vmem:[%s1 + $0xb4] sm:$0xf]
      %v953 = vld [vmem:[%s1 + $0xb8] sm:$0xf]
      %v954 = vld [vmem:[%s1 + $0xbc] sm:$0xf]
      %v955 = vld [vmem:[%s1 + $0xc0] sm:$0xf]
      %v956 = vld [vmem:[%s1 + $0xc4] sm:$0xf]
      %v957 = vld [vmem:[%s1 + $0xc8] sm:$0xf]
      %v958 = vld [vmem:[%s1 + $0xcc] sm:$0xf]
      %v959 = vld [vmem:[%s1 + $0xd0] sm:$0xf]
      %v960 = vld [vmem:[%s1 + $0xd4] sm:$0xf]
      %v961 = vld [vmem:[%s1 + $0xd8] sm:$0xf]
      %v962 = vld [vmem:[%s1 + $0xdc] sm:$0xf]
      %v963 = vld [vmem:[%s1 + $0xe0] sm:$0xf]
      %v964 = vld [vmem:[%s1 + $0xe4] sm:$0xf]
      %v965 = vld [vmem:[%s1 + $0xe8] sm:$0xf]
      %v966 = vld [vmem:[%s1 + $0xec] sm:$0xf]
      %v967 = vld [vmem:[%s1 + $0xf0] sm:$0xf]
      %v968 = vld [vmem:[%s1 + $0xf4] sm:$0xf]
      %v969 = vld [vmem:[%s1 + $0xf8] sm:$0xf]
      %v970 = vld [vmem:[%s1 + $0xfc] sm:$0xf]
      %v971 = vld [vmem:[%s1 + $0x100] sm:$0xf]
      %v972 = vld [vmem:[%s1 + $0x104] sm:$0xf]
      %v973 = vld [vmem:[%s1 + $0x108] sm:$0xf]
      %v974 = vld [vmem:[%s1 + $0x10c] sm:$0xf]
      %v975 = vld [vmem:[%s1 + $0x110] sm:$0xf]
      %v976 = vld [vmem:[%s1 + $0x114] sm:$0xf]
      %v977 = vld [vmem:[%s1 + $0x118] sm:$0xf]
      %v978 = vld [vmem:[%s1 + $0x11c] sm:$0xf]
      %v979 = vld [vmem:[%s1 + $0x120] sm:$0xf]
      %v980 = vld [vmem:[%s1 + $0x124] sm:$0xf]
      %v981 = vld [vmem:[%s1 + $0x128] sm:$0xf]
      %v982 = vld [vmem:[%s1 + $0x12c] sm:$0xf]
      %v983 = vld [vmem:[%s1 + $0x130] sm:$0xf]
      %v984 = vld [vmem:[%s1 + $0x134] sm:$0xf]
      %v985 = vld [vmem:[%s1 + $0x138] sm:$0xf]
      %v986 = vld [vmem:[%s1 + $0x13c] sm:$0xf]
      %v987 = vld [vmem:[%s1 + $0x140] sm:$0xf]
      %v988 = vld [vmem:[%s1 + $0x144] sm:$0xf]
      %v989 = vld [vmem:[%s1 + $0x148] sm:$0xf]
      %v990 = vld [vmem:[%s1 + $0x14c] sm:$0xf]
      %v991 = vld [vmem:[%s1 + $0x150] sm:$0xf]
      %v992 = vld [vmem:[%s1 + $0x154] sm:$0xf]
      %v993 = vld [vmem:[%s1 + $0x158] sm:$0xf]
      %v994 = vld [vmem:[%s1 + $0x15c] sm:$0xf]
      %v995 = vld [vmem:[%s1 + $0x160] sm:$0xf]
      %v996 = vld [vmem:[%s1 + $0x164] sm:$0xf]
      %v997 = vld [vmem:[%s1 + $0x168] sm:$0xf]
      %v998 = vld [vmem:[%s1 + $0x16c] sm:$0xf]
      %v999 = vld [vmem:[%s1 + $0x170] sm:$0xf]
      %v1000 = vld [vmem:[%s1 + $0x174] sm:$0xf]
      %v1001 = vld [vmem:[%s1 + $0x178] sm:$0xf]
      %v1002 = vld [vmem:[%s1 + $0x17c] sm:$0xf]
      %v1003 = vld [vmem:[%s1 + $0x180] sm:$0xf]
      %v1004 = vld [vmem:[%s1 + $0x184] sm:$0xf]
      %v1005 = vld [vmem:[%s1 + $0x188] sm:$0xf]
      %v1006 = vld [vmem:[%s1 + $0x18c] sm:$0xf]
      %v1007 = vld [vmem:[%s1 + $0x190] sm:$0xf]
      %v1008 = vld [vmem:[%s1 + $0x194] sm:$0xf]
      %v1009 = vld [vmem:[%s1 + $0x198] sm:$0xf]
      %v1010 = vld [vmem:[%s1 + $0x19c] sm:$0xf]
      %v1011 = vld [vmem:[%s1 + $0x1a0] sm:$0xf]
      %v1012 = vld [vmem:[%s1 + $0x1a4] sm:$0xf]
      %v1013 = vld [vmem:[%s1 + $0x1a8] sm:$0xf]
      %v1014 = vld [vmem:[%s1 + $0x1ac] sm:$0xf]
      %v1015 = vld [vmem:[%s1 + $0x1b0] sm:$0xf]
      %v1016 = vld [vmem:[%s1 + $0x1b4] sm:$0xf]
      %v1017 = vld [vmem:[%s1 + $0x1b8] sm:$0xf]
      %v1018 = vld [vmem:[%s1 + $0x1bc] sm:$0xf]
      %v1019 = vld [vmem:[%s1 + $0x1c0] sm:$0xf]
      %v1020 = vld [vmem:[%s1 + $0x1c4] sm:$0xf]
      %v1021 = vld [vmem:[%s1 + $0x1c8] sm:$0xf]
      %v1022 = vld [vmem:[%s1 + $0x1cc] sm:$0xf]
      %v1023 = vld [vmem:[%s1 + $0x1d0] sm:$0xf]
      %v1024 = vld [vmem:[%s1 + $0x1d4] sm:$0xf]
      %v1025 = vld [vmem:[%s1 + $0x1d8] sm:$0xf]
      %v1026 = vld [vmem:[%s1 + $0x1dc] sm:$0xf]
      %v1027 = vld [vmem:[%s1 + $0x1e0] sm:$0xf]
      %v1028 = vld [vmem:[%s1 + $0x1e4] sm:$0xf]
      %v1029 = vld [vmem:[%s1 + $0x1e8] sm:$0xf]
      %v1030 = vld [vmem:[%s1 + $0x1ec] sm:$0xf]
      %v1031 = vld [vmem:[%s1 + $0x1f0] sm:$0xf]
      %v1032 = vld [vmem:[%s1 + $0x1f4] sm:$0xf]
      %v1033 = vld [vmem:[%s1 + $0x1f8] sm:$0xf]
      %v1034 = vld [vmem:[%s1 + $0x1fc] sm:$0xf]
      %v1035 = vld [vmem:[%s1 + $0x200] sm:$0xf]
      %v1036 = vld [vmem:[%s1 + $0x204] sm:$0xf]
      %v1037 = vld [vmem:[%s1 + $0x208] sm:$0xf]
      %v1038 = vld [vmem:[%s1 + $0x20c] sm:$0xf]
      %v1039 = vld [vmem:[%s1 + $0x210] sm:$0xf]
      %v1040 = vld [vmem:[%s1 + $0x214] sm:$0xf]
      %v1041 = vld [vmem:[%s1 + $0x218] sm:$0xf]
      %v1042 = vld [vmem:[%s1 + $0x21c] sm:$0xf]
      %v1043 = vld [vmem:[%s1 + $0x220] sm:$0xf]
      %v1044 = vld [vmem:[%s1 + $0x224] sm:$0xf]
      %v1045 = vld [vmem:[%s1 + $0x228] sm:$0xf]
      %v1046 = vld [vmem:[%s1 + $0x22c] sm:$0xf]
      %v1047 = vld [vmem:[%s1 + $0x230] sm:$0xf]
      %v1048 = vld [vmem:[%s1 + $0x234] sm:$0xf]
      %v1049 = vld [vmem:[%s1 + $0x238] sm:$0xf]
      %v1050 = vld [vmem:[%s1 + $0x23c] sm:$0xf]
      %v1195 = vunpack.c.l.b16 %v907
      %v1196 = vunpack.c.l.b16 %v908
      %v1197 = vunpack.c.l.b16 %v909
      %v1198 = vunpack.c.l.b16 %v910
      %v1199 = vunpack.c.l.b16 %v911
      %v1200 = vunpack.c.l.b16 %v912
      %v1201 = vunpack.c.l.b16 %v913
      %v1202 = vunpack.c.l.b16 %v914
      %v1203 = vunpack.c.l.b16 %v915
      %v1204 = vunpack.c.l.b16 %v916
      %v1205 = vunpack.c.l.b16 %v917
      %v1206 = vunpack.c.l.b16 %v918
      %v1207 = vunpack.c.l.b16 %v919
      %v1208 = vunpack.c.l.b16 %v920
      %v1209 = vunpack.c.l.b16 %v921
      %v1210 = vunpack.c.l.b16 %v922
      %v1211 = vunpack.c.l.b16 %v923
      %v1212 = vunpack.c.l.b16 %v924
      %v1213 = vunpack.c.l.b16 %v925
      %v1214 = vunpack.c.l.b16 %v926
      %v1215 = vunpack.c.l.b16 %v927
      %v1216 = vunpack.c.l.b16 %v928
      %v1217 = vunpack.c.l.b16 %v929
      %v1218 = vunpack.c.l.b16 %v930
      %v1219 = vunpack.c.l.b16 %v931
      %v1220 = vunpack.c.l.b16 %v932
      %v1221 = vunpack.c.l.b16 %v933
      %v1222 = vunpack.c.l.b16 %v934
      %v1223 = vunpack.c.l.b16 %v935
      %v1224 = vunpack.c.l.b16 %v936
      %v1225 = vunpack.c.l.b16 %v937
      %v1226 = vunpack.c.l.b16 %v938
      %v1227 = vunpack.c.l.b16 %v939
      %v1228 = vunpack.c.l.b16 %v940
      %v1229 = vunpack.c.l.b16 %v941
      %v1230 = vunpack.c.l.b16 %v942
      %v1231 = vunpack.c.l.b16 %v943
      %v1232 = vunpack.c.l.b16 %v944
      %v1233 = vunpack.c.l.b16 %v945
      %v1234 = vunpack.c.l.b16 %v946
      %v1235 = vunpack.c.l.b16 %v947
      %v1236 = vunpack.c.l.b16 %v948
      %v1237 = vunpack.c.l.b16 %v949
      %v1238 = vunpack.c.l.b16 %v950
      %v1239 = vunpack.c.l.b16 %v951
      %v1240 = vunpack.c.l.b16 %v952
      %v1241 = vunpack.c.l.b16 %v953
      %v1242 = vunpack.c.l.b16 %v954
      %v1243 = vunpack.c.l.b16 %v955
      %v1244 = vunpack.c.l.b16 %v956
      %v1245 = vunpack.c.l.b16 %v957
      %v1246 = vunpack.c.l.b16 %v958
      %v1247 = vunpack.c.l.b16 %v959
      %v1248 = vunpack.c.l.b16 %v960
      %v1249 = vunpack.c.l.b16 %v961
      %v1250 = vunpack.c.l.b16 %v962
      %v1251 = vunpack.c.l.b16 %v963
      %v1252 = vunpack.c.l.b16 %v964
      %v1253 = vunpack.c.l.b16 %v965
      %v1254 = vunpack.c.l.b16 %v966
      %v1255 = vunpack.c.l.b16 %v967
      %v1256 = vunpack.c.l.b16 %v968
      %v1257 = vunpack.c.l.b16 %v969
      %v1258 = vunpack.c.l.b16 %v970
      %v1259 = vunpack.c.l.b16 %v971
      %v1260 = vunpack.c.l.b16 %v972
      %v1261 = vunpack.c.l.b16 %v973
      %v1262 = vunpack.c.l.b16 %v974
      %v1263 = vunpack.c.l.b16 %v975
      %v1264 = vunpack.c.l.b16 %v976
      %v1265 = vunpack.c.l.b16 %v977
      %v1266 = vunpack.c.l.b16 %v978
      %v1267 = vunpack.c.l.b16 %v979
      %v1268 = vunpack.c.l.b16 %v980
      %v1269 = vunpack.c.l.b16 %v981
      %v1270 = vunpack.c.l.b16 %v982
      %v1271 = vunpack.c.l.b16 %v983
      %v1272 = vunpack.c.l.b16 %v984
      %v1273 = vunpack.c.l.b16 %v985
      %v1274 = vunpack.c.l.b16 %v986
      %v1275 = vunpack.c.l.b16 %v987
      %v1276 = vunpack.c.l.b16 %v988
      %v1277 = vunpack.c.l.b16 %v989
      %v1278 = vunpack.c.l.b16 %v990
      %v1279 = vunpack.c.l.b16 %v991
      %v1280 = vunpack.c.l.b16 %v992
      %v1281 = vunpack.c.l.b16 %v993
      %v1282 = vunpack.c.l.b16 %v994
      %v1283 = vunpack.c.l.b16 %v995
      %v1284 = vunpack.c.l.b16 %v996
      %v1285 = vunpack.c.l.b16 %v997
      %v1286 = vunpack.c.l.b16 %v998
      %v1287 = vunpack.c.l.b16 %v999
      %v1288 = vunpack.c.l.b16 %v1000
      %v1289 = vunpack.c.l.b16 %v1001
      %v1290 = vunpack.c.l.b16 %v1002
      %v1291 = vunpack.c.l.b16 %v1003
      %v1292 = vunpack.c.l.b16 %v1004
      %v1293 = vunpack.c.l.b16 %v1005
      %v1294 = vunpack.c.l.b16 %v1006
      %v1295 = vunpack.c.l.b16 %v1007
      %v1296 = vunpack.c.l.b16 %v1008
      %v1297 = vunpack.c.l.b16 %v1009
      %v1298 = vunpack.c.l.b16 %v1010
      %v1299 = vunpack.c.l.b16 %v1011
      %v1300 = vunpack.c.l.b16 %v1012
      %v1301 = vunpack.c.l.b16 %v1013
      %v1302 = vunpack.c.l.b16 %v1014
      %v1303 = vunpack.c.l.b16 %v1015
      %v1304 = vunpack.c.l.b16 %v1016
      %v1305 = vunpack.c.l.b16 %v1017
      %v1306 = vunpack.c.l.b16 %v1018
      %v1307 = vunpack.c.l.b16 %v1019
      %v1308 = vunpack.c.l.b16 %v1020
      %v1309 = vunpack.c.l.b16 %v1021
      %v1310 = vunpack.c.l.b16 %v1022
      %v1311 = vunpack.c.l.b16 %v1023
      %v1312 = vunpack.c.l.b16 %v1024
      %v1313 = vunpack.c.l.b16 %v1025
      %v1314 = vunpack.c.l.b16 %v1026
      %v1315 = vunpack.c.l.b16 %v1027
      %v1316 = vunpack.c.l.b16 %v1028
      %v1317 = vunpack.c.l.b16 %v1029
      %v1318 = vunpack.c.l.b16 %v1030
      %v1319 = vunpack.c.l.b16 %v1031
      %v1320 = vunpack.c.l.b16 %v1032
      %v1321 = vunpack.c.l.b16 %v1033
      %v1322 = vunpack.c.l.b16 %v1034
      %v1323 = vunpack.c.l.b16 %v1035
      %v1324 = vunpack.c.l.b16 %v1036
      %v1325 = vunpack.c.l.b16 %v1037
      %v1326 = vunpack.c.l.b16 %v1038
      %v1327 = vunpack.c.l.b16 %v1039
      %v1328 = vunpack.c.l.b16 %v1040
      %v1329 = vunpack.c.l.b16 %v1041
      %v1330 = vunpack.c.l.b16 %v1042
      %v1331 = vunpack.c.l.b16 %v1043
      %v1332 = vunpack.c.l.b16 %v1044
      %v1333 = vunpack.c.l.b16 %v1045
      %v1334 = vunpack.c.l.b16 %v1046
      %v1335 = vunpack.c.l.b16 %v1047
      %v1336 = vunpack.c.l.b16 %v1048
      %v1337 = vunpack.c.l.b16 %v1049
      %v1338 = vunpack.c.l.b16 %v1050
      %v1339 = vpack.c.b16 %v1196, %v1195
      %v1340 = vpack.c.b16 %v1198, %v1197
      %v1341 = vpack.c.b16 %v1200, %v1199
      %v1342 = vpack.c.b16 %v1202, %v1201
      %v1343 = vpack.c.b16 %v1204, %v1203
      %v1344 = vpack.c.b16 %v1206, %v1205
      %v1345 = vpack.c.b16 %v1208, %v1207
      %v1346 = vpack.c.b16 %v1210, %v1209
      %v1347 = vpack.c.b16 %v1212, %v1211
      %v1348 = vpack.c.b16 %v1214, %v1213
      %v1349 = vpack.c.b16 %v1216, %v1215
      %v1350 = vpack.c.b16 %v1218, %v1217
      %v1351 = vpack.c.b16 %v1220, %v1219
      %v1352 = vpack.c.b16 %v1222, %v1221
      %v1353 = vpack.c.b16 %v1224, %v1223
      %v1354 = vpack.c.b16 %v1226, %v1225
      %v1355 = vpack.c.b16 %v1228, %v1227
      %v1356 = vpack.c.b16 %v1230, %v1229
      %v1357 = vpack.c.b16 %v1232, %v1231
      %v1358 = vpack.c.b16 %v1234, %v1233
      %v1359 = vpack.c.b16 %v1236, %v1235
      %v1360 = vpack.c.b16 %v1238, %v1237
      %v1361 = vpack.c.b16 %v1240, %v1239
      %v1362 = vpack.c.b16 %v1242, %v1241
      %v1363 = vpack.c.b16 %v1244, %v1243
      %v1364 = vpack.c.b16 %v1246, %v1245
      %v1365 = vpack.c.b16 %v1248, %v1247
      %v1366 = vpack.c.b16 %v1250, %v1249
      %v1367 = vpack.c.b16 %v1252, %v1251
      %v1368 = vpack.c.b16 %v1254, %v1253
      %v1369 = vpack.c.b16 %v1256, %v1255
      %v1370 = vpack.c.b16 %v1258, %v1257
      %v1371 = vpack.c.b16 %v1260, %v1259
      %v1372 = vpack.c.b16 %v1262, %v1261
      %v1373 = vpack.c.b16 %v1264, %v1263
      %v1374 = vpack.c.b16 %v1266, %v1265
      %v1375 = vpack.c.b16 %v1268, %v1267
      %v1376 = vpack.c.b16 %v1270, %v1269
      %v1377 = vpack.c.b16 %v1272, %v1271
      %v1378 = vpack.c.b16 %v1274, %v1273
      %v1379 = vpack.c.b16 %v1276, %v1275
      %v1380 = vpack.c.b16 %v1278, %v1277
      %v1381 = vpack.c.b16 %v1280, %v1279
      %v1382 = vpack.c.b16 %v1282, %v1281
      %v1383 = vpack.c.b16 %v1284, %v1283
      %v1384 = vpack.c.b16 %v1286, %v1285
      %v1385 = vpack.c.b16 %v1288, %v1287
      %v1386 = vpack.c.b16 %v1290, %v1289
      %v1387 = vpack.c.b16 %v1292, %v1291
      %v1388 = vpack.c.b16 %v1294, %v1293
      %v1389 = vpack.c.b16 %v1296, %v1295
      %v1390 = vpack.c.b16 %v1298, %v1297
      %v1391 = vpack.c.b16 %v1300, %v1299
      %v1392 = vpack.c.b16 %v1302, %v1301
      %v1393 = vpack.c.b16 %v1304, %v1303
      %v1394 = vpack.c.b16 %v1306, %v1305
      %v1395 = vpack.c.b16 %v1308, %v1307
      %v1396 = vpack.c.b16 %v1310, %v1309
      %v1397 = vpack.c.b16 %v1312, %v1311
      %v1398 = vpack.c.b16 %v1314, %v1313
      %v1399 = vpack.c.b16 %v1316, %v1315
      %v1400 = vpack.c.b16 %v1318, %v1317
      %v1401 = vpack.c.b16 %v1320, %v1319
      %v1402 = vpack.c.b16 %v1322, %v1321
      %v1403 = vpack.c.b16 %v1324, %v1323
      %v1404 = vpack.c.b16 %v1326, %v1325
      %v1405 = vpack.c.b16 %v1328, %v1327
      %v1406 = vpack.c.b16 %v1330, %v1329
      %v1407 = vpack.c.b16 %v1332, %v1331
      %v1408 = vpack.c.b16 %v1334, %v1333
      %v1409 = vpack.c.b16 %v1336, %v1335
      %v1410 = vpack.c.b16 %v1338, %v1337
      %1483 = vmatpush.bf16.msra.mxu0 %v1346
      %1484 = vmatpush.bf16.msra.mxu0 %v1345
      %1485 = vmatpush.bf16.msra.mxu0 %v1344
      %1486 = vmatpush.bf16.msra.mxu0 %v1343
      %1487 = vmatpush.bf16.msra.mxu0 %v1342
      %1488 = vmatpush.bf16.msra.mxu0 %v1341
      %1489 = vmatpush.bf16.msra.mxu0 %v1340
      %1490 = vmatpush.bf16.msra.mxu0 %v1339
      %1491 = vmatmul.bf16.gmra.mxu0 %v548
      %v1492 = vpop.f32.mrf.mxu0
      %v1493 = vadd.f32 0.0, %v1492
      %v1494 = vpop.f32.mrf.mxu0
      %v1495 = vadd.f32 0.0, %v1494
      %1496 = vmatmul.bf16.gmra.mxu0 %v549
      %v1497 = vpop.f32.mrf.mxu0
      %v1498 = vadd.f32 0.0, %v1497
      %v1499 = vpop.f32.mrf.mxu0
      %v1500 = vadd.f32 0.0, %v1499
      %1501 = vmatmul.bf16.gmra.mxu0 %v550
      %v1502 = vpop.f32.mrf.mxu0
      %v1503 = vadd.f32 0.0, %v1502
      %v1504 = vpop.f32.mrf.mxu0
      %v1505 = vadd.f32 0.0, %v1504
      %1506 = vmatmul.bf16.gmra.mxu0 %v551
      %v1507 = vpop.f32.mrf.mxu0
      %v1508 = vadd.f32 0.0, %v1507
      %v1509 = vpop.f32.mrf.mxu0
      %v1510 = vadd.f32 0.0, %v1509
      %1511 = vmatmul.bf16.gmra.mxu0 %v552
      %v1512 = vpop.f32.mrf.mxu0
      %v1513 = vadd.f32 0.0, %v1512
      %v1514 = vpop.f32.mrf.mxu0
      %v1515 = vadd.f32 0.0, %v1514
      %1516 = vmatmul.bf16.gmra.mxu0 %v553
      %v1517 = vpop.f32.mrf.mxu0
      %v1518 = vadd.f32 0.0, %v1517
      %v1519 = vpop.f32.mrf.mxu0
      %v1520 = vadd.f32 0.0, %v1519
      %1521 = vmatmul.bf16.gmra.mxu0 %v554
      %v1522 = vpop.f32.mrf.mxu0
      %v1523 = vadd.f32 0.0, %v1522
      %v1524 = vpop.f32.mrf.mxu0
      %v1525 = vadd.f32 0.0, %v1524
      %1526 = vmatmul.bf16.gmra.mxu0 %v555
      %v1527 = vpop.f32.mrf.mxu0
      %v1528 = vadd.f32 0.0, %v1527
      %v1529 = vpop.f32.mrf.mxu0
      %v1530 = vadd.f32 0.0, %v1529
      %1531 = vmatmul.bf16.gmra.mxu0 %v556
      %v1532 = vpop.f32.mrf.mxu0
      %v1533 = vadd.f32 0.0, %v1532
      %v1534 = vpop.f32.mrf.mxu0
      %v1535 = vadd.f32 0.0, %v1534
      %1536 = vmatmul.bf16.gmra.mxu0 %v557
      %v1537 = vpop.f32.mrf.mxu0
      %v1538 = vadd.f32 0.0, %v1537
      %v1539 = vpop.f32.mrf.mxu0
      %v1540 = vadd.f32 0.0, %v1539
      %1541 = vmatmul.bf16.gmra.mxu0 %v558
      %v1542 = vpop.f32.mrf.mxu0
      %v1543 = vadd.f32 0.0, %v1542
      %v1544 = vpop.f32.mrf.mxu0
      %v1545 = vadd.f32 0.0, %v1544
      %1546 = vmatmul.bf16.gmra.mxu0 %v559
      %v1547 = vpop.f32.mrf.mxu0
      %v1548 = vadd.f32 0.0, %v1547
      %v1549 = vpop.f32.mrf.mxu0
      %v1550 = vadd.f32 0.0, %v1549
      %1551 = vmatmul.bf16.gmra.mxu0 %v560
      %v1552 = vpop.f32.mrf.mxu0
      %v1553 = vadd.f32 0.0, %v1552
      %v1554 = vpop.f32.mrf.mxu0
      %v1555 = vadd.f32 0.0, %v1554
      %1556 = vmatmul.bf16.gmra.mxu0 %v561
      %v1557 = vpop.f32.mrf.mxu0
      %v1558 = vadd.f32 0.0, %v1557
      %v1559 = vpop.f32.mrf.mxu0
      %v1560 = vadd.f32 0.0, %v1559
      %1561 = vmatmul.bf16.gmra.mxu0 %v562
      %v1562 = vpop.f32.mrf.mxu0
      %v1563 = vadd.f32 0.0, %v1562
      %v1564 = vpop.f32.mrf.mxu0
      %v1565 = vadd.f32 0.0, %v1564
      %1566 = vmatmul.bf16.gmra.mxu0 %v563
      %v1567 = vpop.f32.mrf.mxu0
      %v1568 = vadd.f32 0.0, %v1567
      %v1569 = vpop.f32.mrf.mxu0
      %v1570 = vadd.f32 0.0, %v1569
      %1571 = vdwg.mxu0
      %1572 = vmatpush.bf16.msra.mxu0 %v1354
      %1573 = vmatpush.bf16.msra.mxu0 %v1353
      %1574 = vmatpush.bf16.msra.mxu0 %v1352
      %1575 = vmatpush.bf16.msra.mxu0 %v1351
      %1576 = vmatpush.bf16.msra.mxu0 %v1350
      %1577 = vmatpush.bf16.msra.mxu0 %v1349
      %1578 = vmatpush.bf16.msra.mxu0 %v1348
      %1579 = vmatpush.bf16.msra.mxu0 %v1347
      %1580 = vmatmul.bf16.gmra.mxu0 %v594
      %v1581 = vpop.f32.mrf.mxu0
      %v1582 = vadd.f32 %v1493, %v1581
      %v1583 = vpop.f32.mrf.mxu0
      %v1584 = vadd.f32 %v1495, %v1583
      %1585 = vmatmul.bf16.gmra.mxu0 %v606
      %v1586 = vpop.f32.mrf.mxu0
      %v1587 = vadd.f32 %v1498, %v1586
      %v1588 = vpop.f32.mrf.mxu0
      %v1589 = vadd.f32 %v1500, %v1588
      %1590 = vmatmul.bf16.gmra.mxu0 %v618
      %v1591 = vpop.f32.mrf.mxu0
      %v1592 = vadd.f32 %v1503, %v1591
      %v1593 = vpop.f32.mrf.mxu0
      %v1594 = vadd.f32 %v1505, %v1593
      %1595 = vmatmul.bf16.gmra.mxu0 %v630
      %v1596 = vpop.f32.mrf.mxu0
      %v1597 = vadd.f32 %v1508, %v1596
      %v1598 = vpop.f32.mrf.mxu0
      %v1599 = vadd.f32 %v1510, %v1598
      %1600 = vmatmul.bf16.gmra.mxu0 %v642
      %v1601 = vpop.f32.mrf.mxu0
      %v1602 = vadd.f32 %v1513, %v1601
      %v1603 = vpop.f32.mrf.mxu0
      %v1604 = vadd.f32 %v1515, %v1603
      %1605 = vmatmul.bf16.gmra.mxu0 %v654
      %v1606 = vpop.f32.mrf.mxu0
      %v1607 = vadd.f32 %v1518, %v1606
      %v1608 = vpop.f32.mrf.mxu0
      %v1609 = vadd.f32 %v1520, %v1608
      %1610 = vmatmul.bf16.gmra.mxu0 %v666
      %v1611 = vpop.f32.mrf.mxu0
      %v1612 = vadd.f32 %v1523, %v1611
      %v1613 = vpop.f32.mrf.mxu0
      %v1614 = vadd.f32 %v1525, %v1613
      %1615 = vmatmul.bf16.gmra.mxu0 %v678
      %v1616 = vpop.f32.mrf.mxu0
      %v1617 = vadd.f32 %v1528, %v1616
      %v1618 = vpop.f32.mrf.mxu0
      %v1619 = vadd.f32 %v1530, %v1618
      %1620 = vmatmul.bf16.gmra.mxu0 %v690
      %v1621 = vpop.f32.mrf.mxu0
      %v1622 = vadd.f32 %v1533, %v1621
      %v1623 = vpop.f32.mrf.mxu0
      %v1624 = vadd.f32 %v1535, %v1623
      %1625 = vmatmul.bf16.gmra.mxu0 %v702
      %v1626 = vpop.f32.mrf.mxu0
      %v1627 = vadd.f32 %v1538, %v1626
      %v1628 = vpop.f32.mrf.mxu0
      %v1629 = vadd.f32 %v1540, %v1628
      %1630 = vmatmul.bf16.gmra.mxu0 %v714
      %v1631 = vpop.f32.mrf.mxu0
      %v1632 = vadd.f32 %v1543, %v1631
      %v1633 = vpop.f32.mrf.mxu0
      %v1634 = vadd.f32 %v1545, %v1633
      %1635 = vmatmul.bf16.gmra.mxu0 %v726
      %v1636 = vpop.f32.mrf.mxu0
      %v1637 = vadd.f32 %v1548, %v1636
      %v1638 = vpop.f32.mrf.mxu0
      %v1639 = vadd.f32 %v1550, %v1638
      %1640 = vmatmul.bf16.gmra.mxu0 %v738
      %v1641 = vpop.f32.mrf.mxu0
      %v1642 = vadd.f32 %v1553, %v1641
      %v1643 = vpop.f32.mrf.mxu0
      %v1644 = vadd.f32 %v1555, %v1643
      %1645 = vmatmul.bf16.gmra.mxu0 %v750
      %v1646 = vpop.f32.mrf.mxu0
      %v1647 = vadd.f32 %v1558, %v1646
      %v1648 = vpop.f32.mrf.mxu0
      %v1649 = vadd.f32 %v1560, %v1648
      %1650 = vmatmul.bf16.gmra.mxu0 %v762
      %v1651 = vpop.f32.mrf.mxu0
      %v1652 = vadd.f32 %v1563, %v1651
      %v1653 = vpop.f32.mrf.mxu0
      %v1654 = vadd.f32 %v1565, %v1653
      %1655 = vmatmul.bf16.gmra.mxu0 %v774
      %v1656 = vpop.f32.mrf.mxu0
      %v1657 = vadd.f32 %v1568, %v1656
      %v1658 = vpop.f32.mrf.mxu0
      %v1659 = vadd.f32 %v1570, %v1658
      %1660 = vdwg.mxu0
      %1661 = vmatpush.bf16.msra.mxu0 %v1362
      %1662 = vmatpush.bf16.msra.mxu0 %v1361
      %1663 = vmatpush.bf16.msra.mxu0 %v1360
      %1664 = vmatpush.bf16.msra.mxu0 %v1359
      %1665 = vmatpush.bf16.msra.mxu0 %v1358
      %1666 = vmatpush.bf16.msra.mxu0 %v1357
      %1667 = vmatpush.bf16.msra.mxu0 %v1356
      %1668 = vmatpush.bf16.msra.mxu0 %v1355
      %1669 = vmatmul.bf16.gmra.mxu0 %v826
      %v1670 = vpop.f32.mrf.mxu0
      %v1671 = vadd.f32 %v1582, %v1670
      %v1672 = vpop.f32.mrf.mxu0
      %v1673 = vadd.f32 %v1584, %v1672
      %1674 = vmatmul.bf16.gmra.mxu0 %v829
      %v1675 = vpop.f32.mrf.mxu0
      %v1676 = vadd.f32 %v1587, %v1675
      %v1677 = vpop.f32.mrf.mxu0
      %v1678 = vadd.f32 %v1589, %v1677
      %1679 = vmatmul.bf16.gmra.mxu0 %v832
      %v1680 = vpop.f32.mrf.mxu0
      %v1681 = vadd.f32 %v1592, %v1680
      %v1682 = vpop.f32.mrf.mxu0
      %v1683 = vadd.f32 %v1594, %v1682
      %1684 = vmatmul.bf16.gmra.mxu0 %v835
      %v1685 = vpop.f32.mrf.mxu0
      %v1686 = vadd.f32 %v1597, %v1685
      %v1687 = vpop.f32.mrf.mxu0
      %v1688 = vadd.f32 %v1599, %v1687
      %1689 = vmatmul.bf16.gmra.mxu0 %v838
      %v1690 = vpop.f32.mrf.mxu0
      %v1691 = vadd.f32 %v1602, %v1690
      %v1692 = vpop.f32.mrf.mxu0
      %v1693 = vadd.f32 %v1604, %v1692
      %1694 = vmatmul.bf16.gmra.mxu0 %v841
      %v1695 = vpop.f32.mrf.mxu0
      %v1696 = vadd.f32 %v1607, %v1695
      %v1697 = vpop.f32.mrf.mxu0
      %v1698 = vadd.f32 %v1609, %v1697
      %1699 = vmatmul.bf16.gmra.mxu0 %v844
      %v1700 = vpop.f32.mrf.mxu0
      %v1701 = vadd.f32 %v1612, %v1700
      %v1702 = vpop.f32.mrf.mxu0
      %v1703 = vadd.f32 %v1614, %v1702
      %1704 = vmatmul.bf16.gmra.mxu0 %v847
      %v1705 = vpop.f32.mrf.mxu0
      %v1706 = vadd.f32 %v1617, %v1705
      %v1707 = vpop.f32.mrf.mxu0
      %v1708 = vadd.f32 %v1619, %v1707
      %1709 = vmatmul.bf16.gmra.mxu0 %v850
      %v1710 = vpop.f32.mrf.mxu0
      %v1711 = vadd.f32 %v1622, %v1710
      %v1712 = vpop.f32.mrf.mxu0
      %v1713 = vadd.f32 %v1624, %v1712
      %1714 = vmatmul.bf16.gmra.mxu0 %v853
      %v1715 = vpop.f32.mrf.mxu0
      %v1716 = vadd.f32 %v1627, %v1715
      %v1717 = vpop.f32.mrf.mxu0
      %v1718 = vadd.f32 %v1629, %v1717
      %1719 = vmatmul.bf16.gmra.mxu0 %v856
      %v1720 = vpop.f32.mrf.mxu0
      %v1721 = vadd.f32 %v1632, %v1720
      %v1722 = vpop.f32.mrf.mxu0
      %v1723 = vadd.f32 %v1634, %v1722
      %1724 = vmatmul.bf16.gmra.mxu0 %v859
      %v1725 = vpop.f32.mrf.mxu0
      %v1726 = vadd.f32 %v1637, %v1725
      %v1727 = vpop.f32.mrf.mxu0
      %v1728 = vadd.f32 %v1639, %v1727
      %1729 = vmatmul.bf16.gmra.mxu0 %v862
      %v1730 = vpop.f32.mrf.mxu0
      %v1731 = vadd.f32 %v1642, %v1730
      %v1732 = vpop.f32.mrf.mxu0
      %v1733 = vadd.f32 %v1644, %v1732
      %1734 = vmatmul.bf16.gmra.mxu0 %v865
      %v1735 = vpop.f32.mrf.mxu0
      %v1736 = vadd.f32 %v1647, %v1735
      %v1737 = vpop.f32.mrf.mxu0
      %v1738 = vadd.f32 %v1649, %v1737
      %1739 = vmatmul.bf16.gmra.mxu0 %v868
      %v1740 = vpop.f32.mrf.mxu0
      %v1741 = vadd.f32 %v1652, %v1740
      %v1742 = vpop.f32.mrf.mxu0
      %v1743 = vadd.f32 %v1654, %v1742
      %1744 = vmatmul.bf16.gmra.mxu0 %v871
      %v1745 = vpop.f32.mrf.mxu0
      %v1746 = vadd.f32 %v1657, %v1745
      %v1747 = vpop.f32.mrf.mxu0
      %v1748 = vadd.f32 %v1659, %v1747
      %1749 = vdwg.mxu0
      %1750 = vmatpush.bf16.msra.mxu0 %v1370
      %1751 = vmatpush.bf16.msra.mxu0 %v1369
      %1752 = vmatpush.bf16.msra.mxu0 %v1368
      %1753 = vmatpush.bf16.msra.mxu0 %v1367
      %1754 = vmatpush.bf16.msra.mxu0 %v1366
      %1755 = vmatpush.bf16.msra.mxu0 %v1365
      %1756 = vmatpush.bf16.msra.mxu0 %v1364
      %1757 = vmatpush.bf16.msra.mxu0 %v1363
      %1758 = vmatmul.bf16.gmra.mxu0 %v549
      %v1759 = vpop.f32.mrf.mxu0
      %v1760 = vadd.f32 %v1671, %v1759
      %v1761 = vpop.f32.mrf.mxu0
      %v1762 = vadd.f32 %v1673, %v1761
      %1763 = vmatmul.bf16.gmra.mxu0 %v550
      %v1764 = vpop.f32.mrf.mxu0
      %v1765 = vadd.f32 %v1676, %v1764
      %v1766 = vpop.f32.mrf.mxu0
      %v1767 = vadd.f32 %v1678, %v1766
      %1768 = vmatmul.bf16.gmra.mxu0 %v551
      %v1769 = vpop.f32.mrf.mxu0
      %v1770 = vadd.f32 %v1681, %v1769
      %v1771 = vpop.f32.mrf.mxu0
      %v1772 = vadd.f32 %v1683, %v1771
      %1773 = vmatmul.bf16.gmra.mxu0 %v552
      %v1774 = vpop.f32.mrf.mxu0
      %v1775 = vadd.f32 %v1686, %v1774
      %v1776 = vpop.f32.mrf.mxu0
      %v1777 = vadd.f32 %v1688, %v1776
      %1778 = vmatmul.bf16.gmra.mxu0 %v553
      %v1779 = vpop.f32.mrf.mxu0
      %v1780 = vadd.f32 %v1691, %v1779
      %v1781 = vpop.f32.mrf.mxu0
      %v1782 = vadd.f32 %v1693, %v1781
      %1783 = vmatmul.bf16.gmra.mxu0 %v554
      %v1784 = vpop.f32.mrf.mxu0
      %v1785 = vadd.f32 %v1696, %v1784
      %v1786 = vpop.f32.mrf.mxu0
      %v1787 = vadd.f32 %v1698, %v1786
      %1788 = vmatmul.bf16.gmra.mxu0 %v555
      %v1789 = vpop.f32.mrf.mxu0
      %v1790 = vadd.f32 %v1701, %v1789
      %v1791 = vpop.f32.mrf.mxu0
      %v1792 = vadd.f32 %v1703, %v1791
      %1793 = vmatmul.bf16.gmra.mxu0 %v556
      %v1794 = vpop.f32.mrf.mxu0
      %v1795 = vadd.f32 %v1706, %v1794
      %v1796 = vpop.f32.mrf.mxu0
      %v1797 = vadd.f32 %v1708, %v1796
      %1798 = vmatmul.bf16.gmra.mxu0 %v557
      %v1799 = vpop.f32.mrf.mxu0
      %v1800 = vadd.f32 %v1711, %v1799
      %v1801 = vpop.f32.mrf.mxu0
      %v1802 = vadd.f32 %v1713, %v1801
      %1803 = vmatmul.bf16.gmra.mxu0 %v558
      %v1804 = vpop.f32.mrf.mxu0
      %v1805 = vadd.f32 %v1716, %v1804
      %v1806 = vpop.f32.mrf.mxu0
      %v1807 = vadd.f32 %v1718, %v1806
      %1808 = vmatmul.bf16.gmra.mxu0 %v559
      %v1809 = vpop.f32.mrf.mxu0
      %v1810 = vadd.f32 %v1721, %v1809
      %v1811 = vpop.f32.mrf.mxu0
      %v1812 = vadd.f32 %v1723, %v1811
      %1813 = vmatmul.bf16.gmra.mxu0 %v560
      %v1814 = vpop.f32.mrf.mxu0
      %v1815 = vadd.f32 %v1726, %v1814
      %v1816 = vpop.f32.mrf.mxu0
      %v1817 = vadd.f32 %v1728, %v1816
      %1818 = vmatmul.bf16.gmra.mxu0 %v561
      %v1819 = vpop.f32.mrf.mxu0
      %v1820 = vadd.f32 %v1731, %v1819
      %v1821 = vpop.f32.mrf.mxu0
      %v1822 = vadd.f32 %v1733, %v1821
      %1823 = vmatmul.bf16.gmra.mxu0 %v562
      %v1824 = vpop.f32.mrf.mxu0
      %v1825 = vadd.f32 %v1736, %v1824
      %v1826 = vpop.f32.mrf.mxu0
      %v1827 = vadd.f32 %v1738, %v1826
      %1828 = vmatmul.bf16.gmra.mxu0 %v563
      %v1829 = vpop.f32.mrf.mxu0
      %v1830 = vadd.f32 %v1741, %v1829
      %v1831 = vpop.f32.mrf.mxu0
      %v1832 = vadd.f32 %v1743, %v1831
      %1833 = vmatmul.bf16.gmra.mxu0 %v564
      %v1834 = vpop.f32.mrf.mxu0
      %v1835 = vadd.f32 %v1746, %v1834
      %v1836 = vpop.f32.mrf.mxu0
      %v1837 = vadd.f32 %v1748, %v1836
      %1838 = vdwg.mxu0
      %1839 = vmatpush.bf16.msra.mxu0 %v1378
      %1840 = vmatpush.bf16.msra.mxu0 %v1377
      %1841 = vmatpush.bf16.msra.mxu0 %v1376
      %1842 = vmatpush.bf16.msra.mxu0 %v1375
      %1843 = vmatpush.bf16.msra.mxu0 %v1374
      %1844 = vmatpush.bf16.msra.mxu0 %v1373
      %1845 = vmatpush.bf16.msra.mxu0 %v1372
      %1846 = vmatpush.bf16.msra.mxu0 %v1371
      %1847 = vmatmul.bf16.gmra.mxu0 %v606
      %v1848 = vpop.f32.mrf.mxu0
      %v1849 = vadd.f32 %v1760, %v1848
      %v1850 = vpop.f32.mrf.mxu0
      %v1851 = vadd.f32 %v1762, %v1850
      %1852 = vmatmul.bf16.gmra.mxu0 %v618
      %v1853 = vpop.f32.mrf.mxu0
      %v1854 = vadd.f32 %v1765, %v1853
      %v1855 = vpop.f32.mrf.mxu0
      %v1856 = vadd.f32 %v1767, %v1855
      %1857 = vmatmul.bf16.gmra.mxu0 %v630
      %v1858 = vpop.f32.mrf.mxu0
      %v1859 = vadd.f32 %v1770, %v1858
      %v1860 = vpop.f32.mrf.mxu0
      %v1861 = vadd.f32 %v1772, %v1860
      %1862 = vmatmul.bf16.gmra.mxu0 %v642
      %v1863 = vpop.f32.mrf.mxu0
      %v1864 = vadd.f32 %v1775, %v1863
      %v1865 = vpop.f32.mrf.mxu0
      %v1866 = vadd.f32 %v1777, %v1865
      %1867 = vmatmul.bf16.gmra.mxu0 %v654
      %v1868 = vpop.f32.mrf.mxu0
      %v1869 = vadd.f32 %v1780, %v1868
      %v1870 = vpop.f32.mrf.mxu0
      %v1871 = vadd.f32 %v1782, %v1870
      %1872 = vmatmul.bf16.gmra.mxu0 %v666
      %v1873 = vpop.f32.mrf.mxu0
      %v1874 = vadd.f32 %v1785, %v1873
      %v1875 = vpop.f32.mrf.mxu0
      %v1876 = vadd.f32 %v1787, %v1875
      %1877 = vmatmul.bf16.gmra.mxu0 %v678
      %v1878 = vpop.f32.mrf.mxu0
      %v1879 = vadd.f32 %v1790, %v1878
      %v1880 = vpop.f32.mrf.mxu0
      %v1881 = vadd.f32 %v1792, %v1880
      %1882 = vmatmul.bf16.gmra.mxu0 %v690
      %v1883 = vpop.f32.mrf.mxu0
      %v1884 = vadd.f32 %v1795, %v1883
      %v1885 = vpop.f32.mrf.mxu0
      %v1886 = vadd.f32 %v1797, %v1885
      %1887 = vmatmul.bf16.gmra.mxu0 %v702
      %v1888 = vpop.f32.mrf.mxu0
      %v1889 = vadd.f32 %v1800, %v1888
      %v1890 = vpop.f32.mrf.mxu0
      %v1891 = vadd.f32 %v1802, %v1890
      %1892 = vmatmul.bf16.gmra.mxu0 %v714
      %v1893 = vpop.f32.mrf.mxu0
      %v1894 = vadd.f32 %v1805, %v1893
      %v1895 = vpop.f32.mrf.mxu0
      %v1896 = vadd.f32 %v1807, %v1895
      %1897 = vmatmul.bf16.gmra.mxu0 %v726
      %v1898 = vpop.f32.mrf.mxu0
      %v1899 = vadd.f32 %v1810, %v1898
      %v1900 = vpop.f32.mrf.mxu0
      %v1901 = vadd.f32 %v1812, %v1900
      %1902 = vmatmul.bf16.gmra.mxu0 %v738
      %v1903 = vpop.f32.mrf.mxu0
      %v1904 = vadd.f32 %v1815, %v1903
      %v1905 = vpop.f32.mrf.mxu0
      %v1906 = vadd.f32 %v1817, %v1905
      %1907 = vmatmul.bf16.gmra.mxu0 %v750
      %v1908 = vpop.f32.mrf.mxu0
      %v1909 = vadd.f32 %v1820, %v1908
      %v1910 = vpop.f32.mrf.mxu0
      %v1911 = vadd.f32 %v1822, %v1910
      %1912 = vmatmul.bf16.gmra.mxu0 %v762
      %v1913 = vpop.f32.mrf.mxu0
      %v1914 = vadd.f32 %v1825, %v1913
      %v1915 = vpop.f32.mrf.mxu0
      %v1916 = vadd.f32 %v1827, %v1915
      %1917 = vmatmul.bf16.gmra.mxu0 %v774
      %v1918 = vpop.f32.mrf.mxu0
      %v1919 = vadd.f32 %v1830, %v1918
      %v1920 = vpop.f32.mrf.mxu0
      %v1921 = vadd.f32 %v1832, %v1920
      %1922 = vmatmul.bf16.gmra.mxu0 %v899
      %v1923 = vpop.f32.mrf.mxu0
      %v1924 = vadd.f32 %v1835, %v1923
      %v1925 = vpop.f32.mrf.mxu0
      %v1926 = vadd.f32 %v1837, %v1925
      %1927 = vdwg.mxu0
      %1928 = vmatpush.bf16.msra.mxu0 %v1386
      %1929 = vmatpush.bf16.msra.mxu0 %v1385
      %1930 = vmatpush.bf16.msra.mxu0 %v1384
      %1931 = vmatpush.bf16.msra.mxu0 %v1383
      %1932 = vmatpush.bf16.msra.mxu0 %v1382
      %1933 = vmatpush.bf16.msra.mxu0 %v1381
      %1934 = vmatpush.bf16.msra.mxu0 %v1380
      %1935 = vmatpush.bf16.msra.mxu0 %v1379
      %1936 = vmatmul.bf16.gmra.mxu0 %v829
      %v1937 = vpop.f32.mrf.mxu0
      %v1938 = vadd.f32 %v1849, %v1937
      %v1939 = vpop.f32.mrf.mxu0
      %v1940 = vadd.f32 %v1851, %v1939
      %1941 = vmatmul.bf16.gmra.mxu0 %v832
      %v1942 = vpop.f32.mrf.mxu0
      %v1943 = vadd.f32 %v1854, %v1942
      %v1944 = vpop.f32.mrf.mxu0
      %v1945 = vadd.f32 %v1856, %v1944
      %1946 = vmatmul.bf16.gmra.mxu0 %v835
      %v1947 = vpop.f32.mrf.mxu0
      %v1948 = vadd.f32 %v1859, %v1947
      %v1949 = vpop.f32.mrf.mxu0
      %v1950 = vadd.f32 %v1861, %v1949
      %1951 = vmatmul.bf16.gmra.mxu0 %v838
      %v1952 = vpop.f32.mrf.mxu0
      %v1953 = vadd.f32 %v1864, %v1952
      %v1954 = vpop.f32.mrf.mxu0
      %v1955 = vadd.f32 %v1866, %v1954
      %1956 = vmatmul.bf16.gmra.mxu0 %v841
      %v1957 = vpop.f32.mrf.mxu0
      %v1958 = vadd.f32 %v1869, %v1957
      %v1959 = vpop.f32.mrf.mxu0
      %v1960 = vadd.f32 %v1871, %v1959
      %1961 = vmatmul.bf16.gmra.mxu0 %v844
      %v1962 = vpop.f32.mrf.mxu0
      %v1963 = vadd.f32 %v1874, %v1962
      %v1964 = vpop.f32.mrf.mxu0
      %v1965 = vadd.f32 %v1876, %v1964
      %1966 = vmatmul.bf16.gmra.mxu0 %v847
      %v1967 = vpop.f32.mrf.mxu0
      %v1968 = vadd.f32 %v1879, %v1967
      %v1969 = vpop.f32.mrf.mxu0
      %v1970 = vadd.f32 %v1881, %v1969
      %1971 = vmatmul.bf16.gmra.mxu0 %v850
      %v1972 = vpop.f32.mrf.mxu0
      %v1973 = vadd.f32 %v1884, %v1972
      %v1974 = vpop.f32.mrf.mxu0
      %v1975 = vadd.f32 %v1886, %v1974
      %1976 = vmatmul.bf16.gmra.mxu0 %v853
      %v1977 = vpop.f32.mrf.mxu0
      %v1978 = vadd.f32 %v1889, %v1977
      %v1979 = vpop.f32.mrf.mxu0
      %v1980 = vadd.f32 %v1891, %v1979
      %1981 = vmatmul.bf16.gmra.mxu0 %v856
      %v1982 = vpop.f32.mrf.mxu0
      %v1983 = vadd.f32 %v1894, %v1982
      %v1984 = vpop.f32.mrf.mxu0
      %v1985 = vadd.f32 %v1896, %v1984
      %1986 = vmatmul.bf16.gmra.mxu0 %v859
      %v1987 = vpop.f32.mrf.mxu0
      %v1988 = vadd.f32 %v1899, %v1987
      %v1989 = vpop.f32.mrf.mxu0
      %v1990 = vadd.f32 %v1901, %v1989
      %1991 = vmatmul.bf16.gmra.mxu0 %v862
      %v1992 = vpop.f32.mrf.mxu0
      %v1993 = vadd.f32 %v1904, %v1992
      %v1994 = vpop.f32.mrf.mxu0
      %v1995 = vadd.f32 %v1906, %v1994
      %1996 = vmatmul.bf16.gmra.mxu0 %v865
      %v1997 = vpop.f32.mrf.mxu0
      %v1998 = vadd.f32 %v1909, %v1997
      %v1999 = vpop.f32.mrf.mxu0
      %v2000 = vadd.f32 %v1911, %v1999
      %2001 = vmatmul.bf16.gmra.mxu0 %v868
      %v2002 = vpop.f32.mrf.mxu0
      %v2003 = vadd.f32 %v1914, %v2002
      %v2004 = vpop.f32.mrf.mxu0
      %v2005 = vadd.f32 %v1916, %v2004
      %2006 = vmatmul.bf16.gmra.mxu0 %v871
      %v2007 = vpop.f32.mrf.mxu0
      %v2008 = vadd.f32 %v1919, %v2007
      %v2009 = vpop.f32.mrf.mxu0
      %v2010 = vadd.f32 %v1921, %v2009
      %2011 = vmatmul.bf16.gmra.mxu0 %v905
      %v2012 = vpop.f32.mrf.mxu0
      %v2013 = vadd.f32 %v1924, %v2012
      %v2014 = vpop.f32.mrf.mxu0
      %v2015 = vadd.f32 %v1926, %v2014
      %2016 = vdwg.mxu0
      %2017 = vmatpush.bf16.msra.mxu0 %v1394
      %2018 = vmatpush.bf16.msra.mxu0 %v1393
      %2019 = vmatpush.bf16.msra.mxu0 %v1392
      %2020 = vmatpush.bf16.msra.mxu0 %v1391
      %2021 = vmatpush.bf16.msra.mxu0 %v1390
      %2022 = vmatpush.bf16.msra.mxu0 %v1389
      %2023 = vmatpush.bf16.msra.mxu0 %v1388
      %2024 = vmatpush.bf16.msra.mxu0 %v1387
      %2025 = vmatmul.bf16.gmra.mxu0 %v550
      %v2026 = vpop.f32.mrf.mxu0
      %v2027 = vadd.f32 %v1938, %v2026
      %v2028 = vpop.f32.mrf.mxu0
      %v2029 = vadd.f32 %v1940, %v2028
      %2030 = vmatmul.bf16.gmra.mxu0 %v551
      %v2031 = vpop.f32.mrf.mxu0
      %v2032 = vadd.f32 %v1943, %v2031
      %v2033 = vpop.f32.mrf.mxu0
      %v2034 = vadd.f32 %v1945, %v2033
      %2035 = vmatmul.bf16.gmra.mxu0 %v552
      %v2036 = vpop.f32.mrf.mxu0
      %v2037 = vadd.f32 %v1948, %v2036
      %v2038 = vpop.f32.mrf.mxu0
      %v2039 = vadd.f32 %v1950, %v2038
      %2040 = vmatmul.bf16.gmra.mxu0 %v553
      %v2041 = vpop.f32.mrf.mxu0
      %v2042 = vadd.f32 %v1953, %v2041
      %v2043 = vpop.f32.mrf.mxu0
      %v2044 = vadd.f32 %v1955, %v2043
      %2045 = vmatmul.bf16.gmra.mxu0 %v554
      %v2046 = vpop.f32.mrf.mxu0
      %v2047 = vadd.f32 %v1958, %v2046
      %v2048 = vpop.f32.mrf.mxu0
      %v2049 = vadd.f32 %v1960, %v2048
      %2050 = vmatmul.bf16.gmra.mxu0 %v555
      %v2051 = vpop.f32.mrf.mxu0
      %v2052 = vadd.f32 %v1963, %v2051
      %v2053 = vpop.f32.mrf.mxu0
      %v2054 = vadd.f32 %v1965, %v2053
      %2055 = vmatmul.bf16.gmra.mxu0 %v556
      %v2056 = vpop.f32.mrf.mxu0
      %v2057 = vadd.f32 %v1968, %v2056
      %v2058 = vpop.f32.mrf.mxu0
      %v2059 = vadd.f32 %v1970, %v2058
      %2060 = vmatmul.bf16.gmra.mxu0 %v557
      %v2061 = vpop.f32.mrf.mxu0
      %v2062 = vadd.f32 %v1973, %v2061
      %v2063 = vpop.f32.mrf.mxu0
      %v2064 = vadd.f32 %v1975, %v2063
      %2065 = vmatmul.bf16.gmra.mxu0 %v558
      %v2066 = vpop.f32.mrf.mxu0
      %v2067 = vadd.f32 %v1978, %v2066
      %v2068 = vpop.f32.mrf.mxu0
      %v2069 = vadd.f32 %v1980, %v2068
      %2070 = vmatmul.bf16.gmra.mxu0 %v559
      %v2071 = vpop.f32.mrf.mxu0
      %v2072 = vadd.f32 %v1983, %v2071
      %v2073 = vpop.f32.mrf.mxu0
      %v2074 = vadd.f32 %v1985, %v2073
      %2075 = vmatmul.bf16.gmra.mxu0 %v560
      %v2076 = vpop.f32.mrf.mxu0
      %v2077 = vadd.f32 %v1988, %v2076
      %v2078 = vpop.f32.mrf.mxu0
      %v2079 = vadd.f32 %v1990, %v2078
      %2080 = vmatmul.bf16.gmra.mxu0 %v561
      %v2081 = vpop.f32.mrf.mxu0
      %v2082 = vadd.f32 %v1993, %v2081
      %v2083 = vpop.f32.mrf.mxu0
      %v2084 = vadd.f32 %v1995, %v2083
      %2085 = vmatmul.bf16.gmra.mxu0 %v562
      %v2086 = vpop.f32.mrf.mxu0
      %v2087 = vadd.f32 %v1998, %v2086
      %v2088 = vpop.f32.mrf.mxu0
      %v2089 = vadd.f32 %v2000, %v2088
      %2090 = vmatmul.bf16.gmra.mxu0 %v563
      %v2091 = vpop.f32.mrf.mxu0
      %v2092 = vadd.f32 %v2003, %v2091
      %v2093 = vpop.f32.mrf.mxu0
      %v2094 = vadd.f32 %v2005, %v2093
      %2095 = vmatmul.bf16.gmra.mxu0 %v564
      %v2096 = vpop.f32.mrf.mxu0
      %v2097 = vadd.f32 %v2008, %v2096
      %v2098 = vpop.f32.mrf.mxu0
      %v2099 = vadd.f32 %v2010, %v2098
      %2100 = vmatmul.bf16.gmra.mxu0 %v548
      %v2101 = vpop.f32.mrf.mxu0
      %v2102 = vadd.f32 %v2013, %v2101
      %v2103 = vpop.f32.mrf.mxu0
      %v2104 = vadd.f32 %v2015, %v2103
      %2105 = vdwg.mxu0
      %2106 = vmatpush.bf16.msra.mxu0 %v1402
      %2107 = vmatpush.bf16.msra.mxu0 %v1401
      %2108 = vmatpush.bf16.msra.mxu0 %v1400
      %2109 = vmatpush.bf16.msra.mxu0 %v1399
      %2110 = vmatpush.bf16.msra.mxu0 %v1398
      %2111 = vmatpush.bf16.msra.mxu0 %v1397
      %2112 = vmatpush.bf16.msra.mxu0 %v1396
      %2113 = vmatpush.bf16.msra.mxu0 %v1395
      %2114 = vmatmul.bf16.gmra.mxu0 %v618
      %v2115 = vpop.f32.mrf.mxu0
      %v2116 = vadd.f32 %v2027, %v2115
      %v2117 = vpop.f32.mrf.mxu0
      %v2118 = vadd.f32 %v2029, %v2117
      %2119 = vmatmul.bf16.gmra.mxu0 %v630
      %v2120 = vpop.f32.mrf.mxu0
      %v2121 = vadd.f32 %v2032, %v2120
      %v2122 = vpop.f32.mrf.mxu0
      %v2123 = vadd.f32 %v2034, %v2122
      %2124 = vmatmul.bf16.gmra.mxu0 %v642
      %v2125 = vpop.f32.mrf.mxu0
      %v2126 = vadd.f32 %v2037, %v2125
      %v2127 = vpop.f32.mrf.mxu0
      %v2128 = vadd.f32 %v2039, %v2127
      %2129 = vmatmul.bf16.gmra.mxu0 %v654
      %v2130 = vpop.f32.mrf.mxu0
      %v2131 = vadd.f32 %v2042, %v2130
      %v2132 = vpop.f32.mrf.mxu0
      %v2133 = vadd.f32 %v2044, %v2132
      %2134 = vmatmul.bf16.gmra.mxu0 %v666
      %v2135 = vpop.f32.mrf.mxu0
      %v2136 = vadd.f32 %v2047, %v2135
      %v2137 = vpop.f32.mrf.mxu0
      %v2138 = vadd.f32 %v2049, %v2137
      %2139 = vmatmul.bf16.gmra.mxu0 %v678
      %v2140 = vpop.f32.mrf.mxu0
      %v2141 = vadd.f32 %v2052, %v2140
      %v2142 = vpop.f32.mrf.mxu0
      %v2143 = vadd.f32 %v2054, %v2142
      %2144 = vmatmul.bf16.gmra.mxu0 %v690
      %v2145 = vpop.f32.mrf.mxu0
      %v2146 = vadd.f32 %v2057, %v2145
      %v2147 = vpop.f32.mrf.mxu0
      %v2148 = vadd.f32 %v2059, %v2147
      %2149 = vmatmul.bf16.gmra.mxu0 %v702
      %v2150 = vpop.f32.mrf.mxu0
      %v2151 = vadd.f32 %v2062, %v2150
      %v2152 = vpop.f32.mrf.mxu0
      %v2153 = vadd.f32 %v2064, %v2152
      %2154 = vmatmul.bf16.gmra.mxu0 %v714
      %v2155 = vpop.f32.mrf.mxu0
      %v2156 = vadd.f32 %v2067, %v2155
      %v2157 = vpop.f32.mrf.mxu0
      %v2158 = vadd.f32 %v2069, %v2157
      %2159 = vmatmul.bf16.gmra.mxu0 %v726
      %v2160 = vpop.f32.mrf.mxu0
      %v2161 = vadd.f32 %v2072, %v2160
      %v2162 = vpop.f32.mrf.mxu0
      %v2163 = vadd.f32 %v2074, %v2162
      %2164 = vmatmul.bf16.gmra.mxu0 %v738
      %v2165 = vpop.f32.mrf.mxu0
      %v2166 = vadd.f32 %v2077, %v2165
      %v2167 = vpop.f32.mrf.mxu0
      %v2168 = vadd.f32 %v2079, %v2167
      %2169 = vmatmul.bf16.gmra.mxu0 %v750
      %v2170 = vpop.f32.mrf.mxu0
      %v2171 = vadd.f32 %v2082, %v2170
      %v2172 = vpop.f32.mrf.mxu0
      %v2173 = vadd.f32 %v2084, %v2172
      %2174 = vmatmul.bf16.gmra.mxu0 %v762
      %v2175 = vpop.f32.mrf.mxu0
      %v2176 = vadd.f32 %v2087, %v2175
      %v2177 = vpop.f32.mrf.mxu0
      %v2178 = vadd.f32 %v2089, %v2177
      %2179 = vmatmul.bf16.gmra.mxu0 %v774
      %v2180 = vpop.f32.mrf.mxu0
      %v2181 = vadd.f32 %v2092, %v2180
      %v2182 = vpop.f32.mrf.mxu0
      %v2183 = vadd.f32 %v2094, %v2182
      %2184 = vmatmul.bf16.gmra.mxu0 %v899
      %v2185 = vpop.f32.mrf.mxu0
      %v2186 = vadd.f32 %v2097, %v2185
      %v2187 = vpop.f32.mrf.mxu0
      %v2188 = vadd.f32 %v2099, %v2187
      %2189 = vmatmul.bf16.gmra.mxu0 %v594
      %v2190 = vpop.f32.mrf.mxu0
      %v2191 = vadd.f32 %v2102, %v2190
      %v2192 = vpop.f32.mrf.mxu0
      %v2193 = vadd.f32 %v2104, %v2192
      %2194 = vdwg.mxu0
      %2195 = vmatpush.bf16.msra.mxu0 %v1410
      %2196 = vmatpush.bf16.msra.mxu0 %v1409
      %2197 = vmatpush.bf16.msra.mxu0 %v1408
      %2198 = vmatpush.bf16.msra.mxu0 %v1407
      %2199 = vmatpush.bf16.msra.mxu0 %v1406
      %2200 = vmatpush.bf16.msra.mxu0 %v1405
      %2201 = vmatpush.bf16.msra.mxu0 %v1404
      %2202 = vmatpush.bf16.msra.mxu0 %v1403
      %2203 = vmatmul.bf16.gmra.mxu0 %v832
      %v2204 = vpop.f32.mrf.mxu0
      %v2205 = vadd.f32 %v2116, %v2204
      %v2206 = vpop.f32.mrf.mxu0
      %v2207 = vadd.f32 %v2118, %v2206
      %2208 = vmatmul.bf16.gmra.mxu0 %v835
      %v2209 = vpop.f32.mrf.mxu0
      %v2210 = vadd.f32 %v2121, %v2209
      %v2211 = vpop.f32.mrf.mxu0
      %v2212 = vadd.f32 %v2123, %v2211
      %2213 = vmatmul.bf16.gmra.mxu0 %v838
      %v2214 = vpop.f32.mrf.mxu0
      %v2215 = vadd.f32 %v2126, %v2214
      %v2216 = vpop.f32.mrf.mxu0
      %v2217 = vadd.f32 %v2128, %v2216
      %2218 = vmatmul.bf16.gmra.mxu0 %v841
      %v2219 = vpop.f32.mrf.mxu0
      %v2220 = vadd.f32 %v2131, %v2219
      %v2221 = vpop.f32.mrf.mxu0
      %v2222 = vadd.f32 %v2133, %v2221
      %2223 = vmatmul.bf16.gmra.mxu0 %v844
      %v2224 = vpop.f32.mrf.mxu0
      %v2225 = vadd.f32 %v2136, %v2224
      %v2226 = vpop.f32.mrf.mxu0
      %v2227 = vadd.f32 %v2138, %v2226
      %2228 = vmatmul.bf16.gmra.mxu0 %v847
      %v2229 = vpop.f32.mrf.mxu0
      %v2230 = vadd.f32 %v2141, %v2229
      %v2231 = vpop.f32.mrf.mxu0
      %v2232 = vadd.f32 %v2143, %v2231
      %2233 = vmatmul.bf16.gmra.mxu0 %v850
      %v2234 = vpop.f32.mrf.mxu0
      %v2235 = vadd.f32 %v2146, %v2234
      %v2236 = vpop.f32.mrf.mxu0
      %v2237 = vadd.f32 %v2148, %v2236
      %2238 = vmatmul.bf16.gmra.mxu0 %v853
      %v2239 = vpop.f32.mrf.mxu0
      %v2240 = vadd.f32 %v2151, %v2239
      %v2241 = vpop.f32.mrf.mxu0
      %v2242 = vadd.f32 %v2153, %v2241
      %2243 = vmatmul.bf16.gmra.mxu0 %v856
      %v2244 = vpop.f32.mrf.mxu0
      %v2245 = vadd.f32 %v2156, %v2244
      %v2246 = vpop.f32.mrf.mxu0
      %v2247 = vadd.f32 %v2158, %v2246
      %2248 = vmatmul.bf16.gmra.mxu0 %v859
      %v2249 = vpop.f32.mrf.mxu0
      %v2250 = vadd.f32 %v2161, %v2249
      %v2251 = vpop.f32.mrf.mxu0
      %v2252 = vadd.f32 %v2163, %v2251
      %2253 = vmatmul.bf16.gmra.mxu0 %v862
      %v2254 = vpop.f32.mrf.mxu0
      %v2255 = vadd.f32 %v2166, %v2254
      %v2256 = vpop.f32.mrf.mxu0
      %v2257 = vadd.f32 %v2168, %v2256
      %2258 = vmatmul.bf16.gmra.mxu0 %v865
      %v2259 = vpop.f32.mrf.mxu0
      %v2260 = vadd.f32 %v2171, %v2259
      %v2261 = vpop.f32.mrf.mxu0
      %v2262 = vadd.f32 %v2173, %v2261
      %2263 = vmatmul.bf16.gmra.mxu0 %v868
      %v2264 = vpop.f32.mrf.mxu0
      %v2265 = vadd.f32 %v2176, %v2264
      %v2266 = vpop.f32.mrf.mxu0
      %v2267 = vadd.f32 %v2178, %v2266
      %2268 = vmatmul.bf16.gmra.mxu0 %v871
      %v2269 = vpop.f32.mrf.mxu0
      %v2270 = vadd.f32 %v2181, %v2269
      %v2271 = vpop.f32.mrf.mxu0
      %v2272 = vadd.f32 %v2183, %v2271
      %2273 = vmatmul.bf16.gmra.mxu0 %v905
      %v2274 = vpop.f32.mrf.mxu0
      %v2275 = vadd.f32 %v2186, %v2274
      %v2276 = vpop.f32.mrf.mxu0
      %v2277 = vadd.f32 %v2188, %v2276
      %2278 = vmatmul.bf16.gmra.mxu0 %v826
      %v2279 = vpop.f32.mrf.mxu0
      %v2280 = vadd.f32 %v2191, %v2279
      %v2281 = vpop.f32.mrf.mxu0
      %v2282 = vadd.f32 %v2193, %v2281
      %2283 = vdwg.mxu0
      %v2284 = vld [vmem:[%s2] sm:$0x1]
      %v2286 = vperm.slane %v2284, 0
      %v2288 = vmul.f32 %v2205, %v2286
      %v2289 = vmul.f32 %v2207, %v2286
      %v2290 = vmul.f32 %v2210, %v2286
      %v2291 = vmul.f32 %v2212, %v2286
      %v2292 = vmul.f32 %v2215, %v2286
      %v2293 = vmul.f32 %v2217, %v2286
      %v2294 = vmul.f32 %v2220, %v2286
      %v2295 = vmul.f32 %v2222, %v2286
      %v2296 = vmul.f32 %v2225, %v2286
      %v2297 = vmul.f32 %v2227, %v2286
      %v2298 = vmul.f32 %v2230, %v2286
      %v2299 = vmul.f32 %v2232, %v2286
      %v2300 = vmul.f32 %v2235, %v2286
      %v2301 = vmul.f32 %v2237, %v2286
      %v2302 = vmul.f32 %v2240, %v2286
      %v2303 = vmul.f32 %v2242, %v2286
      %v2304 = vmul.f32 %v2245, %v2286
      %v2305 = vmul.f32 %v2247, %v2286
      %v2306 = vmul.f32 %v2250, %v2286
      %v2307 = vmul.f32 %v2252, %v2286
      %v2308 = vmul.f32 %v2255, %v2286
      %v2309 = vmul.f32 %v2257, %v2286
      %v2310 = vmul.f32 %v2260, %v2286
      %v2311 = vmul.f32 %v2262, %v2286
      %v2312 = vmul.f32 %v2265, %v2286
      %v2313 = vmul.f32 %v2267, %v2286
      %v2314 = vmul.f32 %v2270, %v2286
      %v2315 = vmul.f32 %v2272, %v2286
      %v2316 = vmul.f32 %v2275, %v2286
      %v2317 = vmul.f32 %v2277, %v2286
      %v2318 = vmul.f32 %v2280, %v2286
      %v2319 = vmul.f32 %v2282, %v2286
      %v2320 = vld [vmem:[%s3] sm:$0x1]
      %v2322 = vperm.slane %v2320, 0
      %v2324 = vadd.f32 %v2288, %v2322
      %v2325 = vadd.f32 %v2289, %v2322
      %v2326 = vadd.f32 %v2290, %v2322
      %v2327 = vadd.f32 %v2291, %v2322
      %v2328 = vadd.f32 %v2292, %v2322
      %v2329 = vadd.f32 %v2293, %v2322
      %v2330 = vadd.f32 %v2294, %v2322
      %v2331 = vadd.f32 %v2295, %v2322
      %v2332 = vadd.f32 %v2296, %v2322
      %v2333 = vadd.f32 %v2297, %v2322
      %v2334 = vadd.f32 %v2298, %v2322
      %v2335 = vadd.f32 %v2299, %v2322
      %v2336 = vadd.f32 %v2300, %v2322
      %v2337 = vadd.f32 %v2301, %v2322
      %v2338 = vadd.f32 %v2302, %v2322
      %v2339 = vadd.f32 %v2303, %v2322
      %v2340 = vadd.f32 %v2304, %v2322
      %v2341 = vadd.f32 %v2305, %v2322
      %v2342 = vadd.f32 %v2306, %v2322
      %v2343 = vadd.f32 %v2307, %v2322
      %v2344 = vadd.f32 %v2308, %v2322
      %v2345 = vadd.f32 %v2309, %v2322
      %v2346 = vadd.f32 %v2310, %v2322
      %v2347 = vadd.f32 %v2311, %v2322
      %v2348 = vadd.f32 %v2312, %v2322
      %v2349 = vadd.f32 %v2313, %v2322
      %v2350 = vadd.f32 %v2314, %v2322
      %v2351 = vadd.f32 %v2315, %v2322
      %v2352 = vadd.f32 %v2316, %v2322
      %v2353 = vadd.f32 %v2317, %v2322
      %v2354 = vadd.f32 %v2318, %v2322
      %v2355 = vadd.f32 %v2319, %v2322
      %v2356 = vmax.f32 %v2324, 0.0
      %v2357 = vmax.f32 %v2325, 0.0
      %v2358 = vmax.f32 %v2326, 0.0
      %v2359 = vmax.f32 %v2327, 0.0
      %v2360 = vmax.f32 %v2328, 0.0
      %v2361 = vmax.f32 %v2329, 0.0
      %v2362 = vmax.f32 %v2330, 0.0
      %v2363 = vmax.f32 %v2331, 0.0
      %v2364 = vmax.f32 %v2332, 0.0
      %v2365 = vmax.f32 %v2333, 0.0
      %v2366 = vmax.f32 %v2334, 0.0
      %v2367 = vmax.f32 %v2335, 0.0
      %v2368 = vmax.f32 %v2336, 0.0
      %v2369 = vmax.f32 %v2337, 0.0
      %v2370 = vmax.f32 %v2338, 0.0
      %v2371 = vmax.f32 %v2339, 0.0
      %v2372 = vmax.f32 %v2340, 0.0
      %v2373 = vmax.f32 %v2341, 0.0
      %v2374 = vmax.f32 %v2342, 0.0
      %v2375 = vmax.f32 %v2343, 0.0
      %v2376 = vmax.f32 %v2344, 0.0
      %v2377 = vmax.f32 %v2345, 0.0
      %v2378 = vmax.f32 %v2346, 0.0
      %v2379 = vmax.f32 %v2347, 0.0
      %v2380 = vmax.f32 %v2348, 0.0
      %v2381 = vmax.f32 %v2349, 0.0
      %v2382 = vmax.f32 %v2350, 0.0
      %v2383 = vmax.f32 %v2351, 0.0
      %v2384 = vmax.f32 %v2352, 0.0
      %v2385 = vmax.f32 %v2353, 0.0
      %v2386 = vmax.f32 %v2354, 0.0
      %v2387 = vmax.f32 %v2355, 0.0
      %v2388 = vpack.c.bf16 %v2356, %v2356
      %v2389 = vpack.c.bf16 %v2357, %v2357
      %v2390 = vpack.c.bf16 %v2358, %v2358
      %v2391 = vpack.c.bf16 %v2359, %v2359
      %v2392 = vpack.c.bf16 %v2360, %v2360
      %v2393 = vpack.c.bf16 %v2361, %v2361
      %v2394 = vpack.c.bf16 %v2362, %v2362
      %v2395 = vpack.c.bf16 %v2363, %v2363
      %v2396 = vpack.c.bf16 %v2364, %v2364
      %v2397 = vpack.c.bf16 %v2365, %v2365
      %v2398 = vpack.c.bf16 %v2366, %v2366
      %v2399 = vpack.c.bf16 %v2367, %v2367
      %v2400 = vpack.c.bf16 %v2368, %v2368
      %v2401 = vpack.c.bf16 %v2369, %v2369
      %v2402 = vpack.c.bf16 %v2370, %v2370
      %v2403 = vpack.c.bf16 %v2371, %v2371
      %v2404 = vpack.c.bf16 %v2372, %v2372
      %v2405 = vpack.c.bf16 %v2373, %v2373
      %v2406 = vpack.c.bf16 %v2374, %v2374
      %v2407 = vpack.c.bf16 %v2375, %v2375
      %v2408 = vpack.c.bf16 %v2376, %v2376
      %v2409 = vpack.c.bf16 %v2377, %v2377
      %v2410 = vpack.c.bf16 %v2378, %v2378
      %v2411 = vpack.c.bf16 %v2379, %v2379
      %v2412 = vpack.c.bf16 %v2380, %v2380
      %v2413 = vpack.c.bf16 %v2381, %v2381
      %v2414 = vpack.c.bf16 %v2382, %v2382
      %v2415 = vpack.c.bf16 %v2383, %v2383
      %v2416 = vpack.c.bf16 %v2384, %v2384
      %v2417 = vpack.c.bf16 %v2385, %v2385
      %v2418 = vpack.c.bf16 %v2386, %v2386
      %v2419 = vpack.c.bf16 %v2387, %v2387
      %v2452 = vunpack.c.l.b16 %v2388
      %v2453 = vunpack.c.l.b16 %v2389
      %v2454 = vunpack.c.l.b16 %v2390
      %v2455 = vunpack.c.l.b16 %v2391
      %v2456 = vunpack.c.l.b16 %v2392
      %v2457 = vunpack.c.l.b16 %v2393
      %v2458 = vunpack.c.l.b16 %v2394
      %v2459 = vunpack.c.l.b16 %v2395
      %v2460 = vunpack.c.l.b16 %v2396
      %v2461 = vunpack.c.l.b16 %v2397
      %v2462 = vunpack.c.l.b16 %v2398
      %v2463 = vunpack.c.l.b16 %v2399
      %v2464 = vunpack.c.l.b16 %v2400
      %v2465 = vunpack.c.l.b16 %v2401
      %v2466 = vunpack.c.l.b16 %v2402
      %v2467 = vunpack.c.l.b16 %v2403
      %v2468 = vunpack.c.l.b16 %v2404
      %v2469 = vunpack.c.l.b16 %v2405
      %v2470 = vunpack.c.l.b16 %v2406
      %v2471 = vunpack.c.l.b16 %v2407
      %v2472 = vunpack.c.l.b16 %v2408
      %v2473 = vunpack.c.l.b16 %v2409
      %v2474 = vunpack.c.l.b16 %v2410
      %v2475 = vunpack.c.l.b16 %v2411
      %v2476 = vunpack.c.l.b16 %v2412
      %v2477 = vunpack.c.l.b16 %v2413
      %v2478 = vunpack.c.l.b16 %v2414
      %v2479 = vunpack.c.l.b16 %v2415
      %v2480 = vunpack.c.l.b16 %v2416
      %v2481 = vunpack.c.l.b16 %v2417
      %v2482 = vunpack.c.l.b16 %v2418
      %v2483 = vunpack.c.l.b16 %v2419
      %v2484 = vpack.c.b16 %v2453, %v2452
      %v2485 = vpack.c.b16 %v2455, %v2454
      %v2486 = vpack.c.b16 %v2457, %v2456
      %v2487 = vpack.c.b16 %v2459, %v2458
      %v2488 = vpack.c.b16 %v2461, %v2460
      %v2489 = vpack.c.b16 %v2463, %v2462
      %v2490 = vpack.c.b16 %v2465, %v2464
      %v2491 = vpack.c.b16 %v2467, %v2466
      %v2492 = vpack.c.b16 %v2469, %v2468
      %v2493 = vpack.c.b16 %v2471, %v2470
      %v2494 = vpack.c.b16 %v2473, %v2472
      %v2495 = vpack.c.b16 %v2475, %v2474
      %v2496 = vpack.c.b16 %v2477, %v2476
      %v2497 = vpack.c.b16 %v2479, %v2478
      %v2498 = vpack.c.b16 %v2481, %v2480
      %v2499 = vpack.c.b16 %v2483, %v2482
      %v2501 = vshrl.u32 %v2484, 16
      %v2503 = vrot.slane %v2501, 7
      %v2504 = vshll.u32 %v2484, 16
      %v2506 = vor.u32 %v2503, %v2504
      %v2508 = vshrl.u32 %v2485, 16
      %v2510 = vrot.slane %v2508, 7
      %v2511 = vshll.u32 %v2485, 16
      %v2513 = vor.u32 %v2510, %v2511
      %v2515 = vshrl.u32 %v2486, 16
      %v2517 = vrot.slane %v2515, 7
      %v2518 = vshll.u32 %v2486, 16
      %v2520 = vor.u32 %v2517, %v2518
      %v2522 = vshrl.u32 %v2487, 16
      %v2524 = vrot.slane %v2522, 7
      %v2525 = vshll.u32 %v2487, 16
      %v2527 = vor.u32 %v2524, %v2525
      %v2529 = vshrl.u32 %v2488, 16
      %v2531 = vrot.slane %v2529, 7
      %v2532 = vshll.u32 %v2488, 16
      %v2534 = vor.u32 %v2531, %v2532
      %v2536 = vshrl.u32 %v2489, 16
      %v2538 = vrot.slane %v2536, 7
      %v2539 = vshll.u32 %v2489, 16
      %v2541 = vor.u32 %v2538, %v2539
      %v2543 = vshrl.u32 %v2490, 16
      %v2545 = vrot.slane %v2543, 7
      %v2546 = vshll.u32 %v2490, 16
      %v2548 = vor.u32 %v2545, %v2546
      %v2550 = vshrl.u32 %v2491, 16
      %v2552 = vrot.slane %v2550, 7
      %v2553 = vshll.u32 %v2491, 16
      %v2555 = vor.u32 %v2552, %v2553
      %v2557 = vshrl.u32 %v2492, 16
      %v2559 = vrot.slane %v2557, 7
      %v2560 = vshll.u32 %v2492, 16
      %v2562 = vor.u32 %v2559, %v2560
      %v2564 = vshrl.u32 %v2493, 16
      %v2566 = vrot.slane %v2564, 7
      %v2567 = vshll.u32 %v2493, 16
      %v2569 = vor.u32 %v2566, %v2567
      %v2571 = vshrl.u32 %v2494, 16
      %v2573 = vrot.slane %v2571, 7
      %v2574 = vshll.u32 %v2494, 16
      %v2576 = vor.u32 %v2573, %v2574
      %v2578 = vshrl.u32 %v2495, 16
      %v2580 = vrot.slane %v2578, 7
      %v2581 = vshll.u32 %v2495, 16
      %v2583 = vor.u32 %v2580, %v2581
      %v2585 = vshrl.u32 %v2496, 16
      %v2587 = vrot.slane %v2585, 7
      %v2588 = vshll.u32 %v2496, 16
      %v2590 = vor.u32 %v2587, %v2588
      %v2592 = vshrl.u32 %v2497, 16
      %v2594 = vrot.slane %v2592, 7
      %v2595 = vshll.u32 %v2497, 16
      %v2597 = vor.u32 %v2594, %v2595
      %v2599 = vshrl.u32 %v2498, 16
      %v2601 = vrot.slane %v2599, 7
      %v2602 = vshll.u32 %v2498, 16
      %v2604 = vor.u32 %v2601, %v2602
      %v2606 = vshrl.u32 %v2499, 16
      %v2608 = vrot.slane %v2606, 7
      %v2609 = vshll.u32 %v2499, 16
      %v2611 = vor.u32 %v2608, %v2609
      %v2644 = vsel %vm547, 0, %v2506
      %v2645 = vsel %vm547, 0, %v2513
      %v2646 = vsel %vm547, 0, %v2520
      %v2647 = vsel %vm547, 0, %v2527
      %v2648 = vsel %vm547, 0, %v2534
      %v2649 = vsel %vm547, 0, %v2541
      %v2650 = vsel %vm547, 0, %v2548
      %v2651 = vsel %vm547, 0, %v2555
      %v2652 = vsel %vm547, 0, %v2562
      %v2653 = vsel %vm547, 0, %v2569
      %v2654 = vsel %vm547, 0, %v2576
      %v2655 = vsel %vm547, 0, %v2583
      %v2656 = vsel %vm547, 0, %v2590
      %v2657 = vsel %vm547, 0, %v2597
      %v2658 = vsel %vm547, 0, %v2604
      %v2659 = vsel %vm547, 0, %v2611
      %v2660 = vsel %vm547, %v2503, 0
      %v2661 = vsel %vm547, %v2510, 0
      %v2662 = vsel %vm547, %v2517, 0
      %v2663 = vsel %vm547, %v2524, 0
      %v2664 = vsel %vm547, %v2531, 0
      %v2665 = vsel %vm547, %v2538, 0
      %v2666 = vsel %vm547, %v2545, 0
      %v2667 = vsel %vm547, %v2552, 0
      %v2668 = vsel %vm547, %v2559, 0
      %v2669 = vsel %vm547, %v2566, 0
      %v2670 = vsel %vm547, %v2573, 0
      %v2671 = vsel %vm547, %v2580, 0
      %v2672 = vsel %vm547, %v2587, 0
      %v2673 = vsel %vm547, %v2594, 0
      %v2674 = vsel %vm547, %v2601, 0
      %v2675 = vsel %vm547, %v2608, 0
      %v2677 = vshrl.u32 %v2644, 16
      %v2679 = vshll.u32 %v2644, 16
      %v2681 = vrot.slane %v2679, 1
      %v2682 = vor.u32 %v2677, %v2681
      %v2684 = vshll.u32 %v2660, 16
      %v2686 = vrot.slane %v2684, 1
      %v2687 = vsel %vm582, %v2682, %v2686
      %v2689 = vshrl.u32 %v2645, 16
      %v2691 = vshll.u32 %v2645, 16
      %v2693 = vrot.slane %v2691, 1
      %v2694 = vor.u32 %v2689, %v2693
      %v2696 = vshll.u32 %v2661, 16
      %v2698 = vrot.slane %v2696, 1
      %v2699 = vsel %vm582, %v2694, %v2698
      %v2701 = vshrl.u32 %v2646, 16
      %v2703 = vshll.u32 %v2646, 16
      %v2705 = vrot.slane %v2703, 1
      %v2706 = vor.u32 %v2701, %v2705
      %v2708 = vshll.u32 %v2662, 16
      %v2710 = vrot.slane %v2708, 1
      %v2711 = vsel %vm582, %v2706, %v2710
      %v2713 = vshrl.u32 %v2647, 16
      %v2715 = vshll.u32 %v2647, 16
      %v2717 = vrot.slane %v2715, 1
      %v2718 = vor.u32 %v2713, %v2717
      %v2720 = vshll.u32 %v2663, 16
      %v2722 = vrot.slane %v2720, 1
      %v2723 = vsel %vm582, %v2718, %v2722
      %v2725 = vshrl.u32 %v2648, 16
      %v2727 = vshll.u32 %v2648, 16
      %v2729 = vrot.slane %v2727, 1
      %v2730 = vor.u32 %v2725, %v2729
      %v2732 = vshll.u32 %v2664, 16
      %v2734 = vrot.slane %v2732, 1
      %v2735 = vsel %vm582, %v2730, %v2734
      %v2737 = vshrl.u32 %v2649, 16
      %v2739 = vshll.u32 %v2649, 16
      %v2741 = vrot.slane %v2739, 1
      %v2742 = vor.u32 %v2737, %v2741
      %v2744 = vshll.u32 %v2665, 16
      %v2746 = vrot.slane %v2744, 1
      %v2747 = vsel %vm582, %v2742, %v2746
      %v2749 = vshrl.u32 %v2650, 16
      %v2751 = vshll.u32 %v2650, 16
      %v2753 = vrot.slane %v2751, 1
      %v2754 = vor.u32 %v2749, %v2753
      %v2756 = vshll.u32 %v2666, 16
      %v2758 = vrot.slane %v2756, 1
      %v2759 = vsel %vm582, %v2754, %v2758
      %v2761 = vshrl.u32 %v2651, 16
      %v2763 = vshll.u32 %v2651, 16
      %v2765 = vrot.slane %v2763, 1
      %v2766 = vor.u32 %v2761, %v2765
      %v2768 = vshll.u32 %v2667, 16
      %v2770 = vrot.slane %v2768, 1
      %v2771 = vsel %vm582, %v2766, %v2770
      %v2773 = vshrl.u32 %v2652, 16
      %v2775 = vshll.u32 %v2652, 16
      %v2777 = vrot.slane %v2775, 1
      %v2778 = vor.u32 %v2773, %v2777
      %v2780 = vshll.u32 %v2668, 16
      %v2782 = vrot.slane %v2780, 1
      %v2783 = vsel %vm582, %v2778, %v2782
      %v2785 = vshrl.u32 %v2653, 16
      %v2787 = vshll.u32 %v2653, 16
      %v2789 = vrot.slane %v2787, 1
      %v2790 = vor.u32 %v2785, %v2789
      %v2792 = vshll.u32 %v2669, 16
      %v2794 = vrot.slane %v2792, 1
      %v2795 = vsel %vm582, %v2790, %v2794
      %v2797 = vshrl.u32 %v2654, 16
      %v2799 = vshll.u32 %v2654, 16
      %v2801 = vrot.slane %v2799, 1
      %v2802 = vor.u32 %v2797, %v2801
      %v2804 = vshll.u32 %v2670, 16
      %v2806 = vrot.slane %v2804, 1
      %v2807 = vsel %vm582, %v2802, %v2806
      %v2809 = vshrl.u32 %v2655, 16
      %v2811 = vshll.u32 %v2655, 16
      %v2813 = vrot.slane %v2811, 1
      %v2814 = vor.u32 %v2809, %v2813
      %v2816 = vshll.u32 %v2671, 16
      %v2818 = vrot.slane %v2816, 1
      %v2819 = vsel %vm582, %v2814, %v2818
      %v2821 = vshrl.u32 %v2656, 16
      %v2823 = vshll.u32 %v2656, 16
      %v2825 = vrot.slane %v2823, 1
      %v2826 = vor.u32 %v2821, %v2825
      %v2828 = vshll.u32 %v2672, 16
      %v2830 = vrot.slane %v2828, 1
      %v2831 = vsel %vm582, %v2826, %v2830
      %v2833 = vshrl.u32 %v2657, 16
      %v2835 = vshll.u32 %v2657, 16
      %v2837 = vrot.slane %v2835, 1
      %v2838 = vor.u32 %v2833, %v2837
      %v2840 = vshll.u32 %v2673, 16
      %v2842 = vrot.slane %v2840, 1
      %v2843 = vsel %vm582, %v2838, %v2842
      %v2845 = vshrl.u32 %v2658, 16
      %v2847 = vshll.u32 %v2658, 16
      %v2849 = vrot.slane %v2847, 1
      %v2850 = vor.u32 %v2845, %v2849
      %v2852 = vshll.u32 %v2674, 16
      %v2854 = vrot.slane %v2852, 1
      %v2855 = vsel %vm582, %v2850, %v2854
      %v2901 = vrot.slane %v2644, 1
      %v2902 = vrot.slane %v2660, 1
      %v2903 = vsel %vm823, %v2901, %v2902
      %v2904 = vrot.slane %v2645, 1
      %v2905 = vrot.slane %v2661, 1
      %v2906 = vsel %vm823, %v2904, %v2905
      %v2907 = vrot.slane %v2646, 1
      %v2908 = vrot.slane %v2662, 1
      %v2909 = vsel %vm823, %v2907, %v2908
      %v2910 = vrot.slane %v2647, 1
      %v2911 = vrot.slane %v2663, 1
      %v2912 = vsel %vm823, %v2910, %v2911
      %v2913 = vrot.slane %v2648, 1
      %v2914 = vrot.slane %v2664, 1
      %v2915 = vsel %vm823, %v2913, %v2914
      %v2916 = vrot.slane %v2649, 1
      %v2917 = vrot.slane %v2665, 1
      %v2918 = vsel %vm823, %v2916, %v2917
      %v2919 = vrot.slane %v2650, 1
      %v2920 = vrot.slane %v2666, 1
      %v2921 = vsel %vm823, %v2919, %v2920
      %v2922 = vrot.slane %v2651, 1
      %v2923 = vrot.slane %v2667, 1
      %v2924 = vsel %vm823, %v2922, %v2923
      %v2925 = vrot.slane %v2652, 1
      %v2926 = vrot.slane %v2668, 1
      %v2927 = vsel %vm823, %v2925, %v2926
      %v2928 = vrot.slane %v2653, 1
      %v2929 = vrot.slane %v2669, 1
      %v2930 = vsel %vm823, %v2928, %v2929
      %v2931 = vrot.slane %v2654, 1
      %v2932 = vrot.slane %v2670, 1
      %v2933 = vsel %vm823, %v2931, %v2932
      %v2934 = vrot.slane %v2655, 1
      %v2935 = vrot.slane %v2671, 1
      %v2936 = vsel %vm823, %v2934, %v2935
      %v2937 = vrot.slane %v2656, 1
      %v2938 = vrot.slane %v2672, 1
      %v2939 = vsel %vm823, %v2937, %v2938
      %v2940 = vrot.slane %v2657, 1
      %v2941 = vrot.slane %v2673, 1
      %v2942 = vsel %vm823, %v2940, %v2941
      %v2943 = vrot.slane %v2658, 1
      %v2944 = vrot.slane %v2674, 1
      %v2945 = vsel %vm823, %v2943, %v2944
      %v2962 = vshrl.u32 %v2659, 16
      %v2964 = vshll.u32 %v2659, 16
      %v2966 = vrot.slane %v2964, 1
      %v2967 = vor.u32 %v2962, %v2966
      %v2969 = vshll.u32 %v2675, 16
      %v2971 = vrot.slane %v2969, 1
      %v2972 = vsel %vm582, %v2967, %v2971
      %v2976 = vrot.slane %v2659, 1
      %v2977 = vrot.slane %v2675, 1
      %v2978 = vsel %vm823, %v2976, %v2977
      %v2980 = vld [vmem:[%s4] sm:$0xf]
      %v2981 = vld [vmem:[%s4 + $0x4] sm:$0xf]
      %v2982 = vld [vmem:[%s4 + $0x8] sm:$0xf]
      %v2983 = vld [vmem:[%s4 + $0xc] sm:$0xf]
      %v2984 = vld [vmem:[%s4 + $0x10] sm:$0xf]
      %v2985 = vld [vmem:[%s4 + $0x14] sm:$0xf]
      %v2986 = vld [vmem:[%s4 + $0x18] sm:$0xf]
      %v2987 = vld [vmem:[%s4 + $0x1c] sm:$0xf]
      %v2988 = vld [vmem:[%s4 + $0x20] sm:$0xf]
      %v2989 = vld [vmem:[%s4 + $0x24] sm:$0xf]
      %v2990 = vld [vmem:[%s4 + $0x28] sm:$0xf]
      %v2991 = vld [vmem:[%s4 + $0x2c] sm:$0xf]
      %v2992 = vld [vmem:[%s4 + $0x30] sm:$0xf]
      %v2993 = vld [vmem:[%s4 + $0x34] sm:$0xf]
      %v2994 = vld [vmem:[%s4 + $0x38] sm:$0xf]
      %v2995 = vld [vmem:[%s4 + $0x3c] sm:$0xf]
      %v2996 = vld [vmem:[%s4 + $0x40] sm:$0xf]
      %v2997 = vld [vmem:[%s4 + $0x44] sm:$0xf]
      %v2998 = vld [vmem:[%s4 + $0x48] sm:$0xf]
      %v2999 = vld [vmem:[%s4 + $0x4c] sm:$0xf]
      %v3000 = vld [vmem:[%s4 + $0x50] sm:$0xf]
      %v3001 = vld [vmem:[%s4 + $0x54] sm:$0xf]
      %v3002 = vld [vmem:[%s4 + $0x58] sm:$0xf]
      %v3003 = vld [vmem:[%s4 + $0x5c] sm:$0xf]
      %v3004 = vld [vmem:[%s4 + $0x60] sm:$0xf]
      %v3005 = vld [vmem:[%s4 + $0x64] sm:$0xf]
      %v3006 = vld [vmem:[%s4 + $0x68] sm:$0xf]
      %v3007 = vld [vmem:[%s4 + $0x6c] sm:$0xf]
      %v3008 = vld [vmem:[%s4 + $0x70] sm:$0xf]
      %v3009 = vld [vmem:[%s4 + $0x74] sm:$0xf]
      %v3010 = vld [vmem:[%s4 + $0x78] sm:$0xf]
      %v3011 = vld [vmem:[%s4 + $0x7c] sm:$0xf]
      %v3012 = vld [vmem:[%s4 + $0x80] sm:$0xf]
      %v3013 = vld [vmem:[%s4 + $0x84] sm:$0xf]
      %v3014 = vld [vmem:[%s4 + $0x88] sm:$0xf]
      %v3015 = vld [vmem:[%s4 + $0x8c] sm:$0xf]
      %v3016 = vld [vmem:[%s4 + $0x90] sm:$0xf]
      %v3017 = vld [vmem:[%s4 + $0x94] sm:$0xf]
      %v3018 = vld [vmem:[%s4 + $0x98] sm:$0xf]
      %v3019 = vld [vmem:[%s4 + $0x9c] sm:$0xf]
      %v3020 = vld [vmem:[%s4 + $0xa0] sm:$0xf]
      %v3021 = vld [vmem:[%s4 + $0xa4] sm:$0xf]
      %v3022 = vld [vmem:[%s4 + $0xa8] sm:$0xf]
      %v3023 = vld [vmem:[%s4 + $0xac] sm:$0xf]
      %v3024 = vld [vmem:[%s4 + $0xb0] sm:$0xf]
      %v3025 = vld [vmem:[%s4 + $0xb4] sm:$0xf]
      %v3026 = vld [vmem:[%s4 + $0xb8] sm:$0xf]
      %v3027 = vld [vmem:[%s4 + $0xbc] sm:$0xf]
      %v3028 = vld [vmem:[%s4 + $0xc0] sm:$0xf]
      %v3029 = vld [vmem:[%s4 + $0xc4] sm:$0xf]
      %v3030 = vld [vmem:[%s4 + $0xc8] sm:$0xf]
      %v3031 = vld [vmem:[%s4 + $0xcc] sm:$0xf]
      %v3032 = vld [vmem:[%s4 + $0xd0] sm:$0xf]
      %v3033 = vld [vmem:[%s4 + $0xd4] sm:$0xf]
      %v3034 = vld [vmem:[%s4 + $0xd8] sm:$0xf]
      %v3035 = vld [vmem:[%s4 + $0xdc] sm:$0xf]
      %v3036 = vld [vmem:[%s4 + $0xe0] sm:$0xf]
      %v3037 = vld [vmem:[%s4 + $0xe4] sm:$0xf]
      %v3038 = vld [vmem:[%s4 + $0xe8] sm:$0xf]
      %v3039 = vld [vmem:[%s4 + $0xec] sm:$0xf]
      %v3040 = vld [vmem:[%s4 + $0xf0] sm:$0xf]
      %v3041 = vld [vmem:[%s4 + $0xf4] sm:$0xf]
      %v3042 = vld [vmem:[%s4 + $0xf8] sm:$0xf]
      %v3043 = vld [vmem:[%s4 + $0xfc] sm:$0xf]
      %v3044 = vld [vmem:[%s4 + $0x100] sm:$0xf]
      %v3045 = vld [vmem:[%s4 + $0x104] sm:$0xf]
      %v3046 = vld [vmem:[%s4 + $0x108] sm:$0xf]
      %v3047 = vld [vmem:[%s4 + $0x10c] sm:$0xf]
      %v3048 = vld [vmem:[%s4 + $0x110] sm:$0xf]
      %v3049 = vld [vmem:[%s4 + $0x114] sm:$0xf]
      %v3050 = vld [vmem:[%s4 + $0x118] sm:$0xf]
      %v3051 = vld [vmem:[%s4 + $0x11c] sm:$0xf]
      %v3052 = vld [vmem:[%s4 + $0x120] sm:$0xf]
      %v3053 = vld [vmem:[%s4 + $0x124] sm:$0xf]
      %v3054 = vld [vmem:[%s4 + $0x128] sm:$0xf]
      %v3055 = vld [vmem:[%s4 + $0x12c] sm:$0xf]
      %v3056 = vld [vmem:[%s4 + $0x130] sm:$0xf]
      %v3057 = vld [vmem:[%s4 + $0x134] sm:$0xf]
      %v3058 = vld [vmem:[%s4 + $0x138] sm:$0xf]
      %v3059 = vld [vmem:[%s4 + $0x13c] sm:$0xf]
      %v3060 = vld [vmem:[%s4 + $0x140] sm:$0xf]
      %v3061 = vld [vmem:[%s4 + $0x144] sm:$0xf]
      %v3062 = vld [vmem:[%s4 + $0x148] sm:$0xf]
      %v3063 = vld [vmem:[%s4 + $0x14c] sm:$0xf]
      %v3064 = vld [vmem:[%s4 + $0x150] sm:$0xf]
      %v3065 = vld [vmem:[%s4 + $0x154] sm:$0xf]
      %v3066 = vld [vmem:[%s4 + $0x158] sm:$0xf]
      %v3067 = vld [vmem:[%s4 + $0x15c] sm:$0xf]
      %v3068 = vld [vmem:[%s4 + $0x160] sm:$0xf]
      %v3069 = vld [vmem:[%s4 + $0x164] sm:$0xf]
      %v3070 = vld [vmem:[%s4 + $0x168] sm:$0xf]
      %v3071 = vld [vmem:[%s4 + $0x16c] sm:$0xf]
      %v3072 = vld [vmem:[%s4 + $0x170] sm:$0xf]
      %v3073 = vld [vmem:[%s4 + $0x174] sm:$0xf]
      %v3074 = vld [vmem:[%s4 + $0x178] sm:$0xf]
      %v3075 = vld [vmem:[%s4 + $0x17c] sm:$0xf]
      %v3076 = vld [vmem:[%s4 + $0x180] sm:$0xf]
      %v3077 = vld [vmem:[%s4 + $0x184] sm:$0xf]
      %v3078 = vld [vmem:[%s4 + $0x188] sm:$0xf]
      %v3079 = vld [vmem:[%s4 + $0x18c] sm:$0xf]
      %v3080 = vld [vmem:[%s4 + $0x190] sm:$0xf]
      %v3081 = vld [vmem:[%s4 + $0x194] sm:$0xf]
      %v3082 = vld [vmem:[%s4 + $0x198] sm:$0xf]
      %v3083 = vld [vmem:[%s4 + $0x19c] sm:$0xf]
      %v3084 = vld [vmem:[%s4 + $0x1a0] sm:$0xf]
      %v3085 = vld [vmem:[%s4 + $0x1a4] sm:$0xf]
      %v3086 = vld [vmem:[%s4 + $0x1a8] sm:$0xf]
      %v3087 = vld [vmem:[%s4 + $0x1ac] sm:$0xf]
      %v3088 = vld [vmem:[%s4 + $0x1b0] sm:$0xf]
      %v3089 = vld [vmem:[%s4 + $0x1b4] sm:$0xf]
      %v3090 = vld [vmem:[%s4 + $0x1b8] sm:$0xf]
      %v3091 = vld [vmem:[%s4 + $0x1bc] sm:$0xf]
      %v3092 = vld [vmem:[%s4 + $0x1c0] sm:$0xf]
      %v3093 = vld [vmem:[%s4 + $0x1c4] sm:$0xf]
      %v3094 = vld [vmem:[%s4 + $0x1c8] sm:$0xf]
      %v3095 = vld [vmem:[%s4 + $0x1cc] sm:$0xf]
      %v3096 = vld [vmem:[%s4 + $0x1d0] sm:$0xf]
      %v3097 = vld [vmem:[%s4 + $0x1d4] sm:$0xf]
      %v3098 = vld [vmem:[%s4 + $0x1d8] sm:$0xf]
      %v3099 = vld [vmem:[%s4 + $0x1dc] sm:$0xf]
      %v3100 = vld [vmem:[%s4 + $0x1e0] sm:$0xf]
      %v3101 = vld [vmem:[%s4 + $0x1e4] sm:$0xf]
      %v3102 = vld [vmem:[%s4 + $0x1e8] sm:$0xf]
      %v3103 = vld [vmem:[%s4 + $0x1ec] sm:$0xf]
      %v3104 = vld [vmem:[%s4 + $0x1f0] sm:$0xf]
      %v3105 = vld [vmem:[%s4 + $0x1f4] sm:$0xf]
      %v3106 = vld [vmem:[%s4 + $0x1f8] sm:$0xf]
      %v3107 = vld [vmem:[%s4 + $0x1fc] sm:$0xf]
      %v3108 = vld [vmem:[%s4 + $0x200] sm:$0xf]
      %v3109 = vld [vmem:[%s4 + $0x204] sm:$0xf]
      %v3110 = vld [vmem:[%s4 + $0x208] sm:$0xf]
      %v3111 = vld [vmem:[%s4 + $0x20c] sm:$0xf]
      %v3112 = vld [vmem:[%s4 + $0x210] sm:$0xf]
      %v3113 = vld [vmem:[%s4 + $0x214] sm:$0xf]
      %v3114 = vld [vmem:[%s4 + $0x218] sm:$0xf]
      %v3115 = vld [vmem:[%s4 + $0x21c] sm:$0xf]
      %v3116 = vld [vmem:[%s4 + $0x220] sm:$0xf]
      %v3117 = vld [vmem:[%s4 + $0x224] sm:$0xf]
      %v3118 = vld [vmem:[%s4 + $0x228] sm:$0xf]
      %v3119 = vld [vmem:[%s4 + $0x22c] sm:$0xf]
      %v3120 = vld [vmem:[%s4 + $0x230] sm:$0xf]
      %v3121 = vld [vmem:[%s4 + $0x234] sm:$0xf]
      %v3122 = vld [vmem:[%s4 + $0x238] sm:$0xf]
      %v3123 = vld [vmem:[%s4 + $0x23c] sm:$0xf]
      %v3268 = vunpack.c.l.b16 %v2980
      %v3269 = vunpack.c.l.b16 %v2981
      %v3270 = vunpack.c.l.b16 %v2982
      %v3271 = vunpack.c.l.b16 %v2983
      %v3272 = vunpack.c.l.b16 %v2984
      %v3273 = vunpack.c.l.b16 %v2985
      %v3274 = vunpack.c.l.b16 %v2986
      %v3275 = vunpack.c.l.b16 %v2987
      %v3276 = vunpack.c.l.b16 %v2988
      %v3277 = vunpack.c.l.b16 %v2989
      %v3278 = vunpack.c.l.b16 %v2990
      %v3279 = vunpack.c.l.b16 %v2991
      %v3280 = vunpack.c.l.b16 %v2992
      %v3281 = vunpack.c.l.b16 %v2993
      %v3282 = vunpack.c.l.b16 %v2994
      %v3283 = vunpack.c.l.b16 %v2995
      %v3284 = vunpack.c.l.b16 %v2996
      %v3285 = vunpack.c.l.b16 %v2997
      %v3286 = vunpack.c.l.b16 %v2998
      %v3287 = vunpack.c.l.b16 %v2999
      %v3288 = vunpack.c.l.b16 %v3000
      %v3289 = vunpack.c.l.b16 %v3001
      %v3290 = vunpack.c.l.b16 %v3002
      %v3291 = vunpack.c.l.b16 %v3003
      %v3292 = vunpack.c.l.b16 %v3004
      %v3293 = vunpack.c.l.b16 %v3005
      %v3294 = vunpack.c.l.b16 %v3006
      %v3295 = vunpack.c.l.b16 %v3007
      %v3296 = vunpack.c.l.b16 %v3008
      %v3297 = vunpack.c.l.b16 %v3009
      %v3298 = vunpack.c.l.b16 %v3010
      %v3299 = vunpack.c.l.b16 %v3011
      %v3300 = vunpack.c.l.b16 %v3012
      %v3301 = vunpack.c.l.b16 %v3013
      %v3302 = vunpack.c.l.b16 %v3014
      %v3303 = vunpack.c.l.b16 %v3015
      %v3304 = vunpack.c.l.b16 %v3016
      %v3305 = vunpack.c.l.b16 %v3017
      %v3306 = vunpack.c.l.b16 %v3018
      %v3307 = vunpack.c.l.b16 %v3019
      %v3308 = vunpack.c.l.b16 %v3020
      %v3309 = vunpack.c.l.b16 %v3021
      %v3310 = vunpack.c.l.b16 %v3022
      %v3311 = vunpack.c.l.b16 %v3023
      %v3312 = vunpack.c.l.b16 %v3024
      %v3313 = vunpack.c.l.b16 %v3025
      %v3314 = vunpack.c.l.b16 %v3026
      %v3315 = vunpack.c.l.b16 %v3027
      %v3316 = vunpack.c.l.b16 %v3028
      %v3317 = vunpack.c.l.b16 %v3029
      %v3318 = vunpack.c.l.b16 %v3030
      %v3319 = vunpack.c.l.b16 %v3031
      %v3320 = vunpack.c.l.b16 %v3032
      %v3321 = vunpack.c.l.b16 %v3033
      %v3322 = vunpack.c.l.b16 %v3034
      %v3323 = vunpack.c.l.b16 %v3035
      %v3324 = vunpack.c.l.b16 %v3036
      %v3325 = vunpack.c.l.b16 %v3037
      %v3326 = vunpack.c.l.b16 %v3038
      %v3327 = vunpack.c.l.b16 %v3039
      %v3328 = vunpack.c.l.b16 %v3040
      %v3329 = vunpack.c.l.b16 %v3041
      %v3330 = vunpack.c.l.b16 %v3042
      %v3331 = vunpack.c.l.b16 %v3043
      %v3332 = vunpack.c.l.b16 %v3044
      %v3333 = vunpack.c.l.b16 %v3045
      %v3334 = vunpack.c.l.b16 %v3046
      %v3335 = vunpack.c.l.b16 %v3047
      %v3336 = vunpack.c.l.b16 %v3048
      %v3337 = vunpack.c.l.b16 %v3049
      %v3338 = vunpack.c.l.b16 %v3050
      %v3339 = vunpack.c.l.b16 %v3051
      %v3340 = vunpack.c.l.b16 %v3052
      %v3341 = vunpack.c.l.b16 %v3053
      %v3342 = vunpack.c.l.b16 %v3054
      %v3343 = vunpack.c.l.b16 %v3055
      %v3344 = vunpack.c.l.b16 %v3056
      %v3345 = vunpack.c.l.b16 %v3057
      %v3346 = vunpack.c.l.b16 %v3058
      %v3347 = vunpack.c.l.b16 %v3059
      %v3348 = vunpack.c.l.b16 %v3060
      %v3349 = vunpack.c.l.b16 %v3061
      %v3350 = vunpack.c.l.b16 %v3062
      %v3351 = vunpack.c.l.b16 %v3063
      %v3352 = vunpack.c.l.b16 %v3064
      %v3353 = vunpack.c.l.b16 %v3065
      %v3354 = vunpack.c.l.b16 %v3066
      %v3355 = vunpack.c.l.b16 %v3067
      %v3356 = vunpack.c.l.b16 %v3068
      %v3357 = vunpack.c.l.b16 %v3069
      %v3358 = vunpack.c.l.b16 %v3070
      %v3359 = vunpack.c.l.b16 %v3071
      %v3360 = vunpack.c.l.b16 %v3072
      %v3361 = vunpack.c.l.b16 %v3073
      %v3362 = vunpack.c.l.b16 %v3074
      %v3363 = vunpack.c.l.b16 %v3075
      %v3364 = vunpack.c.l.b16 %v3076
      %v3365 = vunpack.c.l.b16 %v3077
      %v3366 = vunpack.c.l.b16 %v3078
      %v3367 = vunpack.c.l.b16 %v3079
      %v3368 = vunpack.c.l.b16 %v3080
      %v3369 = vunpack.c.l.b16 %v3081
      %v3370 = vunpack.c.l.b16 %v3082
      %v3371 = vunpack.c.l.b16 %v3083
      %v3372 = vunpack.c.l.b16 %v3084
      %v3373 = vunpack.c.l.b16 %v3085
      %v3374 = vunpack.c.l.b16 %v3086
      %v3375 = vunpack.c.l.b16 %v3087
      %v3376 = vunpack.c.l.b16 %v3088
      %v3377 = vunpack.c.l.b16 %v3089
      %v3378 = vunpack.c.l.b16 %v3090
      %v3379 = vunpack.c.l.b16 %v3091
      %v3380 = vunpack.c.l.b16 %v3092
      %v3381 = vunpack.c.l.b16 %v3093
      %v3382 = vunpack.c.l.b16 %v3094
      %v3383 = vunpack.c.l.b16 %v3095
      %v3384 = vunpack.c.l.b16 %v3096
      %v3385 = vunpack.c.l.b16 %v3097
      %v3386 = vunpack.c.l.b16 %v3098
      %v3387 = vunpack.c.l.b16 %v3099
      %v3388 = vunpack.c.l.b16 %v3100
      %v3389 = vunpack.c.l.b16 %v3101
      %v3390 = vunpack.c.l.b16 %v3102
      %v3391 = vunpack.c.l.b16 %v3103
      %v3392 = vunpack.c.l.b16 %v3104
      %v3393 = vunpack.c.l.b16 %v3105
      %v3394 = vunpack.c.l.b16 %v3106
      %v3395 = vunpack.c.l.b16 %v3107
      %v3396 = vunpack.c.l.b16 %v3108
      %v3397 = vunpack.c.l.b16 %v3109
      %v3398 = vunpack.c.l.b16 %v3110
      %v3399 = vunpack.c.l.b16 %v3111
      %v3400 = vunpack.c.l.b16 %v3112
      %v3401 = vunpack.c.l.b16 %v3113
      %v3402 = vunpack.c.l.b16 %v3114
      %v3403 = vunpack.c.l.b16 %v3115
      %v3404 = vunpack.c.l.b16 %v3116
      %v3405 = vunpack.c.l.b16 %v3117
      %v3406 = vunpack.c.l.b16 %v3118
      %v3407 = vunpack.c.l.b16 %v3119
      %v3408 = vunpack.c.l.b16 %v3120
      %v3409 = vunpack.c.l.b16 %v3121
      %v3410 = vunpack.c.l.b16 %v3122
      %v3411 = vunpack.c.l.b16 %v3123
      %v3412 = vpack.c.b16 %v3269, %v3268
      %v3413 = vpack.c.b16 %v3271, %v3270
      %v3414 = vpack.c.b16 %v3273, %v3272
      %v3415 = vpack.c.b16 %v3275, %v3274
      %v3416 = vpack.c.b16 %v3277, %v3276
      %v3417 = vpack.c.b16 %v3279, %v3278
      %v3418 = vpack.c.b16 %v3281, %v3280
      %v3419 = vpack.c.b16 %v3283, %v3282
      %v3420 = vpack.c.b16 %v3285, %v3284
      %v3421 = vpack.c.b16 %v3287, %v3286
      %v3422 = vpack.c.b16 %v3289, %v3288
      %v3423 = vpack.c.b16 %v3291, %v3290
      %v3424 = vpack.c.b16 %v3293, %v3292
      %v3425 = vpack.c.b16 %v3295, %v3294
      %v3426 = vpack.c.b16 %v3297, %v3296
      %v3427 = vpack.c.b16 %v3299, %v3298
      %v3428 = vpack.c.b16 %v3301, %v3300
      %v3429 = vpack.c.b16 %v3303, %v3302
      %v3430 = vpack.c.b16 %v3305, %v3304
      %v3431 = vpack.c.b16 %v3307, %v3306
      %v3432 = vpack.c.b16 %v3309, %v3308
      %v3433 = vpack.c.b16 %v3311, %v3310
      %v3434 = vpack.c.b16 %v3313, %v3312
      %v3435 = vpack.c.b16 %v3315, %v3314
      %v3436 = vpack.c.b16 %v3317, %v3316
      %v3437 = vpack.c.b16 %v3319, %v3318
      %v3438 = vpack.c.b16 %v3321, %v3320
      %v3439 = vpack.c.b16 %v3323, %v3322
      %v3440 = vpack.c.b16 %v3325, %v3324
      %v3441 = vpack.c.b16 %v3327, %v3326
      %v3442 = vpack.c.b16 %v3329, %v3328
      %v3443 = vpack.c.b16 %v3331, %v3330
      %v3444 = vpack.c.b16 %v3333, %v3332
      %v3445 = vpack.c.b16 %v3335, %v3334
      %v3446 = vpack.c.b16 %v3337, %v3336
      %v3447 = vpack.c.b16 %v3339, %v3338
      %v3448 = vpack.c.b16 %v3341, %v3340
      %v3449 = vpack.c.b16 %v3343, %v3342
      %v3450 = vpack.c.b16 %v3345, %v3344
      %v3451 = vpack.c.b16 %v3347, %v3346
      %v3452 = vpack.c.b16 %v3349, %v3348
      %v3453 = vpack.c.b16 %v3351, %v3350
      %v3454 = vpack.c.b16 %v3353, %v3352
      %v3455 = vpack.c.b16 %v3355, %v3354
      %v3456 = vpack.c.b16 %v3357, %v3356
      %v3457 = vpack.c.b16 %v3359, %v3358
      %v3458 = vpack.c.b16 %v3361, %v3360
      %v3459 = vpack.c.b16 %v3363, %v3362
      %v3460 = vpack.c.b16 %v3365, %v3364
      %v3461 = vpack.c.b16 %v3367, %v3366
      %v3462 = vpack.c.b16 %v3369, %v3368
      %v3463 = vpack.c.b16 %v3371, %v3370
      %v3464 = vpack.c.b16 %v3373, %v3372
      %v3465 = vpack.c.b16 %v3375, %v3374
      %v3466 = vpack.c.b16 %v3377, %v3376
      %v3467 = vpack.c.b16 %v3379, %v3378
      %v3468 = vpack.c.b16 %v3381, %v3380
      %v3469 = vpack.c.b16 %v3383, %v3382
      %v3470 = vpack.c.b16 %v3385, %v3384
      %v3471 = vpack.c.b16 %v3387, %v3386
      %v3472 = vpack.c.b16 %v3389, %v3388
      %v3473 = vpack.c.b16 %v3391, %v3390
      %v3474 = vpack.c.b16 %v3393, %v3392
      %v3475 = vpack.c.b16 %v3395, %v3394
      %v3476 = vpack.c.b16 %v3397, %v3396
      %v3477 = vpack.c.b16 %v3399, %v3398
      %v3478 = vpack.c.b16 %v3401, %v3400
      %v3479 = vpack.c.b16 %v3403, %v3402
      %v3480 = vpack.c.b16 %v3405, %v3404
      %v3481 = vpack.c.b16 %v3407, %v3406
      %v3482 = vpack.c.b16 %v3409, %v3408
      %v3483 = vpack.c.b16 %v3411, %v3410
      %3556 = vmatpush.bf16.msra.mxu0 %v3419
      %3557 = vmatpush.bf16.msra.mxu0 %v3418
      %3558 = vmatpush.bf16.msra.mxu0 %v3417
      %3559 = vmatpush.bf16.msra.mxu0 %v3416
      %3560 = vmatpush.bf16.msra.mxu0 %v3415
      %3561 = vmatpush.bf16.msra.mxu0 %v3414
      %3562 = vmatpush.bf16.msra.mxu0 %v3413
      %3563 = vmatpush.bf16.msra.mxu0 %v3412
      %3564 = vmatmul.bf16.gmra.mxu0 %v548
      %v3565 = vpop.f32.mrf.mxu0
      %v3566 = vadd.f32 0.0, %v3565
      %v3567 = vpop.f32.mrf.mxu0
      %v3568 = vadd.f32 0.0, %v3567
      %3569 = vmatmul.bf16.gmra.mxu0 %v2644
      %v3570 = vpop.f32.mrf.mxu0
      %v3571 = vadd.f32 0.0, %v3570
      %v3572 = vpop.f32.mrf.mxu0
      %v3573 = vadd.f32 0.0, %v3572
      %3574 = vmatmul.bf16.gmra.mxu0 %v2645
      %v3575 = vpop.f32.mrf.mxu0
      %v3576 = vadd.f32 0.0, %v3575
      %v3577 = vpop.f32.mrf.mxu0
      %v3578 = vadd.f32 0.0, %v3577
      %3579 = vmatmul.bf16.gmra.mxu0 %v2646
      %v3580 = vpop.f32.mrf.mxu0
      %v3581 = vadd.f32 0.0, %v3580
      %v3582 = vpop.f32.mrf.mxu0
      %v3583 = vadd.f32 0.0, %v3582
      %3584 = vmatmul.bf16.gmra.mxu0 %v2647
      %v3585 = vpop.f32.mrf.mxu0
      %v3586 = vadd.f32 0.0, %v3585
      %v3587 = vpop.f32.mrf.mxu0
      %v3588 = vadd.f32 0.0, %v3587
      %3589 = vmatmul.bf16.gmra.mxu0 %v2648
      %v3590 = vpop.f32.mrf.mxu0
      %v3591 = vadd.f32 0.0, %v3590
      %v3592 = vpop.f32.mrf.mxu0
      %v3593 = vadd.f32 0.0, %v3592
      %3594 = vmatmul.bf16.gmra.mxu0 %v2649
      %v3595 = vpop.f32.mrf.mxu0
      %v3596 = vadd.f32 0.0, %v3595
      %v3597 = vpop.f32.mrf.mxu0
      %v3598 = vadd.f32 0.0, %v3597
      %3599 = vmatmul.bf16.gmra.mxu0 %v2650
      %v3600 = vpop.f32.mrf.mxu0
      %v3601 = vadd.f32 0.0, %v3600
      %v3602 = vpop.f32.mrf.mxu0
      %v3603 = vadd.f32 0.0, %v3602
      %3604 = vmatmul.bf16.gmra.mxu0 %v2651
      %v3605 = vpop.f32.mrf.mxu0
      %v3606 = vadd.f32 0.0, %v3605
      %v3607 = vpop.f32.mrf.mxu0
      %v3608 = vadd.f32 0.0, %v3607
      %3609 = vmatmul.bf16.gmra.mxu0 %v2652
      %v3610 = vpop.f32.mrf.mxu0
      %v3611 = vadd.f32 0.0, %v3610
      %v3612 = vpop.f32.mrf.mxu0
      %v3613 = vadd.f32 0.0, %v3612
      %3614 = vmatmul.bf16.gmra.mxu0 %v2653
      %v3615 = vpop.f32.mrf.mxu0
      %v3616 = vadd.f32 0.0, %v3615
      %v3617 = vpop.f32.mrf.mxu0
      %v3618 = vadd.f32 0.0, %v3617
      %3619 = vmatmul.bf16.gmra.mxu0 %v2654
      %v3620 = vpop.f32.mrf.mxu0
      %v3621 = vadd.f32 0.0, %v3620
      %v3622 = vpop.f32.mrf.mxu0
      %v3623 = vadd.f32 0.0, %v3622
      %3624 = vmatmul.bf16.gmra.mxu0 %v2655
      %v3625 = vpop.f32.mrf.mxu0
      %v3626 = vadd.f32 0.0, %v3625
      %v3627 = vpop.f32.mrf.mxu0
      %v3628 = vadd.f32 0.0, %v3627
      %3629 = vmatmul.bf16.gmra.mxu0 %v2656
      %v3630 = vpop.f32.mrf.mxu0
      %v3631 = vadd.f32 0.0, %v3630
      %v3632 = vpop.f32.mrf.mxu0
      %v3633 = vadd.f32 0.0, %v3632
      %3634 = vmatmul.bf16.gmra.mxu0 %v2657
      %v3635 = vpop.f32.mrf.mxu0
      %v3636 = vadd.f32 0.0, %v3635
      %v3637 = vpop.f32.mrf.mxu0
      %v3638 = vadd.f32 0.0, %v3637
      %3639 = vmatmul.bf16.gmra.mxu0 %v2658
      %v3640 = vpop.f32.mrf.mxu0
      %v3641 = vadd.f32 0.0, %v3640
      %v3642 = vpop.f32.mrf.mxu0
      %v3643 = vadd.f32 0.0, %v3642
      %3644 = vdwg.mxu0
      %3645 = vmatpush.bf16.msra.mxu0 %v3427
      %3646 = vmatpush.bf16.msra.mxu0 %v3426
      %3647 = vmatpush.bf16.msra.mxu0 %v3425
      %3648 = vmatpush.bf16.msra.mxu0 %v3424
      %3649 = vmatpush.bf16.msra.mxu0 %v3423
      %3650 = vmatpush.bf16.msra.mxu0 %v3422
      %3651 = vmatpush.bf16.msra.mxu0 %v3421
      %3652 = vmatpush.bf16.msra.mxu0 %v3420
      %3653 = vmatmul.bf16.gmra.mxu0 %v594
      %v3654 = vpop.f32.mrf.mxu0
      %v3655 = vadd.f32 %v3566, %v3654
      %v3656 = vpop.f32.mrf.mxu0
      %v3657 = vadd.f32 %v3568, %v3656
      %3658 = vmatmul.bf16.gmra.mxu0 %v2687
      %v3659 = vpop.f32.mrf.mxu0
      %v3660 = vadd.f32 %v3571, %v3659
      %v3661 = vpop.f32.mrf.mxu0
      %v3662 = vadd.f32 %v3573, %v3661
      %3663 = vmatmul.bf16.gmra.mxu0 %v2699
      %v3664 = vpop.f32.mrf.mxu0
      %v3665 = vadd.f32 %v3576, %v3664
      %v3666 = vpop.f32.mrf.mxu0
      %v3667 = vadd.f32 %v3578, %v3666
      %3668 = vmatmul.bf16.gmra.mxu0 %v2711
      %v3669 = vpop.f32.mrf.mxu0
      %v3670 = vadd.f32 %v3581, %v3669
      %v3671 = vpop.f32.mrf.mxu0
      %v3672 = vadd.f32 %v3583, %v3671
      %3673 = vmatmul.bf16.gmra.mxu0 %v2723
      %v3674 = vpop.f32.mrf.mxu0
      %v3675 = vadd.f32 %v3586, %v3674
      %v3676 = vpop.f32.mrf.mxu0
      %v3677 = vadd.f32 %v3588, %v3676
      %3678 = vmatmul.bf16.gmra.mxu0 %v2735
      %v3679 = vpop.f32.mrf.mxu0
      %v3680 = vadd.f32 %v3591, %v3679
      %v3681 = vpop.f32.mrf.mxu0
      %v3682 = vadd.f32 %v3593, %v3681
      %3683 = vmatmul.bf16.gmra.mxu0 %v2747
      %v3684 = vpop.f32.mrf.mxu0
      %v3685 = vadd.f32 %v3596, %v3684
      %v3686 = vpop.f32.mrf.mxu0
      %v3687 = vadd.f32 %v3598, %v3686
      %3688 = vmatmul.bf16.gmra.mxu0 %v2759
      %v3689 = vpop.f32.mrf.mxu0
      %v3690 = vadd.f32 %v3601, %v3689
      %v3691 = vpop.f32.mrf.mxu0
      %v3692 = vadd.f32 %v3603, %v3691
      %3693 = vmatmul.bf16.gmra.mxu0 %v2771
      %v3694 = vpop.f32.mrf.mxu0
      %v3695 = vadd.f32 %v3606, %v3694
      %v3696 = vpop.f32.mrf.mxu0
      %v3697 = vadd.f32 %v3608, %v3696
      %3698 = vmatmul.bf16.gmra.mxu0 %v2783
      %v3699 = vpop.f32.mrf.mxu0
      %v3700 = vadd.f32 %v3611, %v3699
      %v3701 = vpop.f32.mrf.mxu0
      %v3702 = vadd.f32 %v3613, %v3701
      %3703 = vmatmul.bf16.gmra.mxu0 %v2795
      %v3704 = vpop.f32.mrf.mxu0
      %v3705 = vadd.f32 %v3616, %v3704
      %v3706 = vpop.f32.mrf.mxu0
      %v3707 = vadd.f32 %v3618, %v3706
      %3708 = vmatmul.bf16.gmra.mxu0 %v2807
      %v3709 = vpop.f32.mrf.mxu0
      %v3710 = vadd.f32 %v3621, %v3709
      %v3711 = vpop.f32.mrf.mxu0
      %v3712 = vadd.f32 %v3623, %v3711
      %3713 = vmatmul.bf16.gmra.mxu0 %v2819
      %v3714 = vpop.f32.mrf.mxu0
      %v3715 = vadd.f32 %v3626, %v3714
      %v3716 = vpop.f32.mrf.mxu0
      %v3717 = vadd.f32 %v3628, %v3716
      %3718 = vmatmul.bf16.gmra.mxu0 %v2831
      %v3719 = vpop.f32.mrf.mxu0
      %v3720 = vadd.f32 %v3631, %v3719
      %v3721 = vpop.f32.mrf.mxu0
      %v3722 = vadd.f32 %v3633, %v3721
      %3723 = vmatmul.bf16.gmra.mxu0 %v2843
      %v3724 = vpop.f32.mrf.mxu0
      %v3725 = vadd.f32 %v3636, %v3724
      %v3726 = vpop.f32.mrf.mxu0
      %v3727 = vadd.f32 %v3638, %v3726
      %3728 = vmatmul.bf16.gmra.mxu0 %v2855
      %v3729 = vpop.f32.mrf.mxu0
      %v3730 = vadd.f32 %v3641, %v3729
      %v3731 = vpop.f32.mrf.mxu0
      %v3732 = vadd.f32 %v3643, %v3731
      %3733 = vdwg.mxu0
      %3734 = vmatpush.bf16.msra.mxu0 %v3435
      %3735 = vmatpush.bf16.msra.mxu0 %v3434
      %3736 = vmatpush.bf16.msra.mxu0 %v3433
      %3737 = vmatpush.bf16.msra.mxu0 %v3432
      %3738 = vmatpush.bf16.msra.mxu0 %v3431
      %3739 = vmatpush.bf16.msra.mxu0 %v3430
      %3740 = vmatpush.bf16.msra.mxu0 %v3429
      %3741 = vmatpush.bf16.msra.mxu0 %v3428
      %3742 = vmatmul.bf16.gmra.mxu0 %v826
      %v3743 = vpop.f32.mrf.mxu0
      %v3744 = vadd.f32 %v3655, %v3743
      %v3745 = vpop.f32.mrf.mxu0
      %v3746 = vadd.f32 %v3657, %v3745
      %3747 = vmatmul.bf16.gmra.mxu0 %v2903
      %v3748 = vpop.f32.mrf.mxu0
      %v3749 = vadd.f32 %v3660, %v3748
      %v3750 = vpop.f32.mrf.mxu0
      %v3751 = vadd.f32 %v3662, %v3750
      %3752 = vmatmul.bf16.gmra.mxu0 %v2906
      %v3753 = vpop.f32.mrf.mxu0
      %v3754 = vadd.f32 %v3665, %v3753
      %v3755 = vpop.f32.mrf.mxu0
      %v3756 = vadd.f32 %v3667, %v3755
      %3757 = vmatmul.bf16.gmra.mxu0 %v2909
      %v3758 = vpop.f32.mrf.mxu0
      %v3759 = vadd.f32 %v3670, %v3758
      %v3760 = vpop.f32.mrf.mxu0
      %v3761 = vadd.f32 %v3672, %v3760
      %3762 = vmatmul.bf16.gmra.mxu0 %v2912
      %v3763 = vpop.f32.mrf.mxu0
      %v3764 = vadd.f32 %v3675, %v3763
      %v3765 = vpop.f32.mrf.mxu0
      %v3766 = vadd.f32 %v3677, %v3765
      %3767 = vmatmul.bf16.gmra.mxu0 %v2915
      %v3768 = vpop.f32.mrf.mxu0
      %v3769 = vadd.f32 %v3680, %v3768
      %v3770 = vpop.f32.mrf.mxu0
      %v3771 = vadd.f32 %v3682, %v3770
      %3772 = vmatmul.bf16.gmra.mxu0 %v2918
      %v3773 = vpop.f32.mrf.mxu0
      %v3774 = vadd.f32 %v3685, %v3773
      %v3775 = vpop.f32.mrf.mxu0
      %v3776 = vadd.f32 %v3687, %v3775
      %3777 = vmatmul.bf16.gmra.mxu0 %v2921
      %v3778 = vpop.f32.mrf.mxu0
      %v3779 = vadd.f32 %v3690, %v3778
      %v3780 = vpop.f32.mrf.mxu0
      %v3781 = vadd.f32 %v3692, %v3780
      %3782 = vmatmul.bf16.gmra.mxu0 %v2924
      %v3783 = vpop.f32.mrf.mxu0
      %v3784 = vadd.f32 %v3695, %v3783
      %v3785 = vpop.f32.mrf.mxu0
      %v3786 = vadd.f32 %v3697, %v3785
      %3787 = vmatmul.bf16.gmra.mxu0 %v2927
      %v3788 = vpop.f32.mrf.mxu0
      %v3789 = vadd.f32 %v3700, %v3788
      %v3790 = vpop.f32.mrf.mxu0
      %v3791 = vadd.f32 %v3702, %v3790
      %3792 = vmatmul.bf16.gmra.mxu0 %v2930
      %v3793 = vpop.f32.mrf.mxu0
      %v3794 = vadd.f32 %v3705, %v3793
      %v3795 = vpop.f32.mrf.mxu0
      %v3796 = vadd.f32 %v3707, %v3795
      %3797 = vmatmul.bf16.gmra.mxu0 %v2933
      %v3798 = vpop.f32.mrf.mxu0
      %v3799 = vadd.f32 %v3710, %v3798
      %v3800 = vpop.f32.mrf.mxu0
      %v3801 = vadd.f32 %v3712, %v3800
      %3802 = vmatmul.bf16.gmra.mxu0 %v2936
      %v3803 = vpop.f32.mrf.mxu0
      %v3804 = vadd.f32 %v3715, %v3803
      %v3805 = vpop.f32.mrf.mxu0
      %v3806 = vadd.f32 %v3717, %v3805
      %3807 = vmatmul.bf16.gmra.mxu0 %v2939
      %v3808 = vpop.f32.mrf.mxu0
      %v3809 = vadd.f32 %v3720, %v3808
      %v3810 = vpop.f32.mrf.mxu0
      %v3811 = vadd.f32 %v3722, %v3810
      %3812 = vmatmul.bf16.gmra.mxu0 %v2942
      %v3813 = vpop.f32.mrf.mxu0
      %v3814 = vadd.f32 %v3725, %v3813
      %v3815 = vpop.f32.mrf.mxu0
      %v3816 = vadd.f32 %v3727, %v3815
      %3817 = vmatmul.bf16.gmra.mxu0 %v2945
      %v3818 = vpop.f32.mrf.mxu0
      %v3819 = vadd.f32 %v3730, %v3818
      %v3820 = vpop.f32.mrf.mxu0
      %v3821 = vadd.f32 %v3732, %v3820
      %3822 = vdwg.mxu0
      %3823 = vmatpush.bf16.msra.mxu0 %v3443
      %3824 = vmatpush.bf16.msra.mxu0 %v3442
      %3825 = vmatpush.bf16.msra.mxu0 %v3441
      %3826 = vmatpush.bf16.msra.mxu0 %v3440
      %3827 = vmatpush.bf16.msra.mxu0 %v3439
      %3828 = vmatpush.bf16.msra.mxu0 %v3438
      %3829 = vmatpush.bf16.msra.mxu0 %v3437
      %3830 = vmatpush.bf16.msra.mxu0 %v3436
      %3831 = vmatmul.bf16.gmra.mxu0 %v2644
      %v3832 = vpop.f32.mrf.mxu0
      %v3833 = vadd.f32 %v3744, %v3832
      %v3834 = vpop.f32.mrf.mxu0
      %v3835 = vadd.f32 %v3746, %v3834
      %3836 = vmatmul.bf16.gmra.mxu0 %v2645
      %v3837 = vpop.f32.mrf.mxu0
      %v3838 = vadd.f32 %v3749, %v3837
      %v3839 = vpop.f32.mrf.mxu0
      %v3840 = vadd.f32 %v3751, %v3839
      %3841 = vmatmul.bf16.gmra.mxu0 %v2646
      %v3842 = vpop.f32.mrf.mxu0
      %v3843 = vadd.f32 %v3754, %v3842
      %v3844 = vpop.f32.mrf.mxu0
      %v3845 = vadd.f32 %v3756, %v3844
      %3846 = vmatmul.bf16.gmra.mxu0 %v2647
      %v3847 = vpop.f32.mrf.mxu0
      %v3848 = vadd.f32 %v3759, %v3847
      %v3849 = vpop.f32.mrf.mxu0
      %v3850 = vadd.f32 %v3761, %v3849
      %3851 = vmatmul.bf16.gmra.mxu0 %v2648
      %v3852 = vpop.f32.mrf.mxu0
      %v3853 = vadd.f32 %v3764, %v3852
      %v3854 = vpop.f32.mrf.mxu0
      %v3855 = vadd.f32 %v3766, %v3854
      %3856 = vmatmul.bf16.gmra.mxu0 %v2649
      %v3857 = vpop.f32.mrf.mxu0
      %v3858 = vadd.f32 %v3769, %v3857
      %v3859 = vpop.f32.mrf.mxu0
      %v3860 = vadd.f32 %v3771, %v3859
      %3861 = vmatmul.bf16.gmra.mxu0 %v2650
      %v3862 = vpop.f32.mrf.mxu0
      %v3863 = vadd.f32 %v3774, %v3862
      %v3864 = vpop.f32.mrf.mxu0
      %v3865 = vadd.f32 %v3776, %v3864
      %3866 = vmatmul.bf16.gmra.mxu0 %v2651
      %v3867 = vpop.f32.mrf.mxu0
      %v3868 = vadd.f32 %v3779, %v3867
      %v3869 = vpop.f32.mrf.mxu0
      %v3870 = vadd.f32 %v3781, %v3869
      %3871 = vmatmul.bf16.gmra.mxu0 %v2652
      %v3872 = vpop.f32.mrf.mxu0
      %v3873 = vadd.f32 %v3784, %v3872
      %v3874 = vpop.f32.mrf.mxu0
      %v3875 = vadd.f32 %v3786, %v3874
      %3876 = vmatmul.bf16.gmra.mxu0 %v2653
      %v3877 = vpop.f32.mrf.mxu0
      %v3878 = vadd.f32 %v3789, %v3877
      %v3879 = vpop.f32.mrf.mxu0
      %v3880 = vadd.f32 %v3791, %v3879
      %3881 = vmatmul.bf16.gmra.mxu0 %v2654
      %v3882 = vpop.f32.mrf.mxu0
      %v3883 = vadd.f32 %v3794, %v3882
      %v3884 = vpop.f32.mrf.mxu0
      %v3885 = vadd.f32 %v3796, %v3884
      %3886 = vmatmul.bf16.gmra.mxu0 %v2655
      %v3887 = vpop.f32.mrf.mxu0
      %v3888 = vadd.f32 %v3799, %v3887
      %v3889 = vpop.f32.mrf.mxu0
      %v3890 = vadd.f32 %v3801, %v3889
      %3891 = vmatmul.bf16.gmra.mxu0 %v2656
      %v3892 = vpop.f32.mrf.mxu0
      %v3893 = vadd.f32 %v3804, %v3892
      %v3894 = vpop.f32.mrf.mxu0
      %v3895 = vadd.f32 %v3806, %v3894
      %3896 = vmatmul.bf16.gmra.mxu0 %v2657
      %v3897 = vpop.f32.mrf.mxu0
      %v3898 = vadd.f32 %v3809, %v3897
      %v3899 = vpop.f32.mrf.mxu0
      %v3900 = vadd.f32 %v3811, %v3899
      %3901 = vmatmul.bf16.gmra.mxu0 %v2658
      %v3902 = vpop.f32.mrf.mxu0
      %v3903 = vadd.f32 %v3814, %v3902
      %v3904 = vpop.f32.mrf.mxu0
      %v3905 = vadd.f32 %v3816, %v3904
      %3906 = vmatmul.bf16.gmra.mxu0 %v2659
      %v3907 = vpop.f32.mrf.mxu0
      %v3908 = vadd.f32 %v3819, %v3907
      %v3909 = vpop.f32.mrf.mxu0
      %v3910 = vadd.f32 %v3821, %v3909
      %3911 = vdwg.mxu0
      %3912 = vmatpush.bf16.msra.mxu0 %v3451
      %3913 = vmatpush.bf16.msra.mxu0 %v3450
      %3914 = vmatpush.bf16.msra.mxu0 %v3449
      %3915 = vmatpush.bf16.msra.mxu0 %v3448
      %3916 = vmatpush.bf16.msra.mxu0 %v3447
      %3917 = vmatpush.bf16.msra.mxu0 %v3446
      %3918 = vmatpush.bf16.msra.mxu0 %v3445
      %3919 = vmatpush.bf16.msra.mxu0 %v3444
      %3920 = vmatmul.bf16.gmra.mxu0 %v2687
      %v3921 = vpop.f32.mrf.mxu0
      %v3922 = vadd.f32 %v3833, %v3921
      %v3923 = vpop.f32.mrf.mxu0
      %v3924 = vadd.f32 %v3835, %v3923
      %3925 = vmatmul.bf16.gmra.mxu0 %v2699
      %v3926 = vpop.f32.mrf.mxu0
      %v3927 = vadd.f32 %v3838, %v3926
      %v3928 = vpop.f32.mrf.mxu0
      %v3929 = vadd.f32 %v3840, %v3928
      %3930 = vmatmul.bf16.gmra.mxu0 %v2711
      %v3931 = vpop.f32.mrf.mxu0
      %v3932 = vadd.f32 %v3843, %v3931
      %v3933 = vpop.f32.mrf.mxu0
      %v3934 = vadd.f32 %v3845, %v3933
      %3935 = vmatmul.bf16.gmra.mxu0 %v2723
      %v3936 = vpop.f32.mrf.mxu0
      %v3937 = vadd.f32 %v3848, %v3936
      %v3938 = vpop.f32.mrf.mxu0
      %v3939 = vadd.f32 %v3850, %v3938
      %3940 = vmatmul.bf16.gmra.mxu0 %v2735
      %v3941 = vpop.f32.mrf.mxu0
      %v3942 = vadd.f32 %v3853, %v3941
      %v3943 = vpop.f32.mrf.mxu0
      %v3944 = vadd.f32 %v3855, %v3943
      %3945 = vmatmul.bf16.gmra.mxu0 %v2747
      %v3946 = vpop.f32.mrf.mxu0
      %v3947 = vadd.f32 %v3858, %v3946
      %v3948 = vpop.f32.mrf.mxu0
      %v3949 = vadd.f32 %v3860, %v3948
      %3950 = vmatmul.bf16.gmra.mxu0 %v2759
      %v3951 = vpop.f32.mrf.mxu0
      %v3952 = vadd.f32 %v3863, %v3951
      %v3953 = vpop.f32.mrf.mxu0
      %v3954 = vadd.f32 %v3865, %v3953
      %3955 = vmatmul.bf16.gmra.mxu0 %v2771
      %v3956 = vpop.f32.mrf.mxu0
      %v3957 = vadd.f32 %v3868, %v3956
      %v3958 = vpop.f32.mrf.mxu0
      %v3959 = vadd.f32 %v3870, %v3958
      %3960 = vmatmul.bf16.gmra.mxu0 %v2783
      %v3961 = vpop.f32.mrf.mxu0
      %v3962 = vadd.f32 %v3873, %v3961
      %v3963 = vpop.f32.mrf.mxu0
      %v3964 = vadd.f32 %v3875, %v3963
      %3965 = vmatmul.bf16.gmra.mxu0 %v2795
      %v3966 = vpop.f32.mrf.mxu0
      %v3967 = vadd.f32 %v3878, %v3966
      %v3968 = vpop.f32.mrf.mxu0
      %v3969 = vadd.f32 %v3880, %v3968
      %3970 = vmatmul.bf16.gmra.mxu0 %v2807
      %v3971 = vpop.f32.mrf.mxu0
      %v3972 = vadd.f32 %v3883, %v3971
      %v3973 = vpop.f32.mrf.mxu0
      %v3974 = vadd.f32 %v3885, %v3973
      %3975 = vmatmul.bf16.gmra.mxu0 %v2819
      %v3976 = vpop.f32.mrf.mxu0
      %v3977 = vadd.f32 %v3888, %v3976
      %v3978 = vpop.f32.mrf.mxu0
      %v3979 = vadd.f32 %v3890, %v3978
      %3980 = vmatmul.bf16.gmra.mxu0 %v2831
      %v3981 = vpop.f32.mrf.mxu0
      %v3982 = vadd.f32 %v3893, %v3981
      %v3983 = vpop.f32.mrf.mxu0
      %v3984 = vadd.f32 %v3895, %v3983
      %3985 = vmatmul.bf16.gmra.mxu0 %v2843
      %v3986 = vpop.f32.mrf.mxu0
      %v3987 = vadd.f32 %v3898, %v3986
      %v3988 = vpop.f32.mrf.mxu0
      %v3989 = vadd.f32 %v3900, %v3988
      %3990 = vmatmul.bf16.gmra.mxu0 %v2855
      %v3991 = vpop.f32.mrf.mxu0
      %v3992 = vadd.f32 %v3903, %v3991
      %v3993 = vpop.f32.mrf.mxu0
      %v3994 = vadd.f32 %v3905, %v3993
      %3995 = vmatmul.bf16.gmra.mxu0 %v2972
      %v3996 = vpop.f32.mrf.mxu0
      %v3997 = vadd.f32 %v3908, %v3996
      %v3998 = vpop.f32.mrf.mxu0
      %v3999 = vadd.f32 %v3910, %v3998
      %4000 = vdwg.mxu0
      %4001 = vmatpush.bf16.msra.mxu0 %v3459
      %4002 = vmatpush.bf16.msra.mxu0 %v3458
      %4003 = vmatpush.bf16.msra.mxu0 %v3457
      %4004 = vmatpush.bf16.msra.mxu0 %v3456
      %4005 = vmatpush.bf16.msra.mxu0 %v3455
      %4006 = vmatpush.bf16.msra.mxu0 %v3454
      %4007 = vmatpush.bf16.msra.mxu0 %v3453
      %4008 = vmatpush.bf16.msra.mxu0 %v3452
      %4009 = vmatmul.bf16.gmra.mxu0 %v2903
      %v4010 = vpop.f32.mrf.mxu0
      %v4011 = vadd.f32 %v3922, %v4010
      %v4012 = vpop.f32.mrf.mxu0
      %v4013 = vadd.f32 %v3924, %v4012
      %4014 = vmatmul.bf16.gmra.mxu0 %v2906
      %v4015 = vpop.f32.mrf.mxu0
      %v4016 = vadd.f32 %v3927, %v4015
      %v4017 = vpop.f32.mrf.mxu0
      %v4018 = vadd.f32 %v3929, %v4017
      %4019 = vmatmul.bf16.gmra.mxu0 %v2909
      %v4020 = vpop.f32.mrf.mxu0
      %v4021 = vadd.f32 %v3932, %v4020
      %v4022 = vpop.f32.mrf.mxu0
      %v4023 = vadd.f32 %v3934, %v4022
      %4024 = vmatmul.bf16.gmra.mxu0 %v2912
      %v4025 = vpop.f32.mrf.mxu0
      %v4026 = vadd.f32 %v3937, %v4025
      %v4027 = vpop.f32.mrf.mxu0
      %v4028 = vadd.f32 %v3939, %v4027
      %4029 = vmatmul.bf16.gmra.mxu0 %v2915
      %v4030 = vpop.f32.mrf.mxu0
      %v4031 = vadd.f32 %v3942, %v4030
      %v4032 = vpop.f32.mrf.mxu0
      %v4033 = vadd.f32 %v3944, %v4032
      %4034 = vmatmul.bf16.gmra.mxu0 %v2918
      %v4035 = vpop.f32.mrf.mxu0
      %v4036 = vadd.f32 %v3947, %v4035
      %v4037 = vpop.f32.mrf.mxu0
      %v4038 = vadd.f32 %v3949, %v4037
      %4039 = vmatmul.bf16.gmra.mxu0 %v2921
      %v4040 = vpop.f32.mrf.mxu0
      %v4041 = vadd.f32 %v3952, %v4040
      %v4042 = vpop.f32.mrf.mxu0
      %v4043 = vadd.f32 %v3954, %v4042
      %4044 = vmatmul.bf16.gmra.mxu0 %v2924
      %v4045 = vpop.f32.mrf.mxu0
      %v4046 = vadd.f32 %v3957, %v4045
      %v4047 = vpop.f32.mrf.mxu0
      %v4048 = vadd.f32 %v3959, %v4047
      %4049 = vmatmul.bf16.gmra.mxu0 %v2927
      %v4050 = vpop.f32.mrf.mxu0
      %v4051 = vadd.f32 %v3962, %v4050
      %v4052 = vpop.f32.mrf.mxu0
      %v4053 = vadd.f32 %v3964, %v4052
      %4054 = vmatmul.bf16.gmra.mxu0 %v2930
      %v4055 = vpop.f32.mrf.mxu0
      %v4056 = vadd.f32 %v3967, %v4055
      %v4057 = vpop.f32.mrf.mxu0
      %v4058 = vadd.f32 %v3969, %v4057
      %4059 = vmatmul.bf16.gmra.mxu0 %v2933
      %v4060 = vpop.f32.mrf.mxu0
      %v4061 = vadd.f32 %v3972, %v4060
      %v4062 = vpop.f32.mrf.mxu0
      %v4063 = vadd.f32 %v3974, %v4062
      %4064 = vmatmul.bf16.gmra.mxu0 %v2936
      %v4065 = vpop.f32.mrf.mxu0
      %v4066 = vadd.f32 %v3977, %v4065
      %v4067 = vpop.f32.mrf.mxu0
      %v4068 = vadd.f32 %v3979, %v4067
      %4069 = vmatmul.bf16.gmra.mxu0 %v2939
      %v4070 = vpop.f32.mrf.mxu0
      %v4071 = vadd.f32 %v3982, %v4070
      %v4072 = vpop.f32.mrf.mxu0
      %v4073 = vadd.f32 %v3984, %v4072
      %4074 = vmatmul.bf16.gmra.mxu0 %v2942
      %v4075 = vpop.f32.mrf.mxu0
      %v4076 = vadd.f32 %v3987, %v4075
      %v4077 = vpop.f32.mrf.mxu0
      %v4078 = vadd.f32 %v3989, %v4077
      %4079 = vmatmul.bf16.gmra.mxu0 %v2945
      %v4080 = vpop.f32.mrf.mxu0
      %v4081 = vadd.f32 %v3992, %v4080
      %v4082 = vpop.f32.mrf.mxu0
      %v4083 = vadd.f32 %v3994, %v4082
      %4084 = vmatmul.bf16.gmra.mxu0 %v2978
      %v4085 = vpop.f32.mrf.mxu0
      %v4086 = vadd.f32 %v3997, %v4085
      %v4087 = vpop.f32.mrf.mxu0
      %v4088 = vadd.f32 %v3999, %v4087
      %4089 = vdwg.mxu0
      %4090 = vmatpush.bf16.msra.mxu0 %v3467
      %4091 = vmatpush.bf16.msra.mxu0 %v3466
      %4092 = vmatpush.bf16.msra.mxu0 %v3465
      %4093 = vmatpush.bf16.msra.mxu0 %v3464
      %4094 = vmatpush.bf16.msra.mxu0 %v3463
      %4095 = vmatpush.bf16.msra.mxu0 %v3462
      %4096 = vmatpush.bf16.msra.mxu0 %v3461
      %4097 = vmatpush.bf16.msra.mxu0 %v3460
      %4098 = vmatmul.bf16.gmra.mxu0 %v2645
      %v4099 = vpop.f32.mrf.mxu0
      %v4100 = vadd.f32 %v4011, %v4099
      %v4101 = vpop.f32.mrf.mxu0
      %v4102 = vadd.f32 %v4013, %v4101
      %4103 = vmatmul.bf16.gmra.mxu0 %v2646
      %v4104 = vpop.f32.mrf.mxu0
      %v4105 = vadd.f32 %v4016, %v4104
      %v4106 = vpop.f32.mrf.mxu0
      %v4107 = vadd.f32 %v4018, %v4106
      %4108 = vmatmul.bf16.gmra.mxu0 %v2647
      %v4109 = vpop.f32.mrf.mxu0
      %v4110 = vadd.f32 %v4021, %v4109
      %v4111 = vpop.f32.mrf.mxu0
      %v4112 = vadd.f32 %v4023, %v4111
      %4113 = vmatmul.bf16.gmra.mxu0 %v2648
      %v4114 = vpop.f32.mrf.mxu0
      %v4115 = vadd.f32 %v4026, %v4114
      %v4116 = vpop.f32.mrf.mxu0
      %v4117 = vadd.f32 %v4028, %v4116
      %4118 = vmatmul.bf16.gmra.mxu0 %v2649
      %v4119 = vpop.f32.mrf.mxu0
      %v4120 = vadd.f32 %v4031, %v4119
      %v4121 = vpop.f32.mrf.mxu0
      %v4122 = vadd.f32 %v4033, %v4121
      %4123 = vmatmul.bf16.gmra.mxu0 %v2650
      %v4124 = vpop.f32.mrf.mxu0
      %v4125 = vadd.f32 %v4036, %v4124
      %v4126 = vpop.f32.mrf.mxu0
      %v4127 = vadd.f32 %v4038, %v4126
      %4128 = vmatmul.bf16.gmra.mxu0 %v2651
      %v4129 = vpop.f32.mrf.mxu0
      %v4130 = vadd.f32 %v4041, %v4129
      %v4131 = vpop.f32.mrf.mxu0
      %v4132 = vadd.f32 %v4043, %v4131
      %4133 = vmatmul.bf16.gmra.mxu0 %v2652
      %v4134 = vpop.f32.mrf.mxu0
      %v4135 = vadd.f32 %v4046, %v4134
      %v4136 = vpop.f32.mrf.mxu0
      %v4137 = vadd.f32 %v4048, %v4136
      %4138 = vmatmul.bf16.gmra.mxu0 %v2653
      %v4139 = vpop.f32.mrf.mxu0
      %v4140 = vadd.f32 %v4051, %v4139
      %v4141 = vpop.f32.mrf.mxu0
      %v4142 = vadd.f32 %v4053, %v4141
      %4143 = vmatmul.bf16.gmra.mxu0 %v2654
      %v4144 = vpop.f32.mrf.mxu0
      %v4145 = vadd.f32 %v4056, %v4144
      %v4146 = vpop.f32.mrf.mxu0
      %v4147 = vadd.f32 %v4058, %v4146
      %4148 = vmatmul.bf16.gmra.mxu0 %v2655
      %v4149 = vpop.f32.mrf.mxu0
      %v4150 = vadd.f32 %v4061, %v4149
      %v4151 = vpop.f32.mrf.mxu0
      %v4152 = vadd.f32 %v4063, %v4151
      %4153 = vmatmul.bf16.gmra.mxu0 %v2656
      %v4154 = vpop.f32.mrf.mxu0
      %v4155 = vadd.f32 %v4066, %v4154
      %v4156 = vpop.f32.mrf.mxu0
      %v4157 = vadd.f32 %v4068, %v4156
      %4158 = vmatmul.bf16.gmra.mxu0 %v2657
      %v4159 = vpop.f32.mrf.mxu0
      %v4160 = vadd.f32 %v4071, %v4159
      %v4161 = vpop.f32.mrf.mxu0
      %v4162 = vadd.f32 %v4073, %v4161
      %4163 = vmatmul.bf16.gmra.mxu0 %v2658
      %v4164 = vpop.f32.mrf.mxu0
      %v4165 = vadd.f32 %v4076, %v4164
      %v4166 = vpop.f32.mrf.mxu0
      %v4167 = vadd.f32 %v4078, %v4166
      %4168 = vmatmul.bf16.gmra.mxu0 %v2659
      %v4169 = vpop.f32.mrf.mxu0
      %v4170 = vadd.f32 %v4081, %v4169
      %v4171 = vpop.f32.mrf.mxu0
      %v4172 = vadd.f32 %v4083, %v4171
      %4173 = vmatmul.bf16.gmra.mxu0 %v548
      %v4174 = vpop.f32.mrf.mxu0
      %v4175 = vadd.f32 %v4086, %v4174
      %v4176 = vpop.f32.mrf.mxu0
      %v4177 = vadd.f32 %v4088, %v4176
      %4178 = vdwg.mxu0
      %4179 = vmatpush.bf16.msra.mxu0 %v3475
      %4180 = vmatpush.bf16.msra.mxu0 %v3474
      %4181 = vmatpush.bf16.msra.mxu0 %v3473
      %4182 = vmatpush.bf16.msra.mxu0 %v3472
      %4183 = vmatpush.bf16.msra.mxu0 %v3471
      %4184 = vmatpush.bf16.msra.mxu0 %v3470
      %4185 = vmatpush.bf16.msra.mxu0 %v3469
      %4186 = vmatpush.bf16.msra.mxu0 %v3468
      %4187 = vmatmul.bf16.gmra.mxu0 %v2699
      %v4188 = vpop.f32.mrf.mxu0
      %v4189 = vadd.f32 %v4100, %v4188
      %v4190 = vpop.f32.mrf.mxu0
      %v4191 = vadd.f32 %v4102, %v4190
      %4192 = vmatmul.bf16.gmra.mxu0 %v2711
      %v4193 = vpop.f32.mrf.mxu0
      %v4194 = vadd.f32 %v4105, %v4193
      %v4195 = vpop.f32.mrf.mxu0
      %v4196 = vadd.f32 %v4107, %v4195
      %4197 = vmatmul.bf16.gmra.mxu0 %v2723
      %v4198 = vpop.f32.mrf.mxu0
      %v4199 = vadd.f32 %v4110, %v4198
      %v4200 = vpop.f32.mrf.mxu0
      %v4201 = vadd.f32 %v4112, %v4200
      %4202 = vmatmul.bf16.gmra.mxu0 %v2735
      %v4203 = vpop.f32.mrf.mxu0
      %v4204 = vadd.f32 %v4115, %v4203
      %v4205 = vpop.f32.mrf.mxu0
      %v4206 = vadd.f32 %v4117, %v4205
      %4207 = vmatmul.bf16.gmra.mxu0 %v2747
      %v4208 = vpop.f32.mrf.mxu0
      %v4209 = vadd.f32 %v4120, %v4208
      %v4210 = vpop.f32.mrf.mxu0
      %v4211 = vadd.f32 %v4122, %v4210
      %4212 = vmatmul.bf16.gmra.mxu0 %v2759
      %v4213 = vpop.f32.mrf.mxu0
      %v4214 = vadd.f32 %v4125, %v4213
      %v4215 = vpop.f32.mrf.mxu0
      %v4216 = vadd.f32 %v4127, %v4215
      %4217 = vmatmul.bf16.gmra.mxu0 %v2771
      %v4218 = vpop.f32.mrf.mxu0
      %v4219 = vadd.f32 %v4130, %v4218
      %v4220 = vpop.f32.mrf.mxu0
      %v4221 = vadd.f32 %v4132, %v4220
      %4222 = vmatmul.bf16.gmra.mxu0 %v2783
      %v4223 = vpop.f32.mrf.mxu0
      %v4224 = vadd.f32 %v4135, %v4223
      %v4225 = vpop.f32.mrf.mxu0
      %v4226 = vadd.f32 %v4137, %v4225
      %4227 = vmatmul.bf16.gmra.mxu0 %v2795
      %v4228 = vpop.f32.mrf.mxu0
      %v4229 = vadd.f32 %v4140, %v4228
      %v4230 = vpop.f32.mrf.mxu0
      %v4231 = vadd.f32 %v4142, %v4230
      %4232 = vmatmul.bf16.gmra.mxu0 %v2807
      %v4233 = vpop.f32.mrf.mxu0
      %v4234 = vadd.f32 %v4145, %v4233
      %v4235 = vpop.f32.mrf.mxu0
      %v4236 = vadd.f32 %v4147, %v4235
      %4237 = vmatmul.bf16.gmra.mxu0 %v2819
      %v4238 = vpop.f32.mrf.mxu0
      %v4239 = vadd.f32 %v4150, %v4238
      %v4240 = vpop.f32.mrf.mxu0
      %v4241 = vadd.f32 %v4152, %v4240
      %4242 = vmatmul.bf16.gmra.mxu0 %v2831
      %v4243 = vpop.f32.mrf.mxu0
      %v4244 = vadd.f32 %v4155, %v4243
      %v4245 = vpop.f32.mrf.mxu0
      %v4246 = vadd.f32 %v4157, %v4245
      %4247 = vmatmul.bf16.gmra.mxu0 %v2843
      %v4248 = vpop.f32.mrf.mxu0
      %v4249 = vadd.f32 %v4160, %v4248
      %v4250 = vpop.f32.mrf.mxu0
      %v4251 = vadd.f32 %v4162, %v4250
      %4252 = vmatmul.bf16.gmra.mxu0 %v2855
      %v4253 = vpop.f32.mrf.mxu0
      %v4254 = vadd.f32 %v4165, %v4253
      %v4255 = vpop.f32.mrf.mxu0
      %v4256 = vadd.f32 %v4167, %v4255
      %4257 = vmatmul.bf16.gmra.mxu0 %v2972
      %v4258 = vpop.f32.mrf.mxu0
      %v4259 = vadd.f32 %v4170, %v4258
      %v4260 = vpop.f32.mrf.mxu0
      %v4261 = vadd.f32 %v4172, %v4260
      %4262 = vmatmul.bf16.gmra.mxu0 %v594
      %v4263 = vpop.f32.mrf.mxu0
      %v4264 = vadd.f32 %v4175, %v4263
      %v4265 = vpop.f32.mrf.mxu0
      %v4266 = vadd.f32 %v4177, %v4265
      %4267 = vdwg.mxu0
      %4268 = vmatpush.bf16.msra.mxu0 %v3483
      %4269 = vmatpush.bf16.msra.mxu0 %v3482
      %4270 = vmatpush.bf16.msra.mxu0 %v3481
      %4271 = vmatpush.bf16.msra.mxu0 %v3480
      %4272 = vmatpush.bf16.msra.mxu0 %v3479
      %4273 = vmatpush.bf16.msra.mxu0 %v3478
      %4274 = vmatpush.bf16.msra.mxu0 %v3477
      %4275 = vmatpush.bf16.msra.mxu0 %v3476
      %4276 = vmatmul.bf16.gmra.mxu0 %v2906
      %v4277 = vpop.f32.mrf.mxu0
      %v4278 = vadd.f32 %v4189, %v4277
      %v4279 = vpop.f32.mrf.mxu0
      %v4280 = vadd.f32 %v4191, %v4279
      %4281 = vmatmul.bf16.gmra.mxu0 %v2909
      %v4282 = vpop.f32.mrf.mxu0
      %v4283 = vadd.f32 %v4194, %v4282
      %v4284 = vpop.f32.mrf.mxu0
      %v4285 = vadd.f32 %v4196, %v4284
      %4286 = vmatmul.bf16.gmra.mxu0 %v2912
      %v4287 = vpop.f32.mrf.mxu0
      %v4288 = vadd.f32 %v4199, %v4287
      %v4289 = vpop.f32.mrf.mxu0
      %v4290 = vadd.f32 %v4201, %v4289
      %4291 = vmatmul.bf16.gmra.mxu0 %v2915
      %v4292 = vpop.f32.mrf.mxu0
      %v4293 = vadd.f32 %v4204, %v4292
      %v4294 = vpop.f32.mrf.mxu0
      %v4295 = vadd.f32 %v4206, %v4294
      %4296 = vmatmul.bf16.gmra.mxu0 %v2918
      %v4297 = vpop.f32.mrf.mxu0
      %v4298 = vadd.f32 %v4209, %v4297
      %v4299 = vpop.f32.mrf.mxu0
      %v4300 = vadd.f32 %v4211, %v4299
      %4301 = vmatmul.bf16.gmra.mxu0 %v2921
      %v4302 = vpop.f32.mrf.mxu0
      %v4303 = vadd.f32 %v4214, %v4302
      %v4304 = vpop.f32.mrf.mxu0
      %v4305 = vadd.f32 %v4216, %v4304
      %4306 = vmatmul.bf16.gmra.mxu0 %v2924
      %v4307 = vpop.f32.mrf.mxu0
      %v4308 = vadd.f32 %v4219, %v4307
      %v4309 = vpop.f32.mrf.mxu0
      %v4310 = vadd.f32 %v4221, %v4309
      %4311 = vmatmul.bf16.gmra.mxu0 %v2927
      %v4312 = vpop.f32.mrf.mxu0
      %v4313 = vadd.f32 %v4224, %v4312
      %v4314 = vpop.f32.mrf.mxu0
      %v4315 = vadd.f32 %v4226, %v4314
      %4316 = vmatmul.bf16.gmra.mxu0 %v2930
      %v4317 = vpop.f32.mrf.mxu0
      %v4318 = vadd.f32 %v4229, %v4317
      %v4319 = vpop.f32.mrf.mxu0
      %v4320 = vadd.f32 %v4231, %v4319
      %4321 = vmatmul.bf16.gmra.mxu0 %v2933
      %v4322 = vpop.f32.mrf.mxu0
      %v4323 = vadd.f32 %v4234, %v4322
      %v4324 = vpop.f32.mrf.mxu0
      %v4325 = vadd.f32 %v4236, %v4324
      %4326 = vmatmul.bf16.gmra.mxu0 %v2936
      %v4327 = vpop.f32.mrf.mxu0
      %v4328 = vadd.f32 %v4239, %v4327
      %v4329 = vpop.f32.mrf.mxu0
      %v4330 = vadd.f32 %v4241, %v4329
      %4331 = vmatmul.bf16.gmra.mxu0 %v2939
      %v4332 = vpop.f32.mrf.mxu0
      %v4333 = vadd.f32 %v4244, %v4332
      %v4334 = vpop.f32.mrf.mxu0
      %v4335 = vadd.f32 %v4246, %v4334
      %4336 = vmatmul.bf16.gmra.mxu0 %v2942
      %v4337 = vpop.f32.mrf.mxu0
      %v4338 = vadd.f32 %v4249, %v4337
      %v4339 = vpop.f32.mrf.mxu0
      %v4340 = vadd.f32 %v4251, %v4339
      %4341 = vmatmul.bf16.gmra.mxu0 %v2945
      %v4342 = vpop.f32.mrf.mxu0
      %v4343 = vadd.f32 %v4254, %v4342
      %v4344 = vpop.f32.mrf.mxu0
      %v4345 = vadd.f32 %v4256, %v4344
      %4346 = vmatmul.bf16.gmra.mxu0 %v2978
      %v4347 = vpop.f32.mrf.mxu0
      %v4348 = vadd.f32 %v4259, %v4347
      %v4349 = vpop.f32.mrf.mxu0
      %v4350 = vadd.f32 %v4261, %v4349
      %4351 = vmatmul.bf16.gmra.mxu0 %v826
      %v4352 = vpop.f32.mrf.mxu0
      %v4353 = vadd.f32 %v4264, %v4352
      %v4354 = vpop.f32.mrf.mxu0
      %v4355 = vadd.f32 %v4266, %v4354
      %4356 = vdwg.mxu0
      %v4357 = vld [vmem:[%s5] sm:$0x1]
      %v4359 = vperm.slane %v4357, 0
      %v4361 = vmul.f32 %v4278, %v4359
      %v4362 = vmul.f32 %v4280, %v4359
      %v4363 = vmul.f32 %v4283, %v4359
      %v4364 = vmul.f32 %v4285, %v4359
      %v4365 = vmul.f32 %v4288, %v4359
      %v4366 = vmul.f32 %v4290, %v4359
      %v4367 = vmul.f32 %v4293, %v4359
      %v4368 = vmul.f32 %v4295, %v4359
      %v4369 = vmul.f32 %v4298, %v4359
      %v4370 = vmul.f32 %v4300, %v4359
      %v4371 = vmul.f32 %v4303, %v4359
      %v4372 = vmul.f32 %v4305, %v4359
      %v4373 = vmul.f32 %v4308, %v4359
      %v4374 = vmul.f32 %v4310, %v4359
      %v4375 = vmul.f32 %v4313, %v4359
      %v4376 = vmul.f32 %v4315, %v4359
      %v4377 = vmul.f32 %v4318, %v4359
      %v4378 = vmul.f32 %v4320, %v4359
      %v4379 = vmul.f32 %v4323, %v4359
      %v4380 = vmul.f32 %v4325, %v4359
      %v4381 = vmul.f32 %v4328, %v4359
      %v4382 = vmul.f32 %v4330, %v4359
      %v4383 = vmul.f32 %v4333, %v4359
      %v4384 = vmul.f32 %v4335, %v4359
      %v4385 = vmul.f32 %v4338, %v4359
      %v4386 = vmul.f32 %v4340, %v4359
      %v4387 = vmul.f32 %v4343, %v4359
      %v4388 = vmul.f32 %v4345, %v4359
      %v4389 = vmul.f32 %v4348, %v4359
      %v4390 = vmul.f32 %v4350, %v4359
      %v4391 = vmul.f32 %v4353, %v4359
      %v4392 = vmul.f32 %v4355, %v4359
      %v4393 = vld [vmem:[%s6] sm:$0x1]
      %v4395 = vperm.slane %v4393, 0
      %v4397 = vadd.f32 %v4361, %v4395
      %v4398 = vadd.f32 %v4362, %v4395
      %v4399 = vadd.f32 %v4363, %v4395
      %v4400 = vadd.f32 %v4364, %v4395
      %v4401 = vadd.f32 %v4365, %v4395
      %v4402 = vadd.f32 %v4366, %v4395
      %v4403 = vadd.f32 %v4367, %v4395
      %v4404 = vadd.f32 %v4368, %v4395
      %v4405 = vadd.f32 %v4369, %v4395
      %v4406 = vadd.f32 %v4370, %v4395
      %v4407 = vadd.f32 %v4371, %v4395
      %v4408 = vadd.f32 %v4372, %v4395
      %v4409 = vadd.f32 %v4373, %v4395
      %v4410 = vadd.f32 %v4374, %v4395
      %v4411 = vadd.f32 %v4375, %v4395
      %v4412 = vadd.f32 %v4376, %v4395
      %v4413 = vadd.f32 %v4377, %v4395
      %v4414 = vadd.f32 %v4378, %v4395
      %v4415 = vadd.f32 %v4379, %v4395
      %v4416 = vadd.f32 %v4380, %v4395
      %v4417 = vadd.f32 %v4381, %v4395
      %v4418 = vadd.f32 %v4382, %v4395
      %v4419 = vadd.f32 %v4383, %v4395
      %v4420 = vadd.f32 %v4384, %v4395
      %v4421 = vadd.f32 %v4385, %v4395
      %v4422 = vadd.f32 %v4386, %v4395
      %v4423 = vadd.f32 %v4387, %v4395
      %v4424 = vadd.f32 %v4388, %v4395
      %v4425 = vadd.f32 %v4389, %v4395
      %v4426 = vadd.f32 %v4390, %v4395
      %v4427 = vadd.f32 %v4391, %v4395
      %v4428 = vadd.f32 %v4392, %v4395
      %v4429 = vunpack.c.l.bf16 %v280
      %v4430 = vunpack.c.l.bf16 %v281
      %v4431 = vunpack.c.l.bf16 %v282
      %v4432 = vunpack.c.l.bf16 %v283
      %v4433 = vunpack.c.l.bf16 %v284
      %v4434 = vunpack.c.l.bf16 %v285
      %v4435 = vunpack.c.l.bf16 %v286
      %v4436 = vunpack.c.l.bf16 %v287
      %v4437 = vunpack.c.l.bf16 %v288
      %v4438 = vunpack.c.l.bf16 %v289
      %v4439 = vunpack.c.l.bf16 %v290
      %v4440 = vunpack.c.l.bf16 %v291
      %v4441 = vunpack.c.l.bf16 %v292
      %v4442 = vunpack.c.l.bf16 %v293
      %v4443 = vunpack.c.l.bf16 %v294
      %v4444 = vunpack.c.l.bf16 %v295
      %v4445 = vunpack.c.l.bf16 %v296
      %v4446 = vunpack.c.l.bf16 %v297
      %v4447 = vunpack.c.l.bf16 %v298
      %v4448 = vunpack.c.l.bf16 %v299
      %v4449 = vunpack.c.l.bf16 %v300
      %v4450 = vunpack.c.l.bf16 %v301
      %v4451 = vunpack.c.l.bf16 %v302
      %v4452 = vunpack.c.l.bf16 %v303
      %v4453 = vunpack.c.l.bf16 %v304
      %v4454 = vunpack.c.l.bf16 %v305
      %v4455 = vunpack.c.l.bf16 %v306
      %v4456 = vunpack.c.l.bf16 %v307
      %v4457 = vunpack.c.l.bf16 %v308
      %v4458 = vunpack.c.l.bf16 %v309
      %v4459 = vunpack.c.l.bf16 %v310
      %v4460 = vunpack.c.l.bf16 %v311
      %v4461 = vadd.f32 %v4397, %v4429
      %v4462 = vadd.f32 %v4398, %v4430
      %v4463 = vadd.f32 %v4399, %v4431
      %v4464 = vadd.f32 %v4400, %v4432
      %v4465 = vadd.f32 %v4401, %v4433
      %v4466 = vadd.f32 %v4402, %v4434
      %v4467 = vadd.f32 %v4403, %v4435
      %v4468 = vadd.f32 %v4404, %v4436
      %v4469 = vadd.f32 %v4405, %v4437
      %v4470 = vadd.f32 %v4406, %v4438
      %v4471 = vadd.f32 %v4407, %v4439
      %v4472 = vadd.f32 %v4408, %v4440
      %v4473 = vadd.f32 %v4409, %v4441
      %v4474 = vadd.f32 %v4410, %v4442
      %v4475 = vadd.f32 %v4411, %v4443
      %v4476 = vadd.f32 %v4412, %v4444
      %v4477 = vadd.f32 %v4413, %v4445
      %v4478 = vadd.f32 %v4414, %v4446
      %v4479 = vadd.f32 %v4415, %v4447
      %v4480 = vadd.f32 %v4416, %v4448
      %v4481 = vadd.f32 %v4417, %v4449
      %v4482 = vadd.f32 %v4418, %v4450
      %v4483 = vadd.f32 %v4419, %v4451
      %v4484 = vadd.f32 %v4420, %v4452
      %v4485 = vadd.f32 %v4421, %v4453
      %v4486 = vadd.f32 %v4422, %v4454
      %v4487 = vadd.f32 %v4423, %v4455
      %v4488 = vadd.f32 %v4424, %v4456
      %v4489 = vadd.f32 %v4425, %v4457
      %v4490 = vadd.f32 %v4426, %v4458
      %v4491 = vadd.f32 %v4427, %v4459
      %v4492 = vadd.f32 %v4428, %v4460
      %v4493 = vmax.f32 %v4461, 0.0
      %v4494 = vmax.f32 %v4462, 0.0
      %v4495 = vmax.f32 %v4463, 0.0
      %v4496 = vmax.f32 %v4464, 0.0
      %v4497 = vmax.f32 %v4465, 0.0
      %v4498 = vmax.f32 %v4466, 0.0
      %v4499 = vmax.f32 %v4467, 0.0
      %v4500 = vmax.f32 %v4468, 0.0
      %v4501 = vmax.f32 %v4469, 0.0
      %v4502 = vmax.f32 %v4470, 0.0
      %v4503 = vmax.f32 %v4471, 0.0
      %v4504 = vmax.f32 %v4472, 0.0
      %v4505 = vmax.f32 %v4473, 0.0
      %v4506 = vmax.f32 %v4474, 0.0
      %v4507 = vmax.f32 %v4475, 0.0
      %v4508 = vmax.f32 %v4476, 0.0
      %v4509 = vmax.f32 %v4477, 0.0
      %v4510 = vmax.f32 %v4478, 0.0
      %v4511 = vmax.f32 %v4479, 0.0
      %v4512 = vmax.f32 %v4480, 0.0
      %v4513 = vmax.f32 %v4481, 0.0
      %v4514 = vmax.f32 %v4482, 0.0
      %v4515 = vmax.f32 %v4483, 0.0
      %v4516 = vmax.f32 %v4484, 0.0
      %v4517 = vmax.f32 %v4485, 0.0
      %v4518 = vmax.f32 %v4486, 0.0
      %v4519 = vmax.f32 %v4487, 0.0
      %v4520 = vmax.f32 %v4488, 0.0
      %v4521 = vmax.f32 %v4489, 0.0
      %v4522 = vmax.f32 %v4490, 0.0
      %v4523 = vmax.f32 %v4491, 0.0
      %v4524 = vmax.f32 %v4492, 0.0
      %4525 = vst [vmem:[%s278] sm:$0xff] %v4493
      %4526 = vst [vmem:[%s278 + $0x8] sm:$0xff] %v4494
      %4527 = vst [vmem:[%s278 + $0x10] sm:$0xff] %v4495
      %4528 = vst [vmem:[%s278 + $0x18] sm:$0xff] %v4496
      %4529 = vst [vmem:[%s278 + $0x20] sm:$0xff] %v4497
      %4530 = vst [vmem:[%s278 + $0x28] sm:$0xff] %v4498
      %4531 = vst [vmem:[%s278 + $0x30] sm:$0xff] %v4499
      %4532 = vst [vmem:[%s278 + $0x38] sm:$0xff] %v4500
      %4533 = vst [vmem:[%s278 + $0x40] sm:$0xff] %v4501
      %4534 = vst [vmem:[%s278 + $0x48] sm:$0xff] %v4502
      %4535 = vst [vmem:[%s278 + $0x50] sm:$0xff] %v4503
      %4536 = vst [vmem:[%s278 + $0x58] sm:$0xff] %v4504
      %4537 = vst [vmem:[%s278 + $0x60] sm:$0xff] %v4505
      %4538 = vst [vmem:[%s278 + $0x68] sm:$0xff] %v4506
      %4539 = vst [vmem:[%s278 + $0x70] sm:$0xff] %v4507
      %4540 = vst [vmem:[%s278 + $0x78] sm:$0xff] %v4508
      %4541 = vst [vmem:[%s278 + $0x80] sm:$0xff] %v4509
      %4542 = vst [vmem:[%s278 + $0x88] sm:$0xff] %v4510
      %4543 = vst [vmem:[%s278 + $0x90] sm:$0xff] %v4511
      %4544 = vst [vmem:[%s278 + $0x98] sm:$0xff] %v4512
      %4545 = vst [vmem:[%s278 + $0xa0] sm:$0xff] %v4513
      %4546 = vst [vmem:[%s278 + $0xa8] sm:$0xff] %v4514
      %4547 = vst [vmem:[%s278 + $0xb0] sm:$0xff] %v4515
      %4548 = vst [vmem:[%s278 + $0xb8] sm:$0xff] %v4516
      %4549 = vst [vmem:[%s278 + $0xc0] sm:$0xff] %v4517
      %4550 = vst [vmem:[%s278 + $0xc8] sm:$0xff] %v4518
      %4551 = vst [vmem:[%s278 + $0xd0] sm:$0xff] %v4519
      %4552 = vst [vmem:[%s278 + $0xd8] sm:$0xff] %v4520
      %4553 = vst [vmem:[%s278 + $0xe0] sm:$0xff] %v4521
      %4554 = vst [vmem:[%s278 + $0xe8] sm:$0xff] %v4522
      %4555 = vst [vmem:[%s278 + $0xf0] sm:$0xff] %v4523
      %4556 = vst [vmem:[%s278 + $0xf8] sm:$0xff] %v4524
      %p4557 = scmp.lt.s32.totalorder %s18, 1
      %s4558 = scalar_select %p4557, %s18, 1
      %s4559 = smul.addr %s4558, 32
      %s4560 = smul.addr %s4559, 8
      %s4561 = scalar_lea.vmem %s7, %s4560
      // Predicated region
      $region49: #{residual_block.1} parent=47 // pred_check
        %p4562 = pneg %p188
      $region50: #{residual_block.1} parent=47 // pred_check_branch
        %4564 = sbr.rel (%p4562) target = $region52
      $region51: #{residual_block.1} parent=47 // pred_region
        _
      $region52: #{residual_block.1} parent=47 // pred_fallthru
        _
    $region48: #{residual_block.1} parent=5 // pred_fallthru
      _
    %p4565 = scmp.le.s32.totalorder 2, %s13
    // Predicated region
    $region53: #{residual_block.1} parent=5 // pred_check
      %p4566 = pneg %p4565
    $region54: #{residual_block.1} parent=5 // pred_check_branch
      %4568 = sbr.rel (%p4566) target = $region56
    $region55: #{residual_block.1} parent=5 // pred_region
      %s4569 = ssub.s32 %s13, 2
      // Predicated region
      $region57: #{residual_block.1} parent=55 // pred_check
        %p4570 = pneg %p194
      $region58: #{residual_block.1} parent=55 // pred_check_branch
        %4572 = sbr.rel (%p4570) target = $region60
      $region59: #{residual_block.1} parent=55 // pred_region
        %p4573 = scmp.lt.s32.totalorder %s19, 1
        %s4574 = scalar_select %p4573, %s19, 1
        %s4575 = smul.addr %s4574, 32
        %s4576 = smul.addr %s4575, 8
        %s4577 = scalar_lea.vmem %s7, %s4576
      $region60: #{residual_block.1} parent=55 // pred_fallthru
        _
    $region56: #{residual_block.1} parent=5 // pred_fallthru
      _
  $region6: #{residual_block.1} parent=0 // loop_footer
    %s17 = sadd.s32 1, %s13
  $region7: #{residual_block.1} parent=0 // loop_footer_branch
    %12 = sbr.rel target = $region3
  $region8: #{residual_block.1} parent=0 // loop_exit
    _

</llo_original>
